<compile_context>
chip_gen: v7x
topology: tpu7x:2x2x1
jax: 0.10.0
libtpu: 0.0.40
codegen_flags: <defaults>
</compile_context>

<pallas_src>
import math
from functools import partial

import jax
import jax.numpy as jnp
from jax.experimental import pallas as pl

NHEAD = 4
LN_EPS = 1e-5
FF_DIM = 2048  # torch TransformerEncoderLayer default dim_feedforward


# -----------------------------------------------------------------------------
# shared in-kernel helpers
# -----------------------------------------------------------------------------
def _circular_neighbors(x2, seq, n_batch):
    """Per-batch circular shifts along the time axis of a (n_batch*seq, C) array.

    Returns (x[(t-1) % seq], x[(t+1) % seq]) per batch element -- the two neighbour
    taps of a kernel-3 circular Conv1d, built from static in-VMEM row slices."""
    prev_p, next_p = [], []
    for n in range(n_batch):
        blk = x2[n * seq:(n + 1) * seq]
        prev_p += [blk[seq - 1:], blk[:seq - 1]]
        next_p += [blk[1:], blk[:1]]
    return jnp.concatenate(prev_p, axis=0), jnp.concatenate(next_p, axis=0)


def _layer_norm(v, w, b):
    mu = jnp.mean(v, axis=-1, keepdims=True)
    var = jnp.mean((v - mu) ** 2, axis=-1, keepdims=True)
    return (v - mu) * jax.lax.rsqrt(var + LN_EPS) * w + b


# -----------------------------------------------------------------------------
# Kernel 1: circular Conv1d (k=3) + bias + pos_embed, whole batch in one step
# -----------------------------------------------------------------------------
def conv_embed_kernel(x_ref, w_ref, b_ref, pe_ref, o_ref, *, n_batch, seq):
    x = x_ref[...]                                        # (N*L, Cin) f32
    xm1, xp1 = _circular_neighbors(x, seq, n_batch)
    xcat = jnp.concatenate([xm1, x, xp1], axis=-1)        # (N*L, 3*Cin) im2col in VMEM
    y = jnp.dot(xcat.astype(jnp.bfloat16), w_ref[...],
                preferred_element_type=jnp.float32) + b_ref[...]
    o_ref[...] = y + pe_ref[...]                          # + pos_embed (pre-tiled)


def conv_embed(x, wflat_bf16, bias, pe_tiled):
    """x: (N, L, Cin) -> (N, L, Cout) = circular Conv1d(k=3) + bias + pos_embed."""
    N, L, Cin = x.shape
    Cout = wflat_bf16.shape[1]
    out = pl.pallas_call(
        partial(conv_embed_kernel, n_batch=N, seq=L),
        out_shape=jax.ShapeDtypeStruct((N * L, Cout), jnp.float32),
    )(x.reshape(N * L, Cin).astype(jnp.float32), wflat_bf16, bias, pe_tiled)
    return out.reshape(N, L, Cout)


# -----------------------------------------------------------------------------
# Kernel 2: full pre-LN Transformer encoder stack, batch folded into M
# -----------------------------------------------------------------------------
def transformer_stack_kernel(x_ref, wq_ref, wk_ref, wv_ref, bq_ref, bk_ref, bv_ref,
                             wo_ref, bo_ref, ln1w_ref, ln1b_ref, ln2w_ref, ln2b_ref,
                             w1_ref, b1_ref, w2_ref, b2_ref, o_ref,
                             *, n_batch, seq):
    x = x_ref[...]                                        # (N*T, D) f32 residual stream
    D = x.shape[-1]
    hd = D // NHEAD
    depth = wq_ref.shape[0]

    def split_heads(m):                                   # (N*T, D) -> (H*N, T, hd)
        return jnp.stack(
            [m[n * seq:(n + 1) * seq, h * hd:(h + 1) * hd]
             for h in range(NHEAD) for n in range(n_batch)], axis=0)

    for l in range(depth):                                # static unroll (depth small)
        # ---- self-attention block: x = x + MHA(LN1(x)) ----
        xn = _layer_norm(x, ln1w_ref[l], ln1b_ref[l]).astype(jnp.bfloat16)
        q = jnp.dot(xn, wq_ref[l], preferred_element_type=jnp.float32) + bq_ref[l]
        k = jnp.dot(xn, wk_ref[l], preferred_element_type=jnp.float32) + bk_ref[l]
        v = jnp.dot(xn, wv_ref[l], preferred_element_type=jnp.float32) + bv_ref[l]
        qh, kh, vh = split_heads(q), split_heads(k), split_heads(v)   # (H*N, T, hd)
        s = jax.lax.dot_general(
            qh.astype(jnp.bfloat16), kh.astype(jnp.bfloat16),
            (((2,), (2,)), ((0,), (0,))),
            preferred_element_type=jnp.float32)           # (H*N, T, T)
        s = s - jnp.max(s, axis=-1, keepdims=True)
        p = jnp.exp(s)
        p = p * pl.reciprocal(jnp.sum(p, axis=-1, keepdims=True), approx=True)
        ctx = jax.lax.dot_general(
            p.astype(jnp.bfloat16), vh.astype(jnp.bfloat16),
            (((2,), (1,)), ((0,), (0,))),
            preferred_element_type=jnp.float32)           # (H*N, T, hd)
        attn = jnp.concatenate(
            [jnp.concatenate([ctx[h * n_batch + n] for h in range(NHEAD)], axis=-1)
             for n in range(n_batch)], axis=0)            # (N*T, D)
        attn = jnp.dot(attn.astype(jnp.bfloat16), wo_ref[l],
                       preferred_element_type=jnp.float32) + bo_ref[l]
        x = x + attn                                      # dropout == identity

        # ---- feed-forward block: x = x + FFN(LN2(x)) ----
        xn2 = _layer_norm(x, ln2w_ref[l], ln2b_ref[l]).astype(jnp.bfloat16)
        h1 = jnp.maximum(
            jnp.dot(xn2, w1_ref[l], preferred_element_type=jnp.float32) + b1_ref[l],
            0.0)
        h2 = jnp.dot(h1.astype(jnp.bfloat16), w2_ref[l],
                     preferred_element_type=jnp.float32) + b2_ref[l]
        x = x + h2
    o_ref[...] = x


def transformer_stack(h, sp):
    """h: (N, T, D) -> (N, T, D) through `depth` pre-LN encoder layers."""
    N, T, D = h.shape
    out = pl.pallas_call(
        partial(transformer_stack_kernel, n_batch=N, seq=T),
        out_shape=jax.ShapeDtypeStruct((N * T, D), jnp.float32),
    )(h.reshape(N * T, D).astype(jnp.float32),
      sp["wq"], sp["wk"], sp["wv"], sp["bq"], sp["bk"], sp["bv"],
      sp["wo"], sp["bo"], sp["ln1w"], sp["ln1b"], sp["ln2w"], sp["ln2b"],
      sp["w1"], sp["b1"], sp["w2"], sp["b2"])
    return out.reshape(N, T, D)


# -----------------------------------------------------------------------------
# Kernel 3/4: [optional circular conv] + proj(D->C) + pred(time mix) + masked-MSE
# -----------------------------------------------------------------------------
def _proj_pred_loss_body(series2, tok2, wp_ref, bp_ref, wph_ref, wpt_ref, bpred_ref,
                         lab_ref, mask_ref, pred_ref, num_ref, n_batch):
    # series2: (N*S, D) bf16 ; tok2: (N*L, D) bf16
    S = series2.shape[0] // n_batch
    L = tok2.shape[0] // n_batch
    ys = jnp.dot(series2, wp_ref[...],
                 preferred_element_type=jnp.float32) + bp_ref[...]       # (N*S, C)
    yt = jnp.dot(tok2, wp_ref[...],
                 preferred_element_type=jnp.float32) + bp_ref[...]       # (N*L, C)
    ys3 = jnp.stack([ys[n * S:(n + 1) * S] for n in range(n_batch)], axis=0)  # (N,S,C)
    yt3 = jnp.stack([yt[n * L:(n + 1) * L] for n in range(n_batch)], axis=0)  # (N,L,C)
    wph = wph_ref[...]                                                   # (L, S) bf16
    wpt = wpt_ref[...]                                                   # (L, L) bf16
    wh = jnp.broadcast_to(wph, (n_batch,) + wph.shape)
    wt = jnp.broadcast_to(wpt, (n_batch,) + wpt.shape)
    # pred[n,l,c] = sum_t WpredT[l,t] * y_full[n,t,c] + b_pred[l]
    pred = (jax.lax.dot_general(wh, ys3.astype(jnp.bfloat16),
                                (((2,), (1,)), ((0,), (0,))),
                                preferred_element_type=jnp.float32)
            + jax.lax.dot_general(wt, yt3.astype(jnp.bfloat16),
                                  (((2,), (1,)), ((0,), (0,))),
                                  preferred_element_type=jnp.float32)
            + bpred_ref[...])                                            # (N, L, C)
    pred_ref[...] = pred
    diff = pred - lab_ref[...]
    per_tok = jnp.mean(diff * diff, axis=-1, keepdims=True)              # (N, L, 1)
    masked = per_tok * mask_ref[...]
    num = jnp.sum(jnp.sum(masked, axis=1, keepdims=True), axis=0, keepdims=True)
    num_ref[...] = num                                                   # (1, 1, 1)


def enc_tail_kernel(series_ref, tok_ref, wp_ref, bp_ref, wph_ref, wpt_ref, bpred_ref,
                    lab_ref, mask_ref, pred_ref, num_ref, *, n_batch):
    _proj_pred_loss_body(series_ref[...], tok_ref[...], wp_ref, bp_ref, wph_ref,
                         wpt_ref, bpred_ref, lab_ref, mask_ref, pred_ref, num_ref,
                         n_batch)


def dec_tail_kernel(series_ref, x_ref, wc_ref, bc_ref, pe_ref, wp_ref, bp_ref,
                    wph_ref, wpt_ref, bpred_ref, lab_ref, mask_ref,
                    pred_ref, num_ref, *, n_batch, seq):
    # circular Conv1d(k=3) on restored decoder tokens + pos_embed, then the shared
    # proj -> pred -> masked-MSE tail, all in one kernel invocation.
    x = x_ref[...]                                        # (N*L, D) f32
    xm1, xp1 = _circular_neighbors(x, seq, n_batch)
    xcat = jnp.concatenate([xm1, x, xp1], axis=-1)        # (N*L, 3*D)
    y = jnp.dot(xcat.astype(jnp.bfloat16), wc_ref[...],
                preferred_element_type=jnp.float32) + bc_ref[...]
    y = (y + pe_ref[...]).astype(jnp.bfloat16)            # (N*L, D)
    _proj_pred_loss_body(series_ref[...], y, wp_ref, bp_ref, wph_ref, wpt_ref,
                         bpred_ref, lab_ref, mask_ref, pred_ref, num_ref, n_batch)


def enc_tail(series, tokens, wp, bp, wph, wpt, bpred, label, mask3):
    N, S, D = series.shape
    L = tokens.shape[1]
    C = wp.shape[1]
    pred, num = pl.pallas_call(
        partial(enc_tail_kernel, n_batch=N),
        out_shape=(jax.ShapeDtypeStruct((N, L, C), jnp.float32),
                   jax.ShapeDtypeStruct((1, 1, 1), jnp.float32)),
    )(series.reshape(N * S, D).astype(jnp.bfloat16),
      tokens.reshape(N * L, D).astype(jnp.bfloat16),
      wp, bp, wph, wpt, bpred, label, mask3)
    return pred, num[0, 0, 0]


def dec_tail(series, restored, wc, bc, pe_tiled, wp, bp, wph, wpt, bpred,
             label, mask3):
    N, S, D = series.shape
    L = restored.shape[1]
    C = wp.shape[1]
    pred, num = pl.pallas_call(
        partial(dec_tail_kernel, n_batch=N, seq=L),
        out_shape=(jax.ShapeDtypeStruct((N, L, C), jnp.float32),
                   jax.ShapeDtypeStruct((1, 1, 1), jnp.float32)),
    )(series.reshape(N * S, D).astype(jnp.bfloat16),
      restored.reshape(N * L, D).astype(jnp.float32),
      wc, bc, pe_tiled, wp, bp, wph, wpt, bpred, label, mask3)
    return pred, num[0, 0, 0]


# -----------------------------------------------------------------------------
# JAX glue: positional embedding, random masking, parameter init / prep
# -----------------------------------------------------------------------------
def sinusoidal_pos_embed(L, d_model):
    pos = jnp.arange(L, dtype=jnp.float32)[:, None]
    div = jnp.exp(jnp.arange(0, d_model, 2, dtype=jnp.float32)
                  * (-math.log(10000.0) / d_model))
    pe = jnp.zeros((L, d_model), jnp.float32)
    pe = pe.at[:, 0::2].set(jnp.sin(pos * div))
    pe = pe.at[:, 1::2].set(jnp.cos(pos * div))
    return pe                                             # (L, d_model)


def mask_func(key, x, mask_ratio, input_len):
    """Matches RetroMaskedAutoEncoder.mask_func semantics (random keep-subset)."""
    N = x.shape[0]
    L = int(input_len)
    len_keep = int(L * (1 - mask_ratio))
    rand = jax.random.uniform(key, (N, L))
    ids_shuffle = jnp.argsort(rand, axis=1)
    ids_keep_restore = jnp.sort(ids_shuffle[:, :len_keep], axis=1)
    ids_restore = jnp.argsort(
        jnp.concatenate([ids_keep_restore, ids_shuffle[:, len_keep:]], axis=1), axis=1)
    x_masked = jnp.take_along_axis(x, ids_keep_restore[:, :, None], axis=1)
    mask = jnp.ones((N, L), jnp.float32).at[:, :len_keep].set(0.0)
    mask = jnp.take_along_axis(mask, ids_restore, axis=1)
    return x_masked, mask, ids_restore


def init_params(key, cfg):
    C, D = cfg["c_in"], cfg["d_model"]
    L, S = cfg["input_len"], cfg["series_embed_len"]
    keys = list(jax.random.split(key, 64))
    ki = iter(keys)

    def xavier(k, fan_in, fan_out):
        lim = math.sqrt(6.0 / (fan_in + fan_out))
        return jax.random.uniform(k, (fan_in, fan_out), jnp.float32, -lim, lim)

    def conv_init(k, cout, cin):
        bound = 1.0 / math.sqrt(cin * 3)
        kw, kb = jax.random.split(k)
        w = jax.random.uniform(kw, (cout, cin, 3), jnp.float32, -bound, bound)
        b = jax.random.uniform(kb, (cout,), jnp.float32, -bound, bound)
        return w, b

    def attn_layer(k):
        ks = jax.random.split(k, 6)
        return dict(
            wq=xavier(ks[0], D, D), bq=jnp.zeros((D,), jnp.float32),
            wk=xavier(ks[1], D, D), bk=jnp.zeros((D,), jnp.float32),
            wv=xavier(ks[2], D, D), bv=jnp.zeros((D,), jnp.float32),
            wo=xavier(ks[3], D, D), bo=jnp.zeros((D,), jnp.float32),
            ln1w=jnp.ones((D,), jnp.float32), ln1b=jnp.zeros((D,), jnp.float32),
            ln2w=jnp.ones((D,), jnp.float32), ln2b=jnp.zeros((D,), jnp.float32),
            w1=xavier(ks[4], D, FF_DIM), b1=jnp.zeros((FF_DIM,), jnp.float32),
            w2=xavier(ks[5], FF_DIM, D), b2=jnp.zeros((D,), jnp.float32),
        )

    conv_enc_w, conv_enc_b = conv_init(next(ki), D, C)      # ScalarProjection_enc
    conv_dec_w, conv_dec_b = conv_init(next(ki), D, D)      # ScalarProjection_pred_dec

    return dict(
        pos_embed=sinusoidal_pos_embed(S + L, D),
        cls_token=0.02 * jax.random.normal(next(ki), (S, D), jnp.float32),
        conv_enc_w=conv_enc_w, conv_enc_b=conv_enc_b,
        conv_dec_w=conv_dec_w, conv_dec_b=conv_dec_b,
        enc_proj_w=xavier(next(ki), D, C), enc_proj_b=jnp.zeros((C,), jnp.float32),
        enc_pred_w=xavier(next(ki), S + L, L), enc_pred_b=jnp.zeros((L,), jnp.float32),
        dec_proj_w=xavier(next(ki), D, C), dec_proj_b=jnp.zeros((C,), jnp.float32),
        dec_pred_w=xavier(next(ki), S + L, L), dec_pred_b=jnp.zeros((L,), jnp.float32),
        enc_layers=[attn_layer(next(ki)) for _ in range(cfg["encoder_depth"])],
        dec_layers=[attn_layer(next(ki)) for _ in range(cfg["decoder_depth"])],
    )


def _conv_flat(w):
    """(Cout, Cin, 3) torch conv weight -> (3*Cin, Cout) im2col GEMM weight."""
    cout, cin, k = w.shape
    return jnp.transpose(w, (2, 1, 0)).reshape(k * cin, cout)


def _prepare_stack(layers):
    """Stack per-layer params on a leading depth axis, fold 1/sqrt(head_dim) into
    the Q projection, cast matmul weights to bf16 (MXU feed); biases/LN stay f32."""
    st = {k: jnp.stack([lp[k] for lp in layers], axis=0) for k in layers[0]}
    depth, D, _ = st["wq"].shape
    scale = 1.0 / math.sqrt(D // NHEAD)

    def b3(a):
        return a.reshape(depth, 1, -1).astype(jnp.float32)

    return dict(
        wq=(st["wq"] * scale).astype(jnp.bfloat16), bq=b3(st["bq"] * scale),
        wk=st["wk"].astype(jnp.bfloat16), bk=b3(st["bk"]),
        wv=st["wv"].astype(jnp.bfloat16), bv=b3(st["bv"]),
        wo=st["wo"].astype(jnp.bfloat16), bo=b3(st["bo"]),
        ln1w=b3(st["ln1w"]), ln1b=b3(st["ln1b"]),
        ln2w=b3(st["ln2w"]), ln2b=b3(st["ln2b"]),
        w1=st["w1"].astype(jnp.bfloat16), b1=b3(st["b1"]),
        w2=st["w2"].astype(jnp.bfloat16), b2=b3(st["b2"]),
    )


def prepare_params(raw, cfg):
    S = cfg["series_embed_len"]

    def predT_split(w, b):
        wT = jnp.transpose(w)                              # (L, S+L)
        return (wT[:, :S].astype(jnp.bfloat16),
                wT[:, S:].astype(jnp.bfloat16),
                b.reshape(-1, 1).astype(jnp.float32))

    ep_h, ep_t, ep_b = predT_split(raw["enc_pred_w"], raw["enc_pred_b"])
    dp_h, dp_t, dp_b = predT_split(raw["dec_pred_w"], raw["dec_pred_b"])
    return dict(
        pos_embed=raw["pos_embed"],
        cls_token=raw["cls_token"],
        conv_enc_w=_conv_flat(raw["conv_enc_w"]).astype(jnp.bfloat16),
        conv_enc_b=raw["conv_enc_b"].reshape(1, -1).astype(jnp.float32),
        conv_dec_w=_conv_flat(raw["conv_dec_w"]).astype(jnp.bfloat16),
        conv_dec_b=raw["conv_dec_b"].reshape(1, -1).astype(jnp.float32),
        enc_proj_w=raw["enc_proj_w"].astype(jnp.bfloat16),
        enc_proj_b=raw["enc_proj_b"].reshape(1, -1).astype(jnp.float32),
        enc_pred_wT_head=ep_h, enc_pred_wT_tail=ep_t, enc_pred_b=ep_b,
        dec_proj_w=raw["dec_proj_w"].astype(jnp.bfloat16),
        dec_proj_b=raw["dec_proj_b"].reshape(1, -1).astype(jnp.float32),
        dec_pred_wT_head=dp_h, dec_pred_wT_tail=dp_t, dec_pred_b=dp_b,
        enc_stack=_prepare_stack(raw["enc_layers"]),
        dec_stack=_prepare_stack(raw["dec_layers"]),
    )


# -----------------------------------------------------------------------------
# Forward pass (mirrors RetroMaskedAutoEncoder.forward, enhance_decoding=False,
# train_pe=True)
# -----------------------------------------------------------------------------
def forward(params, x, key, cfg):
    N, L, C = x.shape
    S = cfg["series_embed_len"]
    D = cfg["d_model"]
    alpha = cfg["alpha"]
    pe = params["pos_embed"]                              # (S+L, D)
    pe_head = pe[:S]
    pe_tail_tiled = jnp.tile(pe[S:], (N, 1))              # (N*L, D)
    key_enc, key_dec = jax.random.split(key)
    x_label = x.astype(jnp.float32)

    # ================= encoder =================
    xe = conv_embed(x, params["conv_enc_w"], params["conv_enc_b"], pe_tail_tiled)
    x_masked, mask_e, ids_restore_e = mask_func(key_enc, xe, cfg["mask_rate_enc"], L)

    cls = jnp.broadcast_to(params["cls_token"], (N, S, D)) + pe_head[None]
    h = jnp.concatenate([cls, x_masked], axis=1)          # (N, S+len_keep, D)
    h = transformer_stack(h, params["enc_stack"])

    series_embed = h[:, :S]
    n_mask = int(L * cfg["mask_rate_enc"]) + 1
    rest = jnp.concatenate([h[:, S:], jnp.zeros((N, n_mask, D), jnp.float32)], axis=1)
    restored = jnp.take_along_axis(rest, ids_restore_e[:, :, None], axis=1)  # (N,L,D)

    enc_out, num_e = enc_tail(
        series_embed, restored, params["enc_proj_w"], params["enc_proj_b"],
        params["enc_pred_wT_head"], params["enc_pred_wT_tail"], params["enc_pred_b"],
        x_label, mask_e[:, :, None])
    loss_enc = num_e / jnp.sum(mask_e)

    # ================= decoder =================
    # torch recomputes ScalarProjection_enc(x)+pos_embed for the decoder input; the
    # value is identical to xe, so it is reused (same semantics, one less kernel).
    xd_masked, mask_d, ids_restore_d = mask_func(key_dec, xe, cfg["mask_rate_dec"], L)

    h2 = jnp.concatenate([series_embed, xd_masked], axis=1)
    h2 = transformer_stack(h2, params["dec_stack"])

    series_embed2 = h2[:, :S]
    n_mask_d = int(L * cfg["mask_rate_dec"]) + 1
    rest_d = jnp.concatenate([h2[:, S:], jnp.zeros((N, n_mask_d, D), jnp.float32)],
                             axis=1)
    restored_d = jnp.take_along_axis(rest_d, ids_restore_d[:, :, None], axis=1)

    dec_out, num_d = dec_tail(
        series_embed2, restored_d, params["conv_dec_w"], params["conv_dec_b"],
        pe_tail_tiled, params["dec_proj_w"], params["dec_proj_b"],
        params["dec_pred_wT_head"], params["dec_pred_wT_tail"], params["dec_pred_b"],
        x_label, mask_d[:, :, None])
    loss_dec = num_d / jnp.sum(mask_d)

    loss = (loss_enc + alpha * loss_dec) / (1.0 + alpha)
    return enc_out, loss.astype(jnp.float32)


# -----------------------------------------------------------------------------
if __name__ == "__main__":
    cfg = dict(
        c_in=4, d_model=32, input_len=16, series_embed_len=4,
        mask_rate_enc=0.5, mask_rate_dec=0.5,
        encoder_depth=1, decoder_depth=1, mask_size=1,
        alpha=1.0,
    )
    key = jax.random.PRNGKey(0)
    k_params, k_x, k_mask = jax.random.split(key, 3)
    params = prepare_params(init_params(k_params, cfg), cfg)
    x = jax.random.normal(k_x, (2, cfg["input_len"], cfg["c_in"]), jnp.float32)

    fwd = jax.jit(lambda p, xx, kk: forward(p, xx, kk, cfg))
    enc_out, loss = fwd(params, x, k_mask)
    jax.block_until_ready((enc_out, loss))
    assert enc_out.shape == (2, cfg["input_len"], cfg["c_in"])
    assert loss.shape == ()
    assert bool(jnp.isfinite(loss))
    print("KERNEL_OK")
</pallas_src>

<mosaic_0001>
module attributes {stable_mosaic.version = 11 : i64} {
  func.func @conv_embed_kernel(%arg0: memref<32x4xf32, #tpu.memory_space<vmem>>, %arg1: memref<12x32xbf16, #tpu.memory_space<vmem>>, %arg2: memref<1x32xf32, #tpu.memory_space<vmem>>, %arg3: memref<32x32xf32, #tpu.memory_space<vmem>>, %arg4: memref<32x32xf32, #tpu.memory_space<vmem>>) attributes {dimension_semantics = [], scalar_prefetch = 0 : i64, scratch_operands = 0 : i64, tpu.core_type = #tpu.core_type<tc>} {
    %c0 = arith.constant 0 : index
    %c0_0 = arith.constant 0 : index
    %0 = vector.load %arg0[%c0, %c0_0] : memref<32x4xf32, #tpu.memory_space<vmem>>, vector<32x4xf32>
    %1 = vector.extract_strided_slice %0 {offsets = [0, 0], sizes = [16, 4], strides = [1, 1]} : vector<32x4xf32> to vector<16x4xf32>
    %2 = vector.extract_strided_slice %1 {offsets = [15, 0], sizes = [1, 4], strides = [1, 1]} : vector<16x4xf32> to vector<1x4xf32>
    %3 = vector.extract_strided_slice %1 {offsets = [0, 0], sizes = [15, 4], strides = [1, 1]} : vector<16x4xf32> to vector<15x4xf32>
    %4 = vector.extract_strided_slice %1 {offsets = [1, 0], sizes = [15, 4], strides = [1, 1]} : vector<16x4xf32> to vector<15x4xf32>
    %5 = vector.extract_strided_slice %1 {offsets = [0, 0], sizes = [1, 4], strides = [1, 1]} : vector<16x4xf32> to vector<1x4xf32>
    %6 = vector.extract_strided_slice %0 {offsets = [16, 0], sizes = [16, 4], strides = [1, 1]} : vector<32x4xf32> to vector<16x4xf32>
    %7 = vector.extract_strided_slice %6 {offsets = [15, 0], sizes = [1, 4], strides = [1, 1]} : vector<16x4xf32> to vector<1x4xf32>
    %8 = vector.extract_strided_slice %6 {offsets = [0, 0], sizes = [15, 4], strides = [1, 1]} : vector<16x4xf32> to vector<15x4xf32>
    %9 = vector.extract_strided_slice %6 {offsets = [1, 0], sizes = [15, 4], strides = [1, 1]} : vector<16x4xf32> to vector<15x4xf32>
    %10 = vector.extract_strided_slice %6 {offsets = [0, 0], sizes = [1, 4], strides = [1, 1]} : vector<16x4xf32> to vector<1x4xf32>
    %11 = tpu.concatenate %2, %3, %7, %8 in 0 : vector<1x4xf32>, vector<15x4xf32>, vector<1x4xf32>, vector<15x4xf32> -> vector<32x4xf32>
    %12 = tpu.concatenate %4, %5, %9, %10 in 0 : vector<15x4xf32>, vector<1x4xf32>, vector<15x4xf32>, vector<1x4xf32> -> vector<32x4xf32>
    %13 = tpu.concatenate %11, %0, %12 in 1 : vector<32x4xf32>, vector<32x4xf32>, vector<32x4xf32> -> vector<32x12xf32>
    %14 = arith.truncf %13 : vector<32x12xf32> to vector<32x12xbf16>
    %c0_1 = arith.constant 0 : index
    %c0_2 = arith.constant 0 : index
    %15 = vector.load %arg1[%c0_1, %c0_2] : memref<12x32xbf16, #tpu.memory_space<vmem>>, vector<12x32xbf16>
    %cst = arith.constant dense<0.000000e+00> : vector<32x32xf32>
    %16 = tpu.matmul %14, %15, %cst {dimension_numbers = #tpu.dot_dimension_numbers<[1], [0], [0], [1], [0, 0, 1, 1], [], []>} : vector<32x12xbf16>, vector<12x32xbf16>, vector<32x32xf32> -> vector<32x32xf32>
    %c0_3 = arith.constant 0 : index
    %c0_4 = arith.constant 0 : index
    %17 = vector.load %arg2[%c0_3, %c0_4] : memref<1x32xf32, #tpu.memory_space<vmem>>, vector<1x32xf32>
    %18 = vector.broadcast %17 : vector<1x32xf32> to vector<32x32xf32>
    %19 = arith.addf %16, %18 : vector<32x32xf32>
    %c0_5 = arith.constant 0 : index
    %c0_6 = arith.constant 0 : index
    %20 = vector.load %arg3[%c0_5, %c0_6] : memref<32x32xf32, #tpu.memory_space<vmem>>, vector<32x32xf32>
    %21 = arith.addf %19, %20 : vector<32x32xf32>
    %c0_7 = arith.constant 0 : index
    %c0_8 = arith.constant 0 : index
    %22 = vector.load %arg4[%c0_7, %c0_8] : memref<32x32xf32, #tpu.memory_space<vmem>>, vector<32x32xf32>
    tpu.vector_store %arg4[%c0_7, %c0_8], %21 {strides = array<i32>} : memref<32x32xf32, #tpu.memory_space<vmem>>, vector<32x32xf32>,
    return
  }
}

module attributes {stable_mosaic.version = 11 : i64} {
  func.func @transformer_stack_kernel(%arg0: memref<24x32xf32, #tpu.memory_space<vmem>>, %arg1: memref<1x32x32xbf16, #tpu.memory_space<vmem>>, %arg2: memref<1x32x32xbf16, #tpu.memory_space<vmem>>, %arg3: memref<1x32x32xbf16, #tpu.memory_space<vmem>>, %arg4: memref<1x1x32xf32, #tpu.memory_space<vmem>>, %arg5: memref<1x1x32xf32, #tpu.memory_space<vmem>>, %arg6: memref<1x1x32xf32, #tpu.memory_space<vmem>>, %arg7: memref<1x32x32xbf16, #tpu.memory_space<vmem>>, %arg8: memref<1x1x32xf32, #tpu.memory_space<vmem>>, %arg9: memref<1x1x32xf32, #tpu.memory_space<vmem>>, %arg10: memref<1x1x32xf32, #tpu.memory_space<vmem>>, %arg11: memref<1x1x32xf32, #tpu.memory_space<vmem>>, %arg12: memref<1x1x32xf32, #tpu.memory_space<vmem>>, %arg13: memref<1x32x2048xbf16, #tpu.memory_space<vmem>>, %arg14: memref<1x1x2048xf32, #tpu.memory_space<vmem>>, %arg15: memref<1x2048x32xbf16, #tpu.memory_space<vmem>>, %arg16: memref<1x1x32xf32, #tpu.memory_space<vmem>>, %arg17: memref<24x32xf32, #tpu.memory_space<vmem>>) attributes {dimension_semantics = [], scalar_prefetch = 0 : i64, scratch_operands = 0 : i64, tpu.core_type = #tpu.core_type<tc>} {
    %c0 = arith.constant 0 : index
    %c0_0 = arith.constant 0 : index
    %0 = vector.load %arg0[%c0, %c0_0] : memref<24x32xf32, #tpu.memory_space<vmem>>, vector<24x32xf32>
    %c0_1 = arith.constant 0 : index
    %c0_2 = arith.constant 0 : index
    %c0_3 = arith.constant 0 : index
    %1 = vector.load %arg9[%c0_1, %c0_2, %c0_3] : memref<1x1x32xf32, #tpu.memory_space<vmem>>, vector<1x1x32xf32>
    %2 = vector.shape_cast %1 : vector<1x1x32xf32> to vector<1x32xf32>
    %c0_4 = arith.constant 0 : index
    %c0_5 = arith.constant 0 : index
    %c0_6 = arith.constant 0 : index
    %3 = vector.load %arg10[%c0_4, %c0_5, %c0_6] : memref<1x1x32xf32, #tpu.memory_space<vmem>>, vector<1x1x32xf32>
    %4 = vector.shape_cast %3 : vector<1x1x32xf32> to vector<1x32xf32>
    %cst = arith.constant dense<0.000000e+00> : vector<24xf32>
    %5 = vector.multi_reduction <add>, %0, %cst [1] : vector<24x32xf32> to vector<24xf32>
    %6 = vector.shape_cast %5 : vector<24xf32> to vector<24x1xf32>
    %cst_7 = arith.constant 3.200000e+01 : f32
    %7 = vector.broadcast %cst_7 : f32 to vector<24x1xf32>
    %8 = arith.divf %6, %7 : vector<24x1xf32>
    %9 = vector.broadcast %8 : vector<24x1xf32> to vector<24x32xf32>
    %10 = arith.subf %0, %9 : vector<24x32xf32>
    %11 = arith.mulf %10, %10 : vector<24x32xf32>
    %cst_8 = arith.constant dense<0.000000e+00> : vector<24xf32>
    %12 = vector.multi_reduction <add>, %11, %cst_8 [1] : vector<24x32xf32> to vector<24xf32>
    %13 = vector.shape_cast %12 : vector<24xf32> to vector<24x1xf32>
    %cst_9 = arith.constant 3.200000e+01 : f32
    %14 = vector.broadcast %cst_9 : f32 to vector<24x1xf32>
    %15 = arith.divf %13, %14 : vector<24x1xf32>
    %16 = vector.broadcast %8 : vector<24x1xf32> to vector<24x32xf32>
    %17 = arith.subf %0, %16 : vector<24x32xf32>
    %cst_10 = arith.constant 9.99999974E-6 : f32
    %18 = vector.broadcast %cst_10 : f32 to vector<24x1xf32>
    %19 = arith.addf %15, %18 : vector<24x1xf32>
    %20 = math.rsqrt %19 : vector<24x1xf32>
    %21 = vector.broadcast %20 : vector<24x1xf32> to vector<24x32xf32>
    %22 = arith.mulf %17, %21 : vector<24x32xf32>
    %23 = vector.broadcast %2 : vector<1x32xf32> to vector<24x32xf32>
    %24 = arith.mulf %22, %23 : vector<24x32xf32>
    %25 = vector.broadcast %4 : vector<1x32xf32> to vector<24x32xf32>
    %26 = arith.addf %24, %25 : vector<24x32xf32>
    %27 = arith.truncf %26 : vector<24x32xf32> to vector<24x32xbf16>
    %c0_11 = arith.constant 0 : index
    %c0_12 = arith.constant 0 : index
    %c0_13 = arith.constant 0 : index
    %28 = vector.load %arg1[%c0_11, %c0_12, %c0_13] : memref<1x32x32xbf16, #tpu.memory_space<vmem>>, vector<1x32x32xbf16>
    %29 = vector.shape_cast %28 : vector<1x32x32xbf16> to vector<32x32xbf16>
    %cst_14 = arith.constant dense<0.000000e+00> : vector<24x32xf32>
    %30 = tpu.matmul %27, %29, %cst_14 {dimension_numbers = #tpu.dot_dimension_numbers<[1], [0], [0], [1], [0, 0, 1, 1], [], []>} : vector<24x32xbf16>, vector<32x32xbf16>, vector<24x32xf32> -> vector<24x32xf32>
    %c0_15 = arith.constant 0 : index
    %c0_16 = arith.constant 0 : index
    %c0_17 = arith.constant 0 : index
    %31 = vector.load %arg4[%c0_15, %c0_16, %c0_17] : memref<1x1x32xf32, #tpu.memory_space<vmem>>, vector<1x1x32xf32>
    %32 = vector.shape_cast %31 : vector<1x1x32xf32> to vector<1x32xf32>
    %33 = vector.broadcast %32 : vector<1x32xf32> to vector<24x32xf32>
    %34 = arith.addf %30, %33 : vector<24x32xf32>
    %c0_18 = arith.constant 0 : index
    %c0_19 = arith.constant 0 : index
    %c0_20 = arith.constant 0 : index
    %35 = vector.load %arg2[%c0_18, %c0_19, %c0_20] : memref<1x32x32xbf16, #tpu.memory_space<vmem>>, vector<1x32x32xbf16>
    %36 = vector.shape_cast %35 : vector<1x32x32xbf16> to vector<32x32xbf16>
    %cst_21 = arith.constant dense<0.000000e+00> : vector<24x32xf32>
    %37 = tpu.matmul %27, %36, %cst_21 {dimension_numbers = #tpu.dot_dimension_numbers<[1], [0], [0], [1], [0, 0, 1, 1], [], []>} : vector<24x32xbf16>, vector<32x32xbf16>, vector<24x32xf32> -> vector<24x32xf32>
    %c0_22 = arith.constant 0 : index
    %c0_23 = arith.constant 0 : index
    %c0_24 = arith.constant 0 : index
    %38 = vector.load %arg5[%c0_22, %c0_23, %c0_24] : memref<1x1x32xf32, #tpu.memory_space<vmem>>, vector<1x1x32xf32>
    %39 = vector.shape_cast %38 : vector<1x1x32xf32> to vector<1x32xf32>
    %40 = vector.broadcast %39 : vector<1x32xf32> to vector<24x32xf32>
    %41 = arith.addf %37, %40 : vector<24x32xf32>
    %c0_25 = arith.constant 0 : index
    %c0_26 = arith.constant 0 : index
    %c0_27 = arith.constant 0 : index
    %42 = vector.load %arg3[%c0_25, %c0_26, %c0_27] : memref<1x32x32xbf16, #tpu.memory_space<vmem>>, vector<1x32x32xbf16>
    %43 = vector.shape_cast %42 : vector<1x32x32xbf16> to vector<32x32xbf16>
    %cst_28 = arith.constant dense<0.000000e+00> : vector<24x32xf32>
    %44 = tpu.matmul %27, %43, %cst_28 {dimension_numbers = #tpu.dot_dimension_numbers<[1], [0], [0], [1], [0, 0, 1, 1], [], []>} : vector<24x32xbf16>, vector<32x32xbf16>, vector<24x32xf32> -> vector<24x32xf32>
    %c0_29 = arith.constant 0 : index
    %c0_30 = arith.constant 0 : index
    %c0_31 = arith.constant 0 : index
    %45 = vector.load %arg6[%c0_29, %c0_30, %c0_31] : memref<1x1x32xf32, #tpu.memory_space<vmem>>, vector<1x1x32xf32>
    %46 = vector.shape_cast %45 : vector<1x1x32xf32> to vector<1x32xf32>
    %47 = vector.broadcast %46 : vector<1x32xf32> to vector<24x32xf32>
    %48 = arith.addf %44, %47 : vector<24x32xf32>
    %49 = vector.extract_strided_slice %34 {offsets = [0, 0], sizes = [12, 8], strides = [1, 1]} : vector<24x32xf32> to vector<12x8xf32>
    %50 = vector.extract_strided_slice %34 {offsets = [12, 0], sizes = [12, 8], strides = [1, 1]} : vector<24x32xf32> to vector<12x8xf32>
    %51 = vector.extract_strided_slice %34 {offsets = [0, 8], sizes = [12, 8], strides = [1, 1]} : vector<24x32xf32> to vector<12x8xf32>
    %52 = vector.extract_strided_slice %34 {offsets = [12, 8], sizes = [12, 8], strides = [1, 1]} : vector<24x32xf32> to vector<12x8xf32>
    %53 = vector.extract_strided_slice %34 {offsets = [0, 16], sizes = [12, 8], strides = [1, 1]} : vector<24x32xf32> to vector<12x8xf32>
    %54 = vector.extract_strided_slice %34 {offsets = [12, 16], sizes = [12, 8], strides = [1, 1]} : vector<24x32xf32> to vector<12x8xf32>
    %55 = vector.extract_strided_slice %34 {offsets = [0, 24], sizes = [12, 8], strides = [1, 1]} : vector<24x32xf32> to vector<12x8xf32>
    %56 = vector.extract_strided_slice %34 {offsets = [12, 24], sizes = [12, 8], strides = [1, 1]} : vector<24x32xf32> to vector<12x8xf32>
    %57 = vector.shape_cast %49 : vector<12x8xf32> to vector<1x12x8xf32>
    %58 = vector.shape_cast %50 : vector<12x8xf32> to vector<1x12x8xf32>
    %59 = vector.shape_cast %51 : vector<12x8xf32> to vector<1x12x8xf32>
    %60 = vector.shape_cast %52 : vector<12x8xf32> to vector<1x12x8xf32>
    %61 = vector.shape_cast %53 : vector<12x8xf32> to vector<1x12x8xf32>
    %62 = vector.shape_cast %54 : vector<12x8xf32> to vector<1x12x8xf32>
    %63 = vector.shape_cast %55 : vector<12x8xf32> to vector<1x12x8xf32>
    %64 = vector.shape_cast %56 : vector<12x8xf32> to vector<1x12x8xf32>
    %65 = tpu.concatenate %57, %58, %59, %60, %61, %62, %63, %64 in 0 : vector<1x12x8xf32>, vector<1x12x8xf32>, vector<1x12x8xf32>, vector<1x12x8xf32>, vector<1x12x8xf32>, vector<1x12x8xf32>, vector<1x12x8xf32>, vector<1x12x8xf32> -> vector<8x12x8xf32>
    %66 = vector.extract_strided_slice %41 {offsets = [0, 0], sizes = [12, 8], strides = [1, 1]} : vector<24x32xf32> to vector<12x8xf32>
    %67 = vector.extract_strided_slice %41 {offsets = [12, 0], sizes = [12, 8], strides = [1, 1]} : vector<24x32xf32> to vector<12x8xf32>
    %68 = vector.extract_strided_slice %41 {offsets = [0, 8], sizes = [12, 8], strides = [1, 1]} : vector<24x32xf32> to vector<12x8xf32>
    %69 = vector.extract_strided_slice %41 {offsets = [12, 8], sizes = [12, 8], strides = [1, 1]} : vector<24x32xf32> to vector<12x8xf32>
    %70 = vector.extract_strided_slice %41 {offsets = [0, 16], sizes = [12, 8], strides = [1, 1]} : vector<24x32xf32> to vector<12x8xf32>
    %71 = vector.extract_strided_slice %41 {offsets = [12, 16], sizes = [12, 8], strides = [1, 1]} : vector<24x32xf32> to vector<12x8xf32>
    %72 = vector.extract_strided_slice %41 {offsets = [0, 24], sizes = [12, 8], strides = [1, 1]} : vector<24x32xf32> to vector<12x8xf32>
    %73 = vector.extract_strided_slice %41 {offsets = [12, 24], sizes = [12, 8], strides = [1, 1]} : vector<24x32xf32> to vector<12x8xf32>
    %74 = vector.shape_cast %66 : vector<12x8xf32> to vector<1x12x8xf32>
    %75 = vector.shape_cast %67 : vector<12x8xf32> to vector<1x12x8xf32>
    %76 = vector.shape_cast %68 : vector<12x8xf32> to vector<1x12x8xf32>
    %77 = vector.shape_cast %69 : vector<12x8xf32> to vector<1x12x8xf32>
    %78 = vector.shape_cast %70 : vector<12x8xf32> to vector<1x12x8xf32>
    %79 = vector.shape_cast %71 : vector<12x8xf32> to vector<1x12x8xf32>
    %80 = vector.shape_cast %72 : vector<12x8xf32> to vector<1x12x8xf32>
    %81 = vector.shape_cast %73 : vector<12x8xf32> to vector<1x12x8xf32>
    %82 = tpu.concatenate %74, %75, %76, %77, %78, %79, %80, %81 in 0 : vector<1x12x8xf32>, vector<1x12x8xf32>, vector<1x12x8xf32>, vector<1x12x8xf32>, vector<1x12x8xf32>, vector<1x12x8xf32>, vector<1x12x8xf32>, vector<1x12x8xf32> -> vector<8x12x8xf32>
    %83 = vector.extract_strided_slice %48 {offsets = [0, 0], sizes = [12, 8], strides = [1, 1]} : vector<24x32xf32> to vector<12x8xf32>
    %84 = vector.extract_strided_slice %48 {offsets = [12, 0], sizes = [12, 8], strides = [1, 1]} : vector<24x32xf32> to vector<12x8xf32>
    %85 = vector.extract_strided_slice %48 {offsets = [0, 8], sizes = [12, 8], strides = [1, 1]} : vector<24x32xf32> to vector<12x8xf32>
    %86 = vector.extract_strided_slice %48 {offsets = [12, 8], sizes = [12, 8], strides = [1, 1]} : vector<24x32xf32> to vector<12x8xf32>
    %87 = vector.extract_strided_slice %48 {offsets = [0, 16], sizes = [12, 8], strides = [1, 1]} : vector<24x32xf32> to vector<12x8xf32>
    %88 = vector.extract_strided_slice %48 {offsets = [12, 16], sizes = [12, 8], strides = [1, 1]} : vector<24x32xf32> to vector<12x8xf32>
    %89 = vector.extract_strided_slice %48 {offsets = [0, 24], sizes = [12, 8], strides = [1, 1]} : vector<24x32xf32> to vector<12x8xf32>
    %90 = vector.extract_strided_slice %48 {offsets = [12, 24], sizes = [12, 8], strides = [1, 1]} : vector<24x32xf32> to vector<12x8xf32>
    %91 = vector.shape_cast %83 : vector<12x8xf32> to vector<1x12x8xf32>
    %92 = vector.shape_cast %84 : vector<12x8xf32> to vector<1x12x8xf32>
    %93 = vector.shape_cast %85 : vector<12x8xf32> to vector<1x12x8xf32>
    %94 = vector.shape_cast %86 : vector<12x8xf32> to vector<1x12x8xf32>
    %95 = vector.shape_cast %87 : vector<12x8xf32> to vector<1x12x8xf32>
    %96 = vector.shape_cast %88 : vector<12x8xf32> to vector<1x12x8xf32>
    %97 = vector.shape_cast %89 : vector<12x8xf32> to vector<1x12x8xf32>
    %98 = vector.shape_cast %90 : vector<12x8xf32> to vector<1x12x8xf32>
    %99 = tpu.concatenate %91, %92, %93, %94, %95, %96, %97, %98 in 0 : vector<1x12x8xf32>, vector<1x12x8xf32>, vector<1x12x8xf32>, vector<1x12x8xf32>, vector<1x12x8xf32>, vector<1x12x8xf32>, vector<1x12x8xf32>, vector<1x12x8xf32> -> vector<8x12x8xf32>
    %100 = arith.truncf %65 : vector<8x12x8xf32> to vector<8x12x8xbf16>
    %101 = arith.truncf %82 : vector<8x12x8xf32> to vector<8x12x8xbf16>
    %cst_32 = arith.constant dense<0.000000e+00> : vector<8x12x12xf32>
    %102 = tpu.matmul %100, %101, %cst_32 {dimension_numbers = #tpu.dot_dimension_numbers<[2], [2], [1], [1], [0, 0, 0, 1, 1, 1], [0], [0]>} : vector<8x12x8xbf16>, vector<8x12x8xbf16>, vector<8x12x12xf32> -> vector<8x12x12xf32>
    %cst_33 = arith.constant dense<0xFF800000> : vector<8x12xf32>
    %103 = vector.multi_reduction <maximumf>, %102, %cst_33 [2] : vector<8x12x12xf32> to vector<8x12xf32>
    %104 = vector.shape_cast %103 : vector<8x12xf32> to vector<8x12x1xf32>
    %105 = vector.broadcast %104 : vector<8x12x1xf32> to vector<8x12x12xf32>
    %106 = arith.subf %102, %105 : vector<8x12x12xf32>
    %107 = math.exp %106 : vector<8x12x12xf32>
    %cst_34 = arith.constant dense<0.000000e+00> : vector<8x12xf32>
    %108 = vector.multi_reduction <add>, %107, %cst_34 [2] : vector<8x12x12xf32> to vector<8x12xf32>
    %109 = vector.shape_cast %108 : vector<8x12xf32> to vector<8x12x1xf32>
    %110 = tpu.reciprocal %109 {approx = true} : vector<8x12x1xf32> -> vector<8x12x1xf32>
    %111 = vector.broadcast %110 : vector<8x12x1xf32> to vector<8x12x12xf32>
    %112 = arith.mulf %107, %111 : vector<8x12x12xf32>
    %113 = arith.truncf %112 : vector<8x12x12xf32> to vector<8x12x12xbf16>
    %114 = arith.truncf %99 : vector<8x12x8xf32> to vector<8x12x8xbf16>
    %cst_35 = arith.constant dense<0.000000e+00> : vector<8x12x8xf32>
    %115 = tpu.matmul %113, %114, %cst_35 {dimension_numbers = #tpu.dot_dimension_numbers<[2], [1], [1], [2], [0, 0, 0, 1, 1, 2], [0], [0]>} : vector<8x12x12xbf16>, vector<8x12x8xbf16>, vector<8x12x8xf32> -> vector<8x12x8xf32>
    %116 = vector.extract_strided_slice %115 {offsets = [0, 0, 0], sizes = [1, 12, 8], strides = [1, 1, 1]} : vector<8x12x8xf32> to vector<1x12x8xf32>
    %117 = vector.shape_cast %116 : vector<1x12x8xf32> to vector<12x8xf32>
    %118 = vector.extract_strided_slice %115 {offsets = [2, 0, 0], sizes = [1, 12, 8], strides = [1, 1, 1]} : vector<8x12x8xf32> to vector<1x12x8xf32>
    %119 = vector.shape_cast %118 : vector<1x12x8xf32> to vector<12x8xf32>
    %120 = vector.extract_strided_slice %115 {offsets = [4, 0, 0], sizes = [1, 12, 8], strides = [1, 1, 1]} : vector<8x12x8xf32> to vector<1x12x8xf32>
    %121 = vector.shape_cast %120 : vector<1x12x8xf32> to vector<12x8xf32>
    %122 = vector.extract_strided_slice %115 {offsets = [6, 0, 0], sizes = [1, 12, 8], strides = [1, 1, 1]} : vector<8x12x8xf32> to vector<1x12x8xf32>
    %123 = vector.shape_cast %122 : vector<1x12x8xf32> to vector<12x8xf32>
    %124 = tpu.concatenate %117, %119, %121, %123 in 1 : vector<12x8xf32>, vector<12x8xf32>, vector<12x8xf32>, vector<12x8xf32> -> vector<12x32xf32>
    %125 = vector.extract_strided_slice %115 {offsets = [1, 0, 0], sizes = [1, 12, 8], strides = [1, 1, 1]} : vector<8x12x8xf32> to vector<1x12x8xf32>
    %126 = vector.shape_cast %125 : vector<1x12x8xf32> to vector<12x8xf32>
    %127 = vector.extract_strided_slice %115 {offsets = [3, 0, 0], sizes = [1, 12, 8], strides = [1, 1, 1]} : vector<8x12x8xf32> to vector<1x12x8xf32>
    %128 = vector.shape_cast %127 : vector<1x12x8xf32> to vector<12x8xf32>
    %129 = vector.extract_strided_slice %115 {offsets = [5, 0, 0], sizes = [1, 12, 8], strides = [1, 1, 1]} : vector<8x12x8xf32> to vector<1x12x8xf32>
    %130 = vector.shape_cast %129 : vector<1x12x8xf32> to vector<12x8xf32>
    %131 = vector.extract_strided_slice %115 {offsets = [7, 0, 0], sizes = [1, 12, 8], strides = [1, 1, 1]} : vector<8x12x8xf32> to vector<1x12x8xf32>
    %132 = vector.shape_cast %131 : vector<1x12x8xf32> to vector<12x8xf32>
    %133 = tpu.concatenate %126, %128, %130, %132 in 1 : vector<12x8xf32>, vector<12x8xf32>, vector<12x8xf32>, vector<12x8xf32> -> vector<12x32xf32>
    %134 = tpu.concatenate %124, %133 in 0 : vector<12x32xf32>, vector<12x32xf32> -> vector<24x32xf32>
    %135 = arith.truncf %134 : vector<24x32xf32> to vector<24x32xbf16>
    %c0_36 = arith.constant 0 : index
    %c0_37 = arith.constant 0 : index
    %c0_38 = arith.constant 0 : index
    %136 = vector.load %arg7[%c0_36, %c0_37, %c0_38] : memref<1x32x32xbf16, #tpu.memory_space<vmem>>, vector<1x32x32xbf16>
    %137 = vector.shape_cast %136 : vector<1x32x32xbf16> to vector<32x32xbf16>
    %cst_39 = arith.constant dense<0.000000e+00> : vector<24x32xf32>
    %138 = tpu.matmul %135, %137, %cst_39 {dimension_numbers = #tpu.dot_dimension_numbers<[1], [0], [0], [1], [0, 0, 1, 1], [], []>} : vector<24x32xbf16>, vector<32x32xbf16>, vector<24x32xf32> -> vector<24x32xf32>
    %c0_40 = arith.constant 0 : index
    %c0_41 = arith.constant 0 : index
    %c0_42 = arith.constant 0 : index
    %139 = vector.load %arg8[%c0_40, %c0_41, %c0_42] : memref<1x1x32xf32, #tpu.memory_space<vmem>>, vector<1x1x32xf32>
    %140 = vector.shape_cast %139 : vector<1x1x32xf32> to vector<1x32xf32>
    %141 = vector.broadcast %140 : vector<1x32xf32> to vector<24x32xf32>
    %142 = arith.addf %138, %141 : vector<24x32xf32>
    %143 = arith.addf %0, %142 : vector<24x32xf32>
    %c0_43 = arith.constant 0 : index
    %c0_44 = arith.constant 0 : index
    %c0_45 = arith.constant 0 : index
    %144 = vector.load %arg11[%c0_43, %c0_44, %c0_45] : memref<1x1x32xf32, #tpu.memory_space<vmem>>, vector<1x1x32xf32>
    %145 = vector.shape_cast %144 : vector<1x1x32xf32> to vector<1x32xf32>
    %c0_46 = arith.constant 0 : index
    %c0_47 = arith.constant 0 : index
    %c0_48 = arith.constant 0 : index
    %146 = vector.load %arg12[%c0_46, %c0_47, %c0_48] : memref<1x1x32xf32, #tpu.memory_space<vmem>>, vector<1x1x32xf32>
    %147 = vector.shape_cast %146 : vector<1x1x32xf32> to vector<1x32xf32>
    %cst_49 = arith.constant dense<0.000000e+00> : vector<24xf32>
    %148 = vector.multi_reduction <add>, %143, %cst_49 [1] : vector<24x32xf32> to vector<24xf32>
    %149 = vector.shape_cast %148 : vector<24xf32> to vector<24x1xf32>
    %cst_50 = arith.constant 3.200000e+01 : f32
    %150 = vector.broadcast %cst_50 : f32 to vector<24x1xf32>
    %151 = arith.divf %149, %150 : vector<24x1xf32>
    %152 = vector.broadcast %151 : vector<24x1xf32> to vector<24x32xf32>
    %153 = arith.subf %143, %152 : vector<24x32xf32>
    %154 = arith.mulf %153, %153 : vector<24x32xf32>
    %cst_51 = arith.constant dense<0.000000e+00> : vector<24xf32>
    %155 = vector.multi_reduction <add>, %154, %cst_51 [1] : vector<24x32xf32> to vector<24xf32>
    %156 = vector.shape_cast %155 : vector<24xf32> to vector<24x1xf32>
    %cst_52 = arith.constant 3.200000e+01 : f32
    %157 = vector.broadcast %cst_52 : f32 to vector<24x1xf32>
    %158 = arith.divf %156, %157 : vector<24x1xf32>
    %159 = vector.broadcast %151 : vector<24x1xf32> to vector<24x32xf32>
    %160 = arith.subf %143, %159 : vector<24x32xf32>
    %cst_53 = arith.constant 9.99999974E-6 : f32
    %161 = vector.broadcast %cst_53 : f32 to vector<24x1xf32>
    %162 = arith.addf %158, %161 : vector<24x1xf32>
    %163 = math.rsqrt %162 : vector<24x1xf32>
    %164 = vector.broadcast %163 : vector<24x1xf32> to vector<24x32xf32>
    %165 = arith.mulf %160, %164 : vector<24x32xf32>
    %166 = vector.broadcast %145 : vector<1x32xf32> to vector<24x32xf32>
    %167 = arith.mulf %165, %166 : vector<24x32xf32>
    %168 = vector.broadcast %147 : vector<1x32xf32> to vector<24x32xf32>
    %169 = arith.addf %167, %168 : vector<24x32xf32>
    %170 = arith.truncf %169 : vector<24x32xf32> to vector<24x32xbf16>
    %c0_54 = arith.constant 0 : index
    %c0_55 = arith.constant 0 : index
    %c0_56 = arith.constant 0 : index
    %171 = vector.load %arg13[%c0_54, %c0_55, %c0_56] : memref<1x32x2048xbf16, #tpu.memory_space<vmem>>, vector<1x32x2048xbf16>
    %172 = vector.shape_cast %171 : vector<1x32x2048xbf16> to vector<32x2048xbf16>
    %cst_57 = arith.constant dense<0.000000e+00> : vector<24x2048xf32>
    %173 = tpu.matmul %170, %172, %cst_57 {dimension_numbers = #tpu.dot_dimension_numbers<[1], [0], [0], [1], [0, 0, 1, 1], [], []>} : vector<24x32xbf16>, vector<32x2048xbf16>, vector<24x2048xf32> -> vector<24x2048xf32>
    %c0_58 = arith.constant 0 : index
    %c0_59 = arith.constant 0 : index
    %c0_60 = arith.constant 0 : index
    %174 = vector.load %arg14[%c0_58, %c0_59, %c0_60] : memref<1x1x2048xf32, #tpu.memory_space<vmem>>, vector<1x1x2048xf32>
    %175 = vector.shape_cast %174 : vector<1x1x2048xf32> to vector<1x2048xf32>
    %176 = vector.broadcast %175 : vector<1x2048xf32> to vector<24x2048xf32>
    %177 = arith.addf %173, %176 : vector<24x2048xf32>
    %cst_61 = arith.constant 0.000000e+00 : f32
    %178 = vector.broadcast %cst_61 : f32 to vector<24x2048xf32>
    %179 = arith.maximumf %177, %178 : vector<24x2048xf32>
    %180 = arith.truncf %179 : vector<24x2048xf32> to vector<24x2048xbf16>
    %c0_62 = arith.constant 0 : index
    %c0_63 = arith.constant 0 : index
    %c0_64 = arith.constant 0 : index
    %181 = vector.load %arg15[%c0_62, %c0_63, %c0_64] : memref<1x2048x32xbf16, #tpu.memory_space<vmem>>, vector<1x2048x32xbf16>
    %182 = vector.shape_cast %181 : vector<1x2048x32xbf16> to vector<2048x32xbf16>
    %cst_65 = arith.constant dense<0.000000e+00> : vector<24x32xf32>
    %183 = tpu.matmul %180, %182, %cst_65 {dimension_numbers = #tpu.dot_dimension_numbers<[1], [0], [0], [1], [0, 0, 1, 1], [], []>} : vector<24x2048xbf16>, vector<2048x32xbf16>, vector<24x32xf32> -> vector<24x32xf32>
    %c0_66 = arith.constant 0 : index
    %c0_67 = arith.constant 0 : index
    %c0_68 = arith.constant 0 : index
    %184 = vector.load %arg16[%c0_66, %c0_67, %c0_68] : memref<1x1x32xf32, #tpu.memory_space<vmem>>, vector<1x1x32xf32>
    %185 = vector.shape_cast %184 : vector<1x1x32xf32> to vector<1x32xf32>
    %186 = vector.broadcast %185 : vector<1x32xf32> to vector<24x32xf32>
    %187 = arith.addf %183, %186 : vector<24x32xf32>
    %188 = arith.addf %143, %187 : vector<24x32xf32>
    %c0_69 = arith.constant 0 : index
    %c0_70 = arith.constant 0 : index
    %189 = vector.load %arg17[%c0_69, %c0_70] : memref<24x32xf32, #tpu.memory_space<vmem>>, vector<24x32xf32>
    tpu.vector_store %arg17[%c0_69, %c0_70], %188 {strides = array<i32>} : memref<24x32xf32, #tpu.memory_space<vmem>>, vector<24x32xf32>,
    return
  }
}

module attributes {stable_mosaic.version = 11 : i64} {
  func.func @enc_tail_kernel(%arg0: memref<8x32xbf16, #tpu.memory_space<vmem>>, %arg1: memref<32x32xbf16, #tpu.memory_space<vmem>>, %arg2: memref<32x4xbf16, #tpu.memory_space<vmem>>, %arg3: memref<1x4xf32, #tpu.memory_space<vmem>>, %arg4: memref<16x4xbf16, #tpu.memory_space<vmem>>, %arg5: memref<16x16xbf16, #tpu.memory_space<vmem>>, %arg6: memref<16x1xf32, #tpu.memory_space<vmem>>, %arg7: memref<2x16x4xf32, #tpu.memory_space<vmem>>, %arg8: memref<2x16x1xf32, #tpu.memory_space<vmem>>, %arg9: memref<2x16x4xf32, #tpu.memory_space<vmem>>, %arg10: memref<1x1x1xf32, #tpu.memory_space<vmem>>) attributes {dimension_semantics = [], scalar_prefetch = 0 : i64, scratch_operands = 0 : i64, tpu.core_type = #tpu.core_type<tc>} {
    %c0 = arith.constant 0 : index
    %c0_0 = arith.constant 0 : index
    %0 = vector.load %arg0[%c0, %c0_0] : memref<8x32xbf16, #tpu.memory_space<vmem>>, vector<8x32xbf16>
    %c0_1 = arith.constant 0 : index
    %c0_2 = arith.constant 0 : index
    %1 = vector.load %arg1[%c0_1, %c0_2] : memref<32x32xbf16, #tpu.memory_space<vmem>>, vector<32x32xbf16>
    %c0_3 = arith.constant 0 : index
    %c0_4 = arith.constant 0 : index
    %2 = vector.load %arg2[%c0_3, %c0_4] : memref<32x4xbf16, #tpu.memory_space<vmem>>, vector<32x4xbf16>
    %cst = arith.constant dense<0.000000e+00> : vector<8x4xf32>
    %3 = tpu.matmul %0, %2, %cst {dimension_numbers = #tpu.dot_dimension_numbers<[1], [0], [0], [1], [0, 0, 1, 1], [], []>} : vector<8x32xbf16>, vector<32x4xbf16>, vector<8x4xf32> -> vector<8x4xf32>
    %c0_5 = arith.constant 0 : index
    %c0_6 = arith.constant 0 : index
    %4 = vector.load %arg3[%c0_5, %c0_6] : memref<1x4xf32, #tpu.memory_space<vmem>>, vector<1x4xf32>
    %5 = vector.broadcast %4 : vector<1x4xf32> to vector<8x4xf32>
    %6 = arith.addf %3, %5 : vector<8x4xf32>
    %c0_7 = arith.constant 0 : index
    %c0_8 = arith.constant 0 : index
    %7 = vector.load %arg2[%c0_7, %c0_8] : memref<32x4xbf16, #tpu.memory_space<vmem>>, vector<32x4xbf16>
    %cst_9 = arith.constant dense<0.000000e+00> : vector<32x4xf32>
    %8 = tpu.matmul %1, %7, %cst_9 {dimension_numbers = #tpu.dot_dimension_numbers<[1], [0], [0], [1], [0, 0, 1, 1], [], []>} : vector<32x32xbf16>, vector<32x4xbf16>, vector<32x4xf32> -> vector<32x4xf32>
    %c0_10 = arith.constant 0 : index
    %c0_11 = arith.constant 0 : index
    %9 = vector.load %arg3[%c0_10, %c0_11] : memref<1x4xf32, #tpu.memory_space<vmem>>, vector<1x4xf32>
    %10 = vector.broadcast %9 : vector<1x4xf32> to vector<32x4xf32>
    %11 = arith.addf %8, %10 : vector<32x4xf32>
    %12 = vector.extract_strided_slice %6 {offsets = [0, 0], sizes = [4, 4], strides = [1, 1]} : vector<8x4xf32> to vector<4x4xf32>
    %13 = vector.extract_strided_slice %6 {offsets = [4, 0], sizes = [4, 4], strides = [1, 1]} : vector<8x4xf32> to vector<4x4xf32>
    %14 = vector.shape_cast %12 : vector<4x4xf32> to vector<1x4x4xf32>
    %15 = vector.shape_cast %13 : vector<4x4xf32> to vector<1x4x4xf32>
    %16 = tpu.concatenate %14, %15 in 0 : vector<1x4x4xf32>, vector<1x4x4xf32> -> vector<2x4x4xf32>
    %17 = vector.extract_strided_slice %11 {offsets = [0, 0], sizes = [16, 4], strides = [1, 1]} : vector<32x4xf32> to vector<16x4xf32>
    %18 = vector.extract_strided_slice %11 {offsets = [16, 0], sizes = [16, 4], strides = [1, 1]} : vector<32x4xf32> to vector<16x4xf32>
    %19 = vector.shape_cast %17 : vector<16x4xf32> to vector<1x16x4xf32>
    %20 = vector.shape_cast %18 : vector<16x4xf32> to vector<1x16x4xf32>
    %21 = tpu.concatenate %19, %20 in 0 : vector<1x16x4xf32>, vector<1x16x4xf32> -> vector<2x16x4xf32>
    %c0_12 = arith.constant 0 : index
    %c0_13 = arith.constant 0 : index
    %22 = vector.load %arg4[%c0_12, %c0_13] : memref<16x4xbf16, #tpu.memory_space<vmem>>, vector<16x4xbf16>
    %c0_14 = arith.constant 0 : index
    %c0_15 = arith.constant 0 : index
    %23 = vector.load %arg5[%c0_14, %c0_15] : memref<16x16xbf16, #tpu.memory_space<vmem>>, vector<16x16xbf16>
    %24 = vector.shape_cast %22 : vector<16x4xbf16> to vector<1x16x4xbf16>
    %25 = vector.broadcast %24 : vector<1x16x4xbf16> to vector<2x16x4xbf16>
    %26 = vector.shape_cast %23 : vector<16x16xbf16> to vector<1x16x16xbf16>
    %27 = vector.broadcast %26 : vector<1x16x16xbf16> to vector<2x16x16xbf16>
    %28 = arith.truncf %16 : vector<2x4x4xf32> to vector<2x4x4xbf16>
    %cst_16 = arith.constant dense<0.000000e+00> : vector<2x16x4xf32>
    %29 = tpu.matmul %25, %28, %cst_16 {dimension_numbers = #tpu.dot_dimension_numbers<[2], [1], [1], [2], [0, 0, 0, 1, 1, 2], [0], [0]>} : vector<2x16x4xbf16>, vector<2x4x4xbf16>, vector<2x16x4xf32> -> vector<2x16x4xf32>
    %30 = arith.truncf %21 : vector<2x16x4xf32> to vector<2x16x4xbf16>
    %cst_17 = arith.constant dense<0.000000e+00> : vector<2x16x4xf32>
    %31 = tpu.matmul %27, %30, %cst_17 {dimension_numbers = #tpu.dot_dimension_numbers<[2], [1], [1], [2], [0, 0, 0, 1, 1, 2], [0], [0]>} : vector<2x16x16xbf16>, vector<2x16x4xbf16>, vector<2x16x4xf32> -> vector<2x16x4xf32>
    %32 = arith.addf %29, %31 : vector<2x16x4xf32>
    %c0_18 = arith.constant 0 : index
    %c0_19 = arith.constant 0 : index
    %33 = vector.load %arg6[%c0_18, %c0_19] : memref<16x1xf32, #tpu.memory_space<vmem>>, vector<16x1xf32>
    %34 = vector.shape_cast %33 : vector<16x1xf32> to vector<1x16x1xf32>
    %35 = vector.broadcast %34 : vector<1x16x1xf32> to vector<2x16x4xf32>
    %36 = arith.addf %32, %35 : vector<2x16x4xf32>
    %c0_20 = arith.constant 0 : index
    %c0_21 = arith.constant 0 : index
    %c0_22 = arith.constant 0 : index
    %37 = vector.load %arg9[%c0_20, %c0_21, %c0_22] : memref<2x16x4xf32, #tpu.memory_space<vmem>>, vector<2x16x4xf32>
    tpu.vector_store %arg9[%c0_20, %c0_21, %c0_22], %36 {strides = array<i32>} : memref<2x16x4xf32, #tpu.memory_space<vmem>>, vector<2x16x4xf32>,
    %c0_23 = arith.constant 0 : index
    %c0_24 = arith.constant 0 : index
    %c0_25 = arith.constant 0 : index
    %38 = vector.load %arg7[%c0_23, %c0_24, %c0_25] : memref<2x16x4xf32, #tpu.memory_space<vmem>>, vector<2x16x4xf32>
    %39 = arith.subf %36, %38 : vector<2x16x4xf32>
    %40 = arith.mulf %39, %39 : vector<2x16x4xf32>
    %cst_26 = arith.constant dense<0.000000e+00> : vector<2x16xf32>
    %41 = vector.multi_reduction <add>, %40, %cst_26 [2] : vector<2x16x4xf32> to vector<2x16xf32>
    %42 = vector.shape_cast %41 : vector<2x16xf32> to vector<2x16x1xf32>
    %cst_27 = arith.constant 4.000000e+00 : f32
    %43 = vector.broadcast %cst_27 : f32 to vector<2x16x1xf32>
    %44 = arith.divf %42, %43 : vector<2x16x1xf32>
    %c0_28 = arith.constant 0 : index
    %c0_29 = arith.constant 0 : index
    %c0_30 = arith.constant 0 : index
    %45 = vector.load %arg8[%c0_28, %c0_29, %c0_30] : memref<2x16x1xf32, #tpu.memory_space<vmem>>, vector<2x16x1xf32>
    %46 = arith.mulf %44, %45 : vector<2x16x1xf32>
    %cst_31 = arith.constant dense<0.000000e+00> : vector<2x1xf32>
    %47 = vector.multi_reduction <add>, %46, %cst_31 [1] : vector<2x16x1xf32> to vector<2x1xf32>
    %48 = vector.shape_cast %47 : vector<2x1xf32> to vector<2x1x1xf32>
    %cst_32 = arith.constant dense<0.000000e+00> : vector<1x1xf32>
    %49 = vector.multi_reduction <add>, %48, %cst_32 [0] : vector<2x1x1xf32> to vector<1x1xf32>
    %50 = vector.shape_cast %49 : vector<1x1xf32> to vector<1x1x1xf32>
    %c0_33 = arith.constant 0 : index
    %c0_34 = arith.constant 0 : index
    %c0_35 = arith.constant 0 : index
    %51 = vector.load %arg10[%c0_33, %c0_34, %c0_35] : memref<1x1x1xf32, #tpu.memory_space<vmem>>, vector<1x1x1xf32>
    tpu.vector_store %arg10[%c0_33, %c0_34, %c0_35], %50 {strides = array<i32>} : memref<1x1x1xf32, #tpu.memory_space<vmem>>, vector<1x1x1xf32>,
    return
  }
}

module attributes {stable_mosaic.version = 11 : i64} {
  func.func @dec_tail_kernel(%arg0: memref<8x32xbf16, #tpu.memory_space<vmem>>, %arg1: memref<32x32xf32, #tpu.memory_space<vmem>>, %arg2: memref<96x32xbf16, #tpu.memory_space<vmem>>, %arg3: memref<1x32xf32, #tpu.memory_space<vmem>>, %arg4: memref<32x32xf32, #tpu.memory_space<vmem>>, %arg5: memref<32x4xbf16, #tpu.memory_space<vmem>>, %arg6: memref<1x4xf32, #tpu.memory_space<vmem>>, %arg7: memref<16x4xbf16, #tpu.memory_space<vmem>>, %arg8: memref<16x16xbf16, #tpu.memory_space<vmem>>, %arg9: memref<16x1xf32, #tpu.memory_space<vmem>>, %arg10: memref<2x16x4xf32, #tpu.memory_space<vmem>>, %arg11: memref<2x16x1xf32, #tpu.memory_space<vmem>>, %arg12: memref<2x16x4xf32, #tpu.memory_space<vmem>>, %arg13: memref<1x1x1xf32, #tpu.memory_space<vmem>>) attributes {dimension_semantics = [], scalar_prefetch = 0 : i64, scratch_operands = 0 : i64, tpu.core_type = #tpu.core_type<tc>} {
    %c0 = arith.constant 0 : index
    %c0_0 = arith.constant 0 : index
    %0 = vector.load %arg1[%c0, %c0_0] : memref<32x32xf32, #tpu.memory_space<vmem>>, vector<32x32xf32>
    %1 = vector.extract_strided_slice %0 {offsets = [0, 0], sizes = [16, 32], strides = [1, 1]} : vector<32x32xf32> to vector<16x32xf32>
    %2 = vector.extract_strided_slice %1 {offsets = [15, 0], sizes = [1, 32], strides = [1, 1]} : vector<16x32xf32> to vector<1x32xf32>
    %3 = vector.extract_strided_slice %1 {offsets = [0, 0], sizes = [15, 32], strides = [1, 1]} : vector<16x32xf32> to vector<15x32xf32>
    %4 = vector.extract_strided_slice %1 {offsets = [1, 0], sizes = [15, 32], strides = [1, 1]} : vector<16x32xf32> to vector<15x32xf32>
    %5 = vector.extract_strided_slice %1 {offsets = [0, 0], sizes = [1, 32], strides = [1, 1]} : vector<16x32xf32> to vector<1x32xf32>
    %6 = vector.extract_strided_slice %0 {offsets = [16, 0], sizes = [16, 32], strides = [1, 1]} : vector<32x32xf32> to vector<16x32xf32>
    %7 = vector.extract_strided_slice %6 {offsets = [15, 0], sizes = [1, 32], strides = [1, 1]} : vector<16x32xf32> to vector<1x32xf32>
    %8 = vector.extract_strided_slice %6 {offsets = [0, 0], sizes = [15, 32], strides = [1, 1]} : vector<16x32xf32> to vector<15x32xf32>
    %9 = vector.extract_strided_slice %6 {offsets = [1, 0], sizes = [15, 32], strides = [1, 1]} : vector<16x32xf32> to vector<15x32xf32>
    %10 = vector.extract_strided_slice %6 {offsets = [0, 0], sizes = [1, 32], strides = [1, 1]} : vector<16x32xf32> to vector<1x32xf32>
    %11 = tpu.concatenate %2, %3, %7, %8 in 0 : vector<1x32xf32>, vector<15x32xf32>, vector<1x32xf32>, vector<15x32xf32> -> vector<32x32xf32>
    %12 = tpu.concatenate %4, %5, %9, %10 in 0 : vector<15x32xf32>, vector<1x32xf32>, vector<15x32xf32>, vector<1x32xf32> -> vector<32x32xf32>
    %13 = tpu.concatenate %11, %0, %12 in 1 : vector<32x32xf32>, vector<32x32xf32>, vector<32x32xf32> -> vector<32x96xf32>
    %14 = arith.truncf %13 : vector<32x96xf32> to vector<32x96xbf16>
    %c0_1 = arith.constant 0 : index
    %c0_2 = arith.constant 0 : index
    %15 = vector.load %arg2[%c0_1, %c0_2] : memref<96x32xbf16, #tpu.memory_space<vmem>>, vector<96x32xbf16>
    %cst = arith.constant dense<0.000000e+00> : vector<32x32xf32>
    %16 = tpu.matmul %14, %15, %cst {dimension_numbers = #tpu.dot_dimension_numbers<[1], [0], [0], [1], [0, 0, 1, 1], [], []>} : vector<32x96xbf16>, vector<96x32xbf16>, vector<32x32xf32> -> vector<32x32xf32>
    %c0_3 = arith.constant 0 : index
    %c0_4 = arith.constant 0 : index
    %17 = vector.load %arg3[%c0_3, %c0_4] : memref<1x32xf32, #tpu.memory_space<vmem>>, vector<1x32xf32>
    %18 = vector.broadcast %17 : vector<1x32xf32> to vector<32x32xf32>
    %19 = arith.addf %16, %18 : vector<32x32xf32>
    %c0_5 = arith.constant 0 : index
    %c0_6 = arith.constant 0 : index
    %20 = vector.load %arg4[%c0_5, %c0_6] : memref<32x32xf32, #tpu.memory_space<vmem>>, vector<32x32xf32>
    %21 = arith.addf %19, %20 : vector<32x32xf32>
    %22 = arith.truncf %21 : vector<32x32xf32> to vector<32x32xbf16>
    %c0_7 = arith.constant 0 : index
    %c0_8 = arith.constant 0 : index
    %23 = vector.load %arg0[%c0_7, %c0_8] : memref<8x32xbf16, #tpu.memory_space<vmem>>, vector<8x32xbf16>
    %c0_9 = arith.constant 0 : index
    %c0_10 = arith.constant 0 : index
    %24 = vector.load %arg5[%c0_9, %c0_10] : memref<32x4xbf16, #tpu.memory_space<vmem>>, vector<32x4xbf16>
    %cst_11 = arith.constant dense<0.000000e+00> : vector<8x4xf32>
    %25 = tpu.matmul %23, %24, %cst_11 {dimension_numbers = #tpu.dot_dimension_numbers<[1], [0], [0], [1], [0, 0, 1, 1], [], []>} : vector<8x32xbf16>, vector<32x4xbf16>, vector<8x4xf32> -> vector<8x4xf32>
    %c0_12 = arith.constant 0 : index
    %c0_13 = arith.constant 0 : index
    %26 = vector.load %arg6[%c0_12, %c0_13] : memref<1x4xf32, #tpu.memory_space<vmem>>, vector<1x4xf32>
    %27 = vector.broadcast %26 : vector<1x4xf32> to vector<8x4xf32>
    %28 = arith.addf %25, %27 : vector<8x4xf32>
    %c0_14 = arith.constant 0 : index
    %c0_15 = arith.constant 0 : index
    %29 = vector.load %arg5[%c0_14, %c0_15] : memref<32x4xbf16, #tpu.memory_space<vmem>>, vector<32x4xbf16>
    %cst_16 = arith.constant dense<0.000000e+00> : vector<32x4xf32>
    %30 = tpu.matmul %22, %29, %cst_16 {dimension_numbers = #tpu.dot_dimension_numbers<[1], [0], [0], [1], [0, 0, 1, 1], [], []>} : vector<32x32xbf16>, vector<32x4xbf16>, vector<32x4xf32> -> vector<32x4xf32>
    %c0_17 = arith.constant 0 : index
    %c0_18 = arith.constant 0 : index
    %31 = vector.load %arg6[%c0_17, %c0_18] : memref<1x4xf32, #tpu.memory_space<vmem>>, vector<1x4xf32>
    %32 = vector.broadcast %31 : vector<1x4xf32> to vector<32x4xf32>
    %33 = arith.addf %30, %32 : vector<32x4xf32>
    %34 = vector.extract_strided_slice %28 {offsets = [0, 0], sizes = [4, 4], strides = [1, 1]} : vector<8x4xf32> to vector<4x4xf32>
    %35 = vector.extract_strided_slice %28 {offsets = [4, 0], sizes = [4, 4], strides = [1, 1]} : vector<8x4xf32> to vector<4x4xf32>
    %36 = vector.shape_cast %34 : vector<4x4xf32> to vector<1x4x4xf32>
    %37 = vector.shape_cast %35 : vector<4x4xf32> to vector<1x4x4xf32>
    %38 = tpu.concatenate %36, %37 in 0 : vector<1x4x4xf32>, vector<1x4x4xf32> -> vector<2x4x4xf32>
    %39 = vector.extract_strided_slice %33 {offsets = [0, 0], sizes = [16, 4], strides = [1, 1]} : vector<32x4xf32> to vector<16x4xf32>
    %40 = vector.extract_strided_slice %33 {offsets = [16, 0], sizes = [16, 4], strides = [1, 1]} : vector<32x4xf32> to vector<16x4xf32>
    %41 = vector.shape_cast %39 : vector<16x4xf32> to vector<1x16x4xf32>
    %42 = vector.shape_cast %40 : vector<16x4xf32> to vector<1x16x4xf32>
    %43 = tpu.concatenate %41, %42 in 0 : vector<1x16x4xf32>, vector<1x16x4xf32> -> vector<2x16x4xf32>
    %c0_19 = arith.constant 0 : index
    %c0_20 = arith.constant 0 : index
    %44 = vector.load %arg7[%c0_19, %c0_20] : memref<16x4xbf16, #tpu.memory_space<vmem>>, vector<16x4xbf16>
    %c0_21 = arith.constant 0 : index
    %c0_22 = arith.constant 0 : index
    %45 = vector.load %arg8[%c0_21, %c0_22] : memref<16x16xbf16, #tpu.memory_space<vmem>>, vector<16x16xbf16>
    %46 = vector.shape_cast %44 : vector<16x4xbf16> to vector<1x16x4xbf16>
    %47 = vector.broadcast %46 : vector<1x16x4xbf16> to vector<2x16x4xbf16>
    %48 = vector.shape_cast %45 : vector<16x16xbf16> to vector<1x16x16xbf16>
    %49 = vector.broadcast %48 : vector<1x16x16xbf16> to vector<2x16x16xbf16>
    %50 = arith.truncf %38 : vector<2x4x4xf32> to vector<2x4x4xbf16>
    %cst_23 = arith.constant dense<0.000000e+00> : vector<2x16x4xf32>
    %51 = tpu.matmul %47, %50, %cst_23 {dimension_numbers = #tpu.dot_dimension_numbers<[2], [1], [1], [2], [0, 0, 0, 1, 1, 2], [0], [0]>} : vector<2x16x4xbf16>, vector<2x4x4xbf16>, vector<2x16x4xf32> -> vector<2x16x4xf32>
    %52 = arith.truncf %43 : vector<2x16x4xf32> to vector<2x16x4xbf16>
    %cst_24 = arith.constant dense<0.000000e+00> : vector<2x16x4xf32>
    %53 = tpu.matmul %49, %52, %cst_24 {dimension_numbers = #tpu.dot_dimension_numbers<[2], [1], [1], [2], [0, 0, 0, 1, 1, 2], [0], [0]>} : vector<2x16x16xbf16>, vector<2x16x4xbf16>, vector<2x16x4xf32> -> vector<2x16x4xf32>
    %54 = arith.addf %51, %53 : vector<2x16x4xf32>
    %c0_25 = arith.constant 0 : index
    %c0_26 = arith.constant 0 : index
    %55 = vector.load %arg9[%c0_25, %c0_26] : memref<16x1xf32, #tpu.memory_space<vmem>>, vector<16x1xf32>
    %56 = vector.shape_cast %55 : vector<16x1xf32> to vector<1x16x1xf32>
    %57 = vector.broadcast %56 : vector<1x16x1xf32> to vector<2x16x4xf32>
    %58 = arith.addf %54, %57 : vector<2x16x4xf32>
    %c0_27 = arith.constant 0 : index
    %c0_28 = arith.constant 0 : index
    %c0_29 = arith.constant 0 : index
    %59 = vector.load %arg12[%c0_27, %c0_28, %c0_29] : memref<2x16x4xf32, #tpu.memory_space<vmem>>, vector<2x16x4xf32>
    tpu.vector_store %arg12[%c0_27, %c0_28, %c0_29], %58 {strides = array<i32>} : memref<2x16x4xf32, #tpu.memory_space<vmem>>, vector<2x16x4xf32>,
    %c0_30 = arith.constant 0 : index
    %c0_31 = arith.constant 0 : index
    %c0_32 = arith.constant 0 : index
    %60 = vector.load %arg10[%c0_30, %c0_31, %c0_32] : memref<2x16x4xf32, #tpu.memory_space<vmem>>, vector<2x16x4xf32>
    %61 = arith.subf %58, %60 : vector<2x16x4xf32>
    %62 = arith.mulf %61, %61 : vector<2x16x4xf32>
    %cst_33 = arith.constant dense<0.000000e+00> : vector<2x16xf32>
    %63 = vector.multi_reduction <add>, %62, %cst_33 [2] : vector<2x16x4xf32> to vector<2x16xf32>
    %64 = vector.shape_cast %63 : vector<2x16xf32> to vector<2x16x1xf32>
    %cst_34 = arith.constant 4.000000e+00 : f32
    %65 = vector.broadcast %cst_34 : f32 to vector<2x16x1xf32>
    %66 = arith.divf %64, %65 : vector<2x16x1xf32>
    %c0_35 = arith.constant 0 : index
    %c0_36 = arith.constant 0 : index
    %c0_37 = arith.constant 0 : index
    %67 = vector.load %arg11[%c0_35, %c0_36, %c0_37] : memref<2x16x1xf32, #tpu.memory_space<vmem>>, vector<2x16x1xf32>
    %68 = arith.mulf %66, %67 : vector<2x16x1xf32>
    %cst_38 = arith.constant dense<0.000000e+00> : vector<2x1xf32>
    %69 = vector.multi_reduction <add>, %68, %cst_38 [1] : vector<2x16x1xf32> to vector<2x1xf32>
    %70 = vector.shape_cast %69 : vector<2x1xf32> to vector<2x1x1xf32>
    %cst_39 = arith.constant dense<0.000000e+00> : vector<1x1xf32>
    %71 = vector.multi_reduction <add>, %70, %cst_39 [0] : vector<2x1x1xf32> to vector<1x1xf32>
    %72 = vector.shape_cast %71 : vector<1x1xf32> to vector<1x1x1xf32>
    %c0_40 = arith.constant 0 : index
    %c0_41 = arith.constant 0 : index
    %c0_42 = arith.constant 0 : index
    %73 = vector.load %arg13[%c0_40, %c0_41, %c0_42] : memref<1x1x1xf32, #tpu.memory_space<vmem>>, vector<1x1x1xf32>
    tpu.vector_store %arg13[%c0_40, %c0_41, %c0_42], %72 {strides = array<i32>} : memref<1x1x1xf32, #tpu.memory_space<vmem>>, vector<1x1x1xf32>,
    return
  }
}

</mosaic_0001>

<llo_original>
// kernel: _lambda_.5
$region0: #{_lambda_.5}
  #allocation0 [shape = 'u32[]', space=smem, size = 0x4, offset = 0x4, fixed_abs, tag = 'smem constant byte address 0x4 - core index']
  #allocation1 [shape = 'u32[144,128]{1,0:T(1,128)}', space=vmem, size = 0x12000, scoped, tag = 'internal scratch']
  %s0 = inlined_call_operand.vmem [shape: f32[32,4], index: 0, kind: input, shape index: {}]
  %s1 = inlined_call_operand.vmem [shape: bf16[12,32], index: 1, kind: input, shape index: {}]
  %s2 = inlined_call_operand.vmem [shape: f32[1,32], index: 2, kind: input, shape index: {}]
  %s3 = inlined_call_operand.vmem [shape: f32[32,32], index: 3, kind: input, shape index: {}]
  %s4 = inlined_call_operand.vmem [shape: f32[32,32], index: 4, kind: output, shape index: {}]
  %s5 = sld [smem:[#allocation0]]
  $region26: #{_lambda_.5} parent=0
    _
  %s7 = ssub.s32 1, %s5
  %s8 = scalar_select 0, %s7, %s5
  // Predicated region
  $region2: #{_lambda_.5} parent=0 // pred_check
    _
  $region3: #{_lambda_.5} parent=0 // pred_check_branch
    %10 = sbr.rel (0) target = $region5
  $region4: #{_lambda_.5} parent=0 // pred_region
    _
  $region5: #{_lambda_.5} parent=0 // pred_fallthru
    _
  // Predicated region
  $region6: #{_lambda_.5} parent=0 // pred_check
    _
  $region7: #{_lambda_.5} parent=0 // pred_check_branch
    %12 = sbr.rel (0) target = $region9
  $region8: #{_lambda_.5} parent=0 // pred_region
    _
  $region9: #{_lambda_.5} parent=0 // pred_fallthru
    _
  // Predicated region
  $region10: #{_lambda_.5} parent=0 // pred_check
    _
  $region11: #{_lambda_.5} parent=0 // pred_check_branch
    %14 = sbr.rel (0) target = $region13
  $region12: #{_lambda_.5} parent=0 // pred_region
    _
  $region13: #{_lambda_.5} parent=0 // pred_fallthru
    _
  // Predicated region
  $region14: #{_lambda_.5} parent=0 // pred_check
    _
  $region15: #{_lambda_.5} parent=0 // pred_check_branch
    %16 = sbr.rel (0) target = $region17
  $region16: #{_lambda_.5} parent=0 // pred_region
    _
  $region17: #{_lambda_.5} parent=0 // pred_fallthru
    _
  %v18 = vld [vmem:[%s0] sm:$0xff]
  %v19 = vld [vmem:[%s0 + $0x8] sm:$0xff]
  %v20 = vld [vmem:[%s0 + $0x10] sm:$0xff]
  %v21 = vld [vmem:[%s0 + $0x18] sm:$0xff]
  %v23 = vrot.slane %v19, 7
  %vm26 = vcmask 1040384
  %v27 = vrot.slane %v18, 7
  %v28 = vsel %vm26, %v27, %v23
  %v32 = vrot.slane %v21, 7
  %v35 = vrot.slane %v20, 7
  %v36 = vsel %vm26, %v35, %v32
  %v39 = vsel %vm26, %v23, %v27
  %v40 = vsel %vm26, %v32, %v35
  %vm41 = vcmask 1046528
  %v42 = vrot.slane %v18, 1
  %v43 = vrot.slane %v19, 1
  %v44 = vsel %vm41, %v42, %v43
  %v47 = vrot.slane %v20, 1
  %v48 = vrot.slane %v21, 1
  %v49 = vsel %vm41, %v47, %v48
  %v52 = vsel %vm41, %v43, %v42
  %v53 = vsel %vm41, %v48, %v47
  %54 = vrot.lane.b32.xlu0 %v18, 4
  %v55 = vpop.permute.xlu0 %54
  %56 = vrot.lane.b32.xlu0 %v19, 4
  %v57 = vpop.permute.xlu0 %56
  %58 = vrot.lane.b32.xlu0 %v20, 4
  %v59 = vpop.permute.xlu0 %58
  %60 = vrot.lane.b32.xlu0 %v21, 4
  %v61 = vpop.permute.xlu0 %60
  %68 = vrot.lane.b32.xlu0 %v44, 8
  %v69 = vpop.permute.xlu0 %68
  %70 = vrot.lane.b32.xlu0 %v52, 8
  %v71 = vpop.permute.xlu0 %70
  %72 = vrot.lane.b32.xlu0 %v49, 8
  %v73 = vpop.permute.xlu0 %72
  %74 = vrot.lane.b32.xlu0 %v53, 8
  %v75 = vpop.permute.xlu0 %74
  %vm80 = vcmask 31744
  %v81 = vsel %vm80, %v39, %v55
  %v82 = vsel %vm80, %v28, %v57
  %v83 = vsel %vm80, %v40, %v59
  %v84 = vsel %vm80, %v36, %v61
  %vm85 = vcmask 64512
  %v86 = vsel %vm85, %v81, %v69
  %v87 = vsel %vm85, %v82, %v71
  %v88 = vsel %vm85, %v83, %v73
  %v89 = vsel %vm85, %v84, %v75
  %v90 = vpack.c.bf16 %v87, %v86
  %v91 = vpack.c.bf16 %v89, %v88
  %v92 = vld [vmem:[%s1] sm:$0xf]
  %v93 = vld [vmem:[%s1 + $0x4] sm:$0x3]
  %v94 = vld [vmem:[%s2] sm:$0x1]
  %v96 = vlaneseq
  %v97 = vshrl.u32 %v96, 7
  %v98 = vsub.s32 0, %v97
  %v99 = vrot.slane %v94, %v98
  %v103 = vunpack.c.l.b16 %v92
  %v104 = vunpack.c.l.b16 %v93
  %v105 = vpack.c.b16 %v104, %v103
  %vm106 = vcmask 97280
  %v108 = vsel %vm106, %v90, 0
  %v111 = vsel %vm106, %v91, 0
  %vm113 = vcmask 1045504
  %v115 = vsel %vm113, %v105, 0
  %117 = vmatprep.subr.bf16.mxu0 0
  %118 = vmatpush1.bf16.msra.mxu0 %v115
  %119 = vmatprep.subr.bf16.mxu0 0
  %120 = vmatpush1.bf16.msra.mxu0 0
  %121 = vmatprep.subr.bf16.mxu0 0
  %122 = vmatpush1.bf16.msra.mxu0 0
  %123 = vmatprep.subr.bf16.mxu0 0
  %124 = vmatpush1.bf16.msra.mxu0 0
  %125 = vmatprep.subr.bf16.mxu0 0
  %126 = vmatpush1.bf16.msra.mxu0 0
  %127 = vmatprep.subr.bf16.mxu0 0
  %128 = vmatpush1.bf16.msra.mxu0 0
  %129 = vmatprep.subr.bf16.mxu0 0
  %130 = vmatpush1.bf16.msra.mxu0 0
  %131 = vmatprep.subr.bf16.mxu0 0
  %132 = vmatpush1.bf16.msra.mxu0 0
  %133 = vmatprep.subr.bf16.mxu0 0
  %134 = vmatpush1.bf16.msra.mxu0 0
  %135 = vmatprep.subr.bf16.mxu0 0
  %136 = vmatpush1.bf16.msra.mxu0 0
  %137 = vmatprep.subr.bf16.mxu0 0
  %138 = vmatpush1.bf16.msra.mxu0 0
  %139 = vmatprep.subr.bf16.mxu0 0
  %140 = vmatpush1.bf16.msra.mxu0 0
  %141 = vmatprep.subr.bf16.mxu0 0
  %142 = vmatpush1.bf16.msra.mxu0 0
  %143 = vmatprep.subr.bf16.mxu0 0
  %144 = vmatpush1.bf16.msra.mxu0 0
  %145 = vmatprep.subr.bf16.mxu0 0
  %146 = vmatpush1.bf16.msra.mxu0 0
  %147 = vmatprep.subr.bf16.mxu0 0
  %148 = vmatpush1.bf16.msra.mxu0 0
  %149 = vmatprep.mubr.bf16.mxu0 0
  %150 = vmatmul.mubr.bf16.gmra.mrb[0].mxu0 %v108
  %v151 = vpop.f32.mrb[0].mxu0
  %v152 = vadd.f32 %v99, %v151
  %v153 = vpop.f32.mrb[0].mxu0
  %v154 = vpop.f32.mrb[0].mxu0
  %v155 = vadd.f32 %v99, %v154
  %v156 = vpop.f32.mrb[0].mxu0
  %157 = vmatprep.mubr.bf16.mxu0 0
  %158 = vmatmul.mubr.bf16.gmra.mrb[0].mxu0 %v111
  %v159 = vpop.f32.mrb[0].mxu0
  %v160 = vadd.f32 %v99, %v159
  %v161 = vpop.f32.mrb[0].mxu0
  %v162 = vpop.f32.mrb[0].mxu0
  %v163 = vadd.f32 %v99, %v162
  %v164 = vpop.f32.mrb[0].mxu0
  %165 = vdwg.mxu0
  %v166 = vld [vmem:[%s3] sm:$0xff]
  %v167 = vld [vmem:[%s3 + $0x8] sm:$0xff]
  %v168 = vld [vmem:[%s3 + $0x10] sm:$0xff]
  %v169 = vld [vmem:[%s3 + $0x18] sm:$0xff]
  %v170 = vadd.f32 %v152, %v166
  %v171 = vadd.f32 %v155, %v167
  %v172 = vadd.f32 %v160, %v168
  %v173 = vadd.f32 %v163, %v169
  %vm174 = vcmask 261120
  %175 = vst.msk [vmem:[%s4] sm:$0xff] %vm174, %v170
  %176 = vst.msk [vmem:[%s4 + $0x8] sm:$0xff] %vm174, %v171
  %177 = vst.msk [vmem:[%s4 + $0x10] sm:$0xff] %vm174, %v172
  %178 = vst.msk [vmem:[%s4 + $0x18] sm:$0xff] %vm174, %v173
  // Predicated region
  $region18: #{_lambda_.5} parent=0 // pred_check
    _
  $region19: #{_lambda_.5} parent=0 // pred_check_branch
    %180 = sbr.rel (0) target = $region21
  $region20: #{_lambda_.5} parent=0 // pred_region
    _
  $region21: #{_lambda_.5} parent=0 // pred_fallthru
    _
  // Predicated region
  $region22: #{_lambda_.5} parent=0 // pred_check
    _
  $region23: #{_lambda_.5} parent=0 // pred_check_branch
    %182 = sbr.rel (0) target = $region25
  $region24: #{_lambda_.5} parent=0 // pred_region
    _
  $region25: #{_lambda_.5} parent=0 // pred_fallthru
    _

// kernel: _lambda_.7
$region0: #{_lambda_.7}
  #allocation0 [shape = 'u32[]', space=smem, size = 0x4, offset = 0x4, fixed_abs, tag = 'smem constant byte address 0x4 - core index']
  #allocation1 [shape = 'u32[144,128]{1,0:T(1,128)}', space=vmem, size = 0x12000, scoped, tag = 'internal scratch']
  %s0 = inlined_call_operand.vmem [shape: bf16[8,32], index: 0, kind: input, shape index: {}]
  %s1 = inlined_call_operand.vmem [shape: bf16[32,32], index: 1, kind: input, shape index: {}]
  %s2 = inlined_call_operand.vmem [shape: bf16[32,4], index: 2, kind: input, shape index: {}]
  %s3 = inlined_call_operand.vmem [shape: f32[1,4], index: 3, kind: input, shape index: {}]
  %s4 = inlined_call_operand.vmem [shape: bf16[16,4], index: 4, kind: input, shape index: {}]
  %s5 = inlined_call_operand.vmem [shape: bf16[16,16], index: 5, kind: input, shape index: {}]
  %s6 = inlined_call_operand.vmem [shape: f32[16,1], index: 6, kind: input, shape index: {}]
  %s7 = inlined_call_operand.vmem [shape: f32[2,16,4], index: 7, kind: input, shape index: {}]
  %s8 = inlined_call_operand.vmem [shape: f32[2,16,1], index: 8, kind: input, shape index: {}]
  %s9 = inlined_call_operand.vmem [shape: f32[2,16,4], index: 9, kind: output, shape index: {0}]
  %s10 = inlined_call_operand.hbm [shape: f32[1,1,1], index: 10, kind: output, shape index: {1}]
  %11 = xla_tuple %s9, %s10
  %s12 = sld [smem:[#allocation0]]
  $region54: #{_lambda_.7} parent=0
    _
  %s14 = ssub.s32 1, %s12
  %s15 = scalar_select 0, %s14, %s12
  $region1: #{_lambda_.7} parent=0
    #allocation2 [shape = 'u8[512]{0}', space=vmem, size = 0x400, scoped, tag = 'output window, operand 1, single buffered']
    #allocation3 [shape = 's32[1]{0}', space=sflag, size = 0x4, scoped, tag = 'scoped memory for _lambda_.7']
    %16 = vsyncpa [#allocation3], 0
    // Predicated region
    $region2: #{_lambda_.7} parent=1 // pred_check
      _
    $region3: #{_lambda_.7} parent=1 // pred_check_branch
      %18 = sbr.rel (0) target = $region5
    $region4: #{_lambda_.7} parent=1 // pred_region
      _
    $region5: #{_lambda_.7} parent=1 // pred_fallthru
      _
    // Predicated region
    $region6: #{_lambda_.7} parent=1 // pred_check
      _
    $region7: #{_lambda_.7} parent=1 // pred_check_branch
      %20 = sbr.rel (0) target = $region9
    $region8: #{_lambda_.7} parent=1 // pred_region
      _
    $region9: #{_lambda_.7} parent=1 // pred_fallthru
      _
    // Predicated region
    $region10: #{_lambda_.7} parent=1 // pred_check
      _
    $region11: #{_lambda_.7} parent=1 // pred_check_branch
      %22 = sbr.rel (0) target = $region13
    $region12: #{_lambda_.7} parent=1 // pred_region
      _
    $region13: #{_lambda_.7} parent=1 // pred_fallthru
      _
    // Predicated region
    $region14: #{_lambda_.7} parent=1 // pred_check
      _
    $region15: #{_lambda_.7} parent=1 // pred_check_branch
      %24 = sbr.rel (0) target = $region17
    $region16: #{_lambda_.7} parent=1 // pred_region
      _
    $region17: #{_lambda_.7} parent=1 // pred_fallthru
      _
    // Predicated region
    $region18: #{_lambda_.7} parent=1 // pred_check
      _
    $region19: #{_lambda_.7} parent=1 // pred_check_branch
      %26 = sbr.rel (0) target = $region21
    $region20: #{_lambda_.7} parent=1 // pred_region
      _
    $region21: #{_lambda_.7} parent=1 // pred_fallthru
      _
    // Predicated region
    $region22: #{_lambda_.7} parent=1 // pred_check
      _
    $region23: #{_lambda_.7} parent=1 // pred_check_branch
      %28 = sbr.rel (0) target = $region25
    $region24: #{_lambda_.7} parent=1 // pred_region
      _
    $region25: #{_lambda_.7} parent=1 // pred_fallthru
      _
    // Predicated region
    $region26: #{_lambda_.7} parent=1 // pred_check
      _
    $region27: #{_lambda_.7} parent=1 // pred_check_branch
      %30 = sbr.rel (0) target = $region29
    $region28: #{_lambda_.7} parent=1 // pred_region
      _
    $region29: #{_lambda_.7} parent=1 // pred_fallthru
      _
    // Predicated region
    $region30: #{_lambda_.7} parent=1 // pred_check
      _
    $region31: #{_lambda_.7} parent=1 // pred_check_branch
      %32 = sbr.rel (0) target = $region33
    $region32: #{_lambda_.7} parent=1 // pred_region
      _
    $region33: #{_lambda_.7} parent=1 // pred_fallthru
      _
    // Predicated region
    $region34: #{_lambda_.7} parent=1 // pred_check
      _
    $region35: #{_lambda_.7} parent=1 // pred_check_branch
      %34 = sbr.rel (0) target = $region37
    $region36: #{_lambda_.7} parent=1 // pred_region
      _
    $region37: #{_lambda_.7} parent=1 // pred_fallthru
      _
    %v36 = vld [vmem:[%s0] sm:$0xf]
    %v37 = vld [vmem:[%s1] sm:$0xf]
    %v38 = vld [vmem:[%s1 + $0x4] sm:$0xf]
    %v39 = vld [vmem:[%s1 + $0x8] sm:$0xf]
    %v40 = vld [vmem:[%s1 + $0xc] sm:$0xf]
    %v41 = vld [vmem:[%s2] sm:$0xf]
    %v42 = vld [vmem:[%s2 + $0x4] sm:$0xf]
    %v43 = vld [vmem:[%s2 + $0x8] sm:$0xf]
    %v44 = vld [vmem:[%s2 + $0xc] sm:$0xf]
    %v45 = vld [vmem:[%s3] sm:$0x1]
    %v47 = vlaneseq
    %v48 = vshrl.u32 %v47, 7
    %v49 = vsub.s32 0, %v48
    %v50 = vrot.slane %v45, %v49
    %v56 = vunpack.c.l.b16 %v41
    %v57 = vunpack.c.l.b16 %v42
    %v58 = vunpack.c.l.b16 %v43
    %v59 = vunpack.c.l.b16 %v44
    %v60 = vpack.c.b16 %v57, %v56
    %v61 = vpack.c.b16 %v59, %v58
    %vm64 = vcmask 261120
    %v66 = vsel %vm64, %v36, 0
    %68 = vmatprep.subr.bf16.mxu0 0
    %69 = vmatpush1.bf16.msra.mxu0 %v60
    %70 = vmatprep.subr.bf16.mxu0 0
    %71 = vmatpush1.bf16.msra.mxu0 %v61
    %72 = vmatprep.subr.bf16.mxu0 0
    %73 = vmatpush1.bf16.msra.mxu0 0
    %74 = vmatprep.subr.bf16.mxu0 0
    %75 = vmatpush1.bf16.msra.mxu0 0
    %76 = vmatprep.subr.bf16.mxu0 0
    %77 = vmatpush1.bf16.msra.mxu0 0
    %78 = vmatprep.subr.bf16.mxu0 0
    %79 = vmatpush1.bf16.msra.mxu0 0
    %80 = vmatprep.subr.bf16.mxu0 0
    %81 = vmatpush1.bf16.msra.mxu0 0
    %82 = vmatprep.subr.bf16.mxu0 0
    %83 = vmatpush1.bf16.msra.mxu0 0
    %84 = vmatprep.subr.bf16.mxu0 0
    %85 = vmatpush1.bf16.msra.mxu0 0
    %86 = vmatprep.subr.bf16.mxu0 0
    %87 = vmatpush1.bf16.msra.mxu0 0
    %88 = vmatprep.subr.bf16.mxu0 0
    %89 = vmatpush1.bf16.msra.mxu0 0
    %90 = vmatprep.subr.bf16.mxu0 0
    %91 = vmatpush1.bf16.msra.mxu0 0
    %92 = vmatprep.subr.bf16.mxu0 0
    %93 = vmatpush1.bf16.msra.mxu0 0
    %94 = vmatprep.subr.bf16.mxu0 0
    %95 = vmatpush1.bf16.msra.mxu0 0
    %96 = vmatprep.subr.bf16.mxu0 0
    %97 = vmatpush1.bf16.msra.mxu0 0
    %98 = vmatprep.subr.bf16.mxu0 0
    %99 = vmatpush1.bf16.msra.mxu0 0
    %100 = vmatprep.mubr.bf16.mxu0 0
    %101 = vmatmul.mubr.bf16.gmra.mrb[0].mxu0 %v66
    %v102 = vpop.f32.mrb[0].mxu0
    %v103 = vadd.f32 %v50, %v102
    %v104 = vpop.f32.mrb[0].mxu0
    %v105 = vpop.f32.mrb[0].mxu0
    %v106 = vpop.f32.mrb[0].mxu0
    %107 = vdwg.mxu0
    %v112 = vunpack.c.l.b16 %v37
    %v113 = vunpack.c.l.b16 %v38
    %v114 = vunpack.c.l.b16 %v39
    %v115 = vunpack.c.l.b16 %v40
    %v116 = vpack.c.b16 %v113, %v112
    %v117 = vpack.c.b16 %v115, %v114
    %v119 = vsel %vm64, %v116, 0
    %v122 = vsel %vm64, %v117, 0
    %124 = vmatprep.subr.bf16.mxu0 0
    %125 = vmatpush1.bf16.msra.mxu0 %v60
    %126 = vmatprep.subr.bf16.mxu0 0
    %127 = vmatpush1.bf16.msra.mxu0 %v61
    %128 = vmatprep.subr.bf16.mxu0 0
    %129 = vmatpush1.bf16.msra.mxu0 0
    %130 = vmatprep.subr.bf16.mxu0 0
    %131 = vmatpush1.bf16.msra.mxu0 0
    %132 = vmatprep.subr.bf16.mxu0 0
    %133 = vmatpush1.bf16.msra.mxu0 0
    %134 = vmatprep.subr.bf16.mxu0 0
    %135 = vmatpush1.bf16.msra.mxu0 0
    %136 = vmatprep.subr.bf16.mxu0 0
    %137 = vmatpush1.bf16.msra.mxu0 0
    %138 = vmatprep.subr.bf16.mxu0 0
    %139 = vmatpush1.bf16.msra.mxu0 0
    %140 = vmatprep.subr.bf16.mxu0 0
    %141 = vmatpush1.bf16.msra.mxu0 0
    %142 = vmatprep.subr.bf16.mxu0 0
    %143 = vmatpush1.bf16.msra.mxu0 0
    %144 = vmatprep.subr.bf16.mxu0 0
    %145 = vmatpush1.bf16.msra.mxu0 0
    %146 = vmatprep.subr.bf16.mxu0 0
    %147 = vmatpush1.bf16.msra.mxu0 0
    %148 = vmatprep.subr.bf16.mxu0 0
    %149 = vmatpush1.bf16.msra.mxu0 0
    %150 = vmatprep.subr.bf16.mxu0 0
    %151 = vmatpush1.bf16.msra.mxu0 0
    %152 = vmatprep.subr.bf16.mxu0 0
    %153 = vmatpush1.bf16.msra.mxu0 0
    %154 = vmatprep.subr.bf16.mxu0 0
    %155 = vmatpush1.bf16.msra.mxu0 0
    %156 = vmatprep.mubr.bf16.mxu0 0
    %157 = vmatmul.mubr.bf16.gmra.mrb[0].mxu0 %v119
    %v158 = vpop.f32.mrb[0].mxu0
    %v159 = vadd.f32 %v50, %v158
    %v160 = vpop.f32.mrb[0].mxu0
    %v161 = vpop.f32.mrb[0].mxu0
    %v162 = vadd.f32 %v50, %v161
    %v163 = vpop.f32.mrb[0].mxu0
    %164 = vmatprep.mubr.bf16.mxu0 0
    %165 = vmatmul.mubr.bf16.gmra.mrb[0].mxu0 %v122
    %v166 = vpop.f32.mrb[0].mxu0
    %v167 = vadd.f32 %v50, %v166
    %v168 = vpop.f32.mrb[0].mxu0
    %v169 = vpop.f32.mrb[0].mxu0
    %v170 = vadd.f32 %v50, %v169
    %v171 = vpop.f32.mrb[0].mxu0
    %172 = vdwg.mxu0
    %v174 = vrot.slane %v103, 4
    %v176 = vld [vmem:[%s4] sm:$0xf]
    %v177 = vld [vmem:[%s4 + $0x4] sm:$0xf]
    %v178 = vld [vmem:[%s5] sm:$0xf]
    %v179 = vld [vmem:[%s5 + $0x4] sm:$0xf]
    %v180 = vpack.c.bf16 %v103, %v103
    %v181 = vpack.c.bf16 %v174, %v174
    %v182 = vpack.c.bf16 %v162, %v159
    %v183 = vpack.c.bf16 %v170, %v167
    %v186 = vunpack.c.l.b16 %v178
    %v187 = vunpack.c.l.b16 %v179
    %v188 = vpack.c.b16 %v187, %v186
    %vm189 = vcmask 130048
    %v191 = vsel %vm189, %v188, 0
    %193 = vmatprep.subr.bf16.mxu0 0
    %194 = vmatpush1.bf16.msra.mxu0 %v182
    %195 = vmatprep.subr.bf16.mxu0 0
    %196 = vmatpush1.bf16.msra.mxu0 0
    %197 = vmatprep.subr.bf16.mxu0 0
    %198 = vmatpush1.bf16.msra.mxu0 0
    %199 = vmatprep.subr.bf16.mxu0 0
    %200 = vmatpush1.bf16.msra.mxu0 0
    %201 = vmatprep.subr.bf16.mxu0 0
    %202 = vmatpush1.bf16.msra.mxu0 0
    %203 = vmatprep.subr.bf16.mxu0 0
    %204 = vmatpush1.bf16.msra.mxu0 0
    %205 = vmatprep.subr.bf16.mxu0 0
    %206 = vmatpush1.bf16.msra.mxu0 0
    %207 = vmatprep.subr.bf16.mxu0 0
    %208 = vmatpush1.bf16.msra.mxu0 0
    %209 = vmatprep.subr.bf16.mxu0 0
    %210 = vmatpush1.bf16.msra.mxu0 0
    %211 = vmatprep.subr.bf16.mxu0 0
    %212 = vmatpush1.bf16.msra.mxu0 0
    %213 = vmatprep.subr.bf16.mxu0 0
    %214 = vmatpush1.bf16.msra.mxu0 0
    %215 = vmatprep.subr.bf16.mxu0 0
    %216 = vmatpush1.bf16.msra.mxu0 0
    %217 = vmatprep.subr.bf16.mxu0 0
    %218 = vmatpush1.bf16.msra.mxu0 0
    %219 = vmatprep.subr.bf16.mxu0 0
    %220 = vmatpush1.bf16.msra.mxu0 0
    %221 = vmatprep.subr.bf16.mxu0 0
    %222 = vmatpush1.bf16.msra.mxu0 0
    %223 = vmatprep.subr.bf16.mxu0 0
    %224 = vmatpush1.bf16.msra.mxu0 0
    %225 = vmatprep.mubr.bf16.mxu0 0
    %226 = vmatmul.mubr.bf16.gmra.mrb[0].mxu0 %v191
    %v227 = vpop.f32.mrb[0].mxu0
    %v228 = vadd.f32 0.0, %v227
    %v229 = vpop.f32.mrb[0].mxu0
    %v230 = vpop.f32.mrb[0].mxu0
    %v231 = vadd.f32 0.0, %v230
    %v232 = vpop.f32.mrb[0].mxu0
    %233 = vdwg.mxu0
    %234 = vmatprep.subr.bf16.mxu0 0
    %235 = vmatpush1.bf16.msra.mxu0 %v183
    %236 = vmatprep.subr.bf16.mxu0 0
    %237 = vmatpush1.bf16.msra.mxu0 0
    %238 = vmatprep.subr.bf16.mxu0 0
    %239 = vmatpush1.bf16.msra.mxu0 0
    %240 = vmatprep.subr.bf16.mxu0 0
    %241 = vmatpush1.bf16.msra.mxu0 0
    %242 = vmatprep.subr.bf16.mxu0 0
    %243 = vmatpush1.bf16.msra.mxu0 0
    %244 = vmatprep.subr.bf16.mxu0 0
    %245 = vmatpush1.bf16.msra.mxu0 0
    %246 = vmatprep.subr.bf16.mxu0 0
    %247 = vmatpush1.bf16.msra.mxu0 0
    %248 = vmatprep.subr.bf16.mxu0 0
    %249 = vmatpush1.bf16.msra.mxu0 0
    %250 = vmatprep.subr.bf16.mxu0 0
    %251 = vmatpush1.bf16.msra.mxu0 0
    %252 = vmatprep.subr.bf16.mxu0 0
    %253 = vmatpush1.bf16.msra.mxu0 0
    %254 = vmatprep.subr.bf16.mxu0 0
    %255 = vmatpush1.bf16.msra.mxu0 0
    %256 = vmatprep.subr.bf16.mxu0 0
    %257 = vmatpush1.bf16.msra.mxu0 0
    %258 = vmatprep.subr.bf16.mxu0 0
    %259 = vmatpush1.bf16.msra.mxu0 0
    %260 = vmatprep.subr.bf16.mxu0 0
    %261 = vmatpush1.bf16.msra.mxu0 0
    %262 = vmatprep.subr.bf16.mxu0 0
    %263 = vmatpush1.bf16.msra.mxu0 0
    %264 = vmatprep.subr.bf16.mxu0 0
    %265 = vmatpush1.bf16.msra.mxu0 0
    %266 = vmatprep.mubr.bf16.mxu0 0
    %267 = vmatmul.mubr.bf16.gmra.mrb[0].mxu0 %v191
    %v268 = vpop.f32.mrb[0].mxu0
    %v269 = vadd.f32 0.0, %v268
    %v270 = vpop.f32.mrb[0].mxu0
    %v271 = vpop.f32.mrb[0].mxu0
    %v272 = vadd.f32 0.0, %v271
    %v273 = vpop.f32.mrb[0].mxu0
    %274 = vdwg.mxu0
    %v277 = vunpack.c.l.b16 %v176
    %v278 = vunpack.c.l.b16 %v177
    %v279 = vpack.c.b16 %v278, %v277
    %vm280 = vcmask 31744
    %v282 = vsel %vm280, %v279, 0
    %vm284 = vcmask 1041408
    %v286 = vsel %vm284, %v180, 0
    %288 = vmatprep.subr.bf16.mxu0 0
    %289 = vmatpush1.bf16.msra.mxu0 %v286
    %290 = vmatprep.subr.bf16.mxu0 0
    %291 = vmatpush1.bf16.msra.mxu0 0
    %292 = vmatprep.subr.bf16.mxu0 0
    %293 = vmatpush1.bf16.msra.mxu0 0
    %294 = vmatprep.subr.bf16.mxu0 0
    %295 = vmatpush1.bf16.msra.mxu0 0
    %296 = vmatprep.subr.bf16.mxu0 0
    %297 = vmatpush1.bf16.msra.mxu0 0
    %298 = vmatprep.subr.bf16.mxu0 0
    %299 = vmatpush1.bf16.msra.mxu0 0
    %300 = vmatprep.subr.bf16.mxu0 0
    %301 = vmatpush1.bf16.msra.mxu0 0
    %302 = vmatprep.subr.bf16.mxu0 0
    %303 = vmatpush1.bf16.msra.mxu0 0
    %304 = vmatprep.subr.bf16.mxu0 0
    %305 = vmatpush1.bf16.msra.mxu0 0
    %306 = vmatprep.subr.bf16.mxu0 0
    %307 = vmatpush1.bf16.msra.mxu0 0
    %308 = vmatprep.subr.bf16.mxu0 0
    %309 = vmatpush1.bf16.msra.mxu0 0
    %310 = vmatprep.subr.bf16.mxu0 0
    %311 = vmatpush1.bf16.msra.mxu0 0
    %312 = vmatprep.subr.bf16.mxu0 0
    %313 = vmatpush1.bf16.msra.mxu0 0
    %314 = vmatprep.subr.bf16.mxu0 0
    %315 = vmatpush1.bf16.msra.mxu0 0
    %316 = vmatprep.subr.bf16.mxu0 0
    %317 = vmatpush1.bf16.msra.mxu0 0
    %318 = vmatprep.subr.bf16.mxu0 0
    %319 = vmatpush1.bf16.msra.mxu0 0
    %320 = vmatprep.mubr.bf16.mxu0 0
    %321 = vmatmul.mubr.bf16.gmra.mrb[0].mxu0 %v282
    %v322 = vpop.f32.mrb[0].mxu0
    %v323 = vadd.f32 %v228, %v322
    %v324 = vpop.f32.mrb[0].mxu0
    %v325 = vpop.f32.mrb[0].mxu0
    %v326 = vadd.f32 %v231, %v325
    %v327 = vpop.f32.mrb[0].mxu0
    %328 = vdwg.mxu0
    %v330 = vsel %vm284, %v181, 0
    %332 = vmatprep.subr.bf16.mxu0 0
    %333 = vmatpush1.bf16.msra.mxu0 %v330
    %334 = vmatprep.subr.bf16.mxu0 0
    %335 = vmatpush1.bf16.msra.mxu0 0
    %336 = vmatprep.subr.bf16.mxu0 0
    %337 = vmatpush1.bf16.msra.mxu0 0
    %338 = vmatprep.subr.bf16.mxu0 0
    %339 = vmatpush1.bf16.msra.mxu0 0
    %340 = vmatprep.subr.bf16.mxu0 0
    %341 = vmatpush1.bf16.msra.mxu0 0
    %342 = vmatprep.subr.bf16.mxu0 0
    %343 = vmatpush1.bf16.msra.mxu0 0
    %344 = vmatprep.subr.bf16.mxu0 0
    %345 = vmatpush1.bf16.msra.mxu0 0
    %346 = vmatprep.subr.bf16.mxu0 0
    %347 = vmatpush1.bf16.msra.mxu0 0
    %348 = vmatprep.subr.bf16.mxu0 0
    %349 = vmatpush1.bf16.msra.mxu0 0
    %350 = vmatprep.subr.bf16.mxu0 0
    %351 = vmatpush1.bf16.msra.mxu0 0
    %352 = vmatprep.subr.bf16.mxu0 0
    %353 = vmatpush1.bf16.msra.mxu0 0
    %354 = vmatprep.subr.bf16.mxu0 0
    %355 = vmatpush1.bf16.msra.mxu0 0
    %356 = vmatprep.subr.bf16.mxu0 0
    %357 = vmatpush1.bf16.msra.mxu0 0
    %358 = vmatprep.subr.bf16.mxu0 0
    %359 = vmatpush1.bf16.msra.mxu0 0
    %360 = vmatprep.subr.bf16.mxu0 0
    %361 = vmatpush1.bf16.msra.mxu0 0
    %362 = vmatprep.subr.bf16.mxu0 0
    %363 = vmatpush1.bf16.msra.mxu0 0
    %364 = vmatprep.mubr.bf16.mxu0 0
    %365 = vmatmul.mubr.bf16.gmra.mrb[0].mxu0 %v282
    %v366 = vpop.f32.mrb[0].mxu0
    %v367 = vadd.f32 %v269, %v366
    %v368 = vpop.f32.mrb[0].mxu0
    %v369 = vpop.f32.mrb[0].mxu0
    %v370 = vadd.f32 %v272, %v369
    %v371 = vpop.f32.mrb[0].mxu0
    %372 = vdwg.mxu0
    %v373 = vld [vmem:[%s6] sm:$0xff]
    %v374 = vld [vmem:[%s6 + $0x8] sm:$0xff]
    %376 = vset.pattern.permute.xlu0 0
    %377 = vperm.xlu0 %376, %v373
    %v378 = vpop.permute.xlu0 %377
    %381 = vset.pattern.permute.xlu0 0
    %382 = vperm.xlu0 %381, %v374
    %v383 = vpop.permute.xlu0 %382
    %v385 = vadd.f32 %v323, %v378
    %v386 = vadd.f32 %v326, %v383
    %v387 = vadd.f32 %v367, %v378
    %v388 = vadd.f32 %v370, %v383
    %389 = vst.msk [vmem:[%s9] sm:$0xff] %vm280, %v385
    %390 = vst.msk [vmem:[%s9 + $0x8] sm:$0xff] %vm280, %v386
    %391 = vst.msk [vmem:[%s9 + $0x10] sm:$0xff] %vm280, %v387
    %392 = vst.msk [vmem:[%s9 + $0x18] sm:$0xff] %vm280, %v388
    %v393 = vld [vmem:[%s7] sm:$0xff]
    %v394 = vld [vmem:[%s7 + $0x8] sm:$0xff]
    %v395 = vld [vmem:[%s7 + $0x10] sm:$0xff]
    %v396 = vld [vmem:[%s7 + $0x18] sm:$0xff]
    %v397 = vsub.f32 %v385, %v393
    %v398 = vsub.f32 %v386, %v394
    %v399 = vsub.f32 %v387, %v395
    %v400 = vsub.f32 %v388, %v396
    %v401 = vmul.f32 %v397, %v397
    %v402 = vmul.f32 %v398, %v398
    %v403 = vmul.f32 %v399, %v399
    %v404 = vmul.f32 %v400, %v400
    %v405 = vsel %vm280, %v401, 0.0
    %406 = vadd.xlane.f32.xlu0 %v405
    %v407 = vpop.xlane.xlu0 %406
    %v408 = vsel %vm280, %v402, 0.0
    %409 = vadd.xlane.f32.xlu0 %v408
    %v410 = vpop.xlane.xlu0 %409
    %v411 = vsel %vm280, %v403, 0.0
    %412 = vadd.xlane.f32.xlu0 %v411
    %v413 = vpop.xlane.xlu0 %412
    %v414 = vsel %vm280, %v404, 0.0
    %415 = vadd.xlane.f32.xlu0 %v414
    %v416 = vpop.xlane.xlu0 %415
    %v417 = vrcp.pop 4.0
    %v418 = vmul.f32 %v407, %v417
    %v419 = vmul.f32 %v410, %v417
    %v420 = vmul.f32 %v413, %v417
    %v421 = vmul.f32 %v416, %v417
    %v422 = vld [vmem:[%s8] sm:$0xff]
    %v423 = vld [vmem:[%s8 + $0x8] sm:$0xff]
    %v424 = vld [vmem:[%s8 + $0x10] sm:$0xff]
    %v425 = vld [vmem:[%s8 + $0x18] sm:$0xff]
    %v426 = vmul.f32 %v418, %v422
    %v427 = vmul.f32 %v419, %v423
    %v428 = vmul.f32 %v420, %v424
    %v429 = vmul.f32 %v421, %v425
    %vm430 = vcmask 7168
    %v431 = vsel %vm430, %v426, 0.0
    %v432 = vsel %vm430, %v427, 0.0
    %v433 = vadd.f32 %v431, %v432
    %v434 = vrot.slane %v433, 4
    %v435 = vadd.f32 %v433, %v434
    %v436 = vrot.slane %v435, 2
    %v437 = vadd.f32 %v435, %v436
    %v438 = vrot.slane %v437, 1
    %v439 = vadd.f32 %v437, %v438
    %v440 = vsel %vm430, %v428, 0.0
    %v441 = vsel %vm430, %v429, 0.0
    %v442 = vadd.f32 %v440, %v441
    %v443 = vrot.slane %v442, 4
    %v444 = vadd.f32 %v442, %v443
    %v445 = vrot.slane %v444, 2
    %v446 = vadd.f32 %v444, %v445
    %v447 = vrot.slane %v446, 1
    %v448 = vadd.f32 %v446, %v447
    %v449 = vsel %vm430, %v439, 0.0
    %v450 = vsel %vm430, %v448, 0.0
    %v451 = vadd.f32 %v449, %v450
    %vm452 = vcmask 0
    %453 = vst.msk [vmem:[#allocation2] sm:$0x1] %vm452, %v451
    // Predicated region
    $region38: #{_lambda_.7} parent=1 // pred_check
      _
    $region39: #{_lambda_.7} parent=1 // pred_check_branch
      %455 = sbr.rel (0) target = $region41
    $region40: #{_lambda_.7} parent=1 // pred_region
      _
    $region41: #{_lambda_.7} parent=1 // pred_fallthru
      _
    // Predicated region
    $region42: #{_lambda_.7} parent=1 // pred_check
      _
    $region43: #{_lambda_.7} parent=1 // pred_check_branch
      %457 = sbr.rel (0) target = $region45
    $region44: #{_lambda_.7} parent=1 // pred_region
      %s459 = ssub.s32 16, 16
      %460 = vsyncadd [#allocation3], %s459
      %s462 = sshll.u32 [#allocation2], 4
      %s463 = int_to_ptr.vmem [resolvable:$true] %s462
      %465 = dma.vmem_to_hbm [thread:$0]  %s463, 16, %s10, [#allocation3]
    $region45: #{_lambda_.7} parent=1 // pred_fallthru
      _
    // Predicated region
    $region46: #{_lambda_.7} parent=1 // pred_check
      _
    $region47: #{_lambda_.7} parent=1 // pred_check_branch
      %467 = sbr.rel (0) target = $region49
    $region48: #{_lambda_.7} parent=1 // pred_region
      _
    $region49: #{_lambda_.7} parent=1 // pred_fallthru
      _
    // Predicated region
    $region50: #{_lambda_.7} parent=1 // pred_check
      _
    $region51: #{_lambda_.7} parent=1 // pred_check_branch
      %469 = sbr.rel (0) target = $region53
    $region52: #{_lambda_.7} parent=1 // pred_region
      %470 = dma.done [#allocation3], 16
    $region53: #{_lambda_.7} parent=1 // pred_fallthru
      _
    %471 = vsyncpa [#allocation3], 1

// kernel: _lambda_.9
$region0: #{_lambda_.9}
  #allocation0 [shape = 'u32[]', space=smem, size = 0x4, offset = 0x4, fixed_abs, tag = 'smem constant byte address 0x4 - core index']
  #allocation1 [shape = 'u32[144,128]{1,0:T(1,128)}', space=vmem, size = 0x12000, scoped, tag = 'internal scratch']
  %s0 = inlined_call_operand.vmem [shape: bf16[8,32], index: 0, kind: input, shape index: {}]
  %s1 = inlined_call_operand.vmem [shape: f32[32,32], index: 1, kind: input, shape index: {}]
  %s2 = inlined_call_operand.vmem [shape: bf16[96,32], index: 2, kind: input, shape index: {}]
  %s3 = inlined_call_operand.vmem [shape: f32[1,32], index: 3, kind: input, shape index: {}]
  %s4 = inlined_call_operand.vmem [shape: f32[32,32], index: 4, kind: input, shape index: {}]
  %s5 = inlined_call_operand.vmem [shape: bf16[32,4], index: 5, kind: input, shape index: {}]
  %s6 = inlined_call_operand.vmem [shape: f32[1,4], index: 6, kind: input, shape index: {}]
  %s7 = inlined_call_operand.vmem [shape: bf16[16,4], index: 7, kind: input, shape index: {}]
  %s8 = inlined_call_operand.vmem [shape: bf16[16,16], index: 8, kind: input, shape index: {}]
  %s9 = inlined_call_operand.vmem [shape: f32[16,1], index: 9, kind: input, shape index: {}]
  %s10 = inlined_call_operand.vmem [shape: f32[2,16,4], index: 10, kind: input, shape index: {}]
  %s11 = inlined_call_operand.vmem [shape: f32[2,16,1], index: 11, kind: input, shape index: {}]
  %s12 = inlined_call_operand.hbm [shape: f32[2,16,4], index: 12, kind: output, shape index: {0}]
  %s13 = inlined_call_operand.hbm [shape: f32[1,1,1], index: 13, kind: output, shape index: {1}]
  %14 = xla_tuple %s12, %s13
  %s15 = sld [smem:[#allocation0]]
  $region66: #{_lambda_.9} parent=0
    _
  %s17 = ssub.s32 1, %s15
  %s18 = scalar_select 0, %s17, %s15
  $region1: #{_lambda_.9} parent=0
    #allocation2 [shape = 'u8[16384]{0}', space=vmem, size = 0x4000, scoped, tag = 'output window, operand 0, single buffered']
    #allocation3 [shape = 's32[1]{0}', space=sflag, size = 0x4, scoped, tag = 'scoped memory for _lambda_.9']
    #allocation4 [shape = 'u8[512]{0}', space=vmem, size = 0x400, scoped, tag = 'output window, operand 1, single buffered']
    #allocation5 [shape = 's32[1]{0}', space=sflag, size = 0x4, scoped, tag = 'scoped memory for _lambda_.9']
    %19 = vsyncpa [#allocation3], 0
    %20 = vsyncpa [#allocation5], 0
    // Predicated region
    $region2: #{_lambda_.9} parent=1 // pred_check
      _
    $region3: #{_lambda_.9} parent=1 // pred_check_branch
      %22 = sbr.rel (0) target = $region5
    $region4: #{_lambda_.9} parent=1 // pred_region
      _
    $region5: #{_lambda_.9} parent=1 // pred_fallthru
      _
    // Predicated region
    $region6: #{_lambda_.9} parent=1 // pred_check
      _
    $region7: #{_lambda_.9} parent=1 // pred_check_branch
      %24 = sbr.rel (0) target = $region9
    $region8: #{_lambda_.9} parent=1 // pred_region
      _
    $region9: #{_lambda_.9} parent=1 // pred_fallthru
      _
    // Predicated region
    $region10: #{_lambda_.9} parent=1 // pred_check
      _
    $region11: #{_lambda_.9} parent=1 // pred_check_branch
      %26 = sbr.rel (0) target = $region13
    $region12: #{_lambda_.9} parent=1 // pred_region
      _
    $region13: #{_lambda_.9} parent=1 // pred_fallthru
      _
    // Predicated region
    $region14: #{_lambda_.9} parent=1 // pred_check
      _
    $region15: #{_lambda_.9} parent=1 // pred_check_branch
      %28 = sbr.rel (0) target = $region17
    $region16: #{_lambda_.9} parent=1 // pred_region
      _
    $region17: #{_lambda_.9} parent=1 // pred_fallthru
      _
    // Predicated region
    $region18: #{_lambda_.9} parent=1 // pred_check
      _
    $region19: #{_lambda_.9} parent=1 // pred_check_branch
      %30 = sbr.rel (0) target = $region21
    $region20: #{_lambda_.9} parent=1 // pred_region
      _
    $region21: #{_lambda_.9} parent=1 // pred_fallthru
      _
    // Predicated region
    $region22: #{_lambda_.9} parent=1 // pred_check
      _
    $region23: #{_lambda_.9} parent=1 // pred_check_branch
      %32 = sbr.rel (0) target = $region25
    $region24: #{_lambda_.9} parent=1 // pred_region
      _
    $region25: #{_lambda_.9} parent=1 // pred_fallthru
      _
    // Predicated region
    $region26: #{_lambda_.9} parent=1 // pred_check
      _
    $region27: #{_lambda_.9} parent=1 // pred_check_branch
      %34 = sbr.rel (0) target = $region29
    $region28: #{_lambda_.9} parent=1 // pred_region
      _
    $region29: #{_lambda_.9} parent=1 // pred_fallthru
      _
    // Predicated region
    $region30: #{_lambda_.9} parent=1 // pred_check
      _
    $region31: #{_lambda_.9} parent=1 // pred_check_branch
      %36 = sbr.rel (0) target = $region33
    $region32: #{_lambda_.9} parent=1 // pred_region
      _
    $region33: #{_lambda_.9} parent=1 // pred_fallthru
      _
    // Predicated region
    $region34: #{_lambda_.9} parent=1 // pred_check
      _
    $region35: #{_lambda_.9} parent=1 // pred_check_branch
      %38 = sbr.rel (0) target = $region37
    $region36: #{_lambda_.9} parent=1 // pred_region
      _
    $region37: #{_lambda_.9} parent=1 // pred_fallthru
      _
    // Predicated region
    $region38: #{_lambda_.9} parent=1 // pred_check
      _
    $region39: #{_lambda_.9} parent=1 // pred_check_branch
      %40 = sbr.rel (0) target = $region41
    $region40: #{_lambda_.9} parent=1 // pred_region
      _
    $region41: #{_lambda_.9} parent=1 // pred_fallthru
      _
    // Predicated region
    $region42: #{_lambda_.9} parent=1 // pred_check
      _
    $region43: #{_lambda_.9} parent=1 // pred_check_branch
      %42 = sbr.rel (0) target = $region45
    $region44: #{_lambda_.9} parent=1 // pred_region
      _
    $region45: #{_lambda_.9} parent=1 // pred_fallthru
      _
    // Predicated region
    $region46: #{_lambda_.9} parent=1 // pred_check
      _
    $region47: #{_lambda_.9} parent=1 // pred_check_branch
      %44 = sbr.rel (0) target = $region49
    $region48: #{_lambda_.9} parent=1 // pred_region
      _
    $region49: #{_lambda_.9} parent=1 // pred_fallthru
      _
    %v46 = vld [vmem:[%s1] sm:$0xff]
    %v47 = vld [vmem:[%s1 + $0x8] sm:$0xff]
    %v48 = vld [vmem:[%s1 + $0x10] sm:$0xff]
    %v49 = vld [vmem:[%s1 + $0x18] sm:$0xff]
    %v51 = vrot.slane %v47, 7
    %vm54 = vcmask 1040384
    %v55 = vrot.slane %v46, 7
    %v56 = vsel %vm54, %v55, %v51
    %v60 = vrot.slane %v49, 7
    %v63 = vrot.slane %v48, 7
    %v64 = vsel %vm54, %v63, %v60
    %v67 = vsel %vm54, %v51, %v55
    %v68 = vsel %vm54, %v60, %v63
    %vm69 = vcmask 1046528
    %v70 = vrot.slane %v46, 1
    %v71 = vrot.slane %v47, 1
    %v72 = vsel %vm69, %v70, %v71
    %v75 = vrot.slane %v48, 1
    %v76 = vrot.slane %v49, 1
    %v77 = vsel %vm69, %v75, %v76
    %v80 = vsel %vm69, %v71, %v70
    %v81 = vsel %vm69, %v76, %v75
    %82 = vrot.lane.b32.xlu0 %v46, 32
    %v83 = vpop.permute.xlu0 %82
    %84 = vrot.lane.b32.xlu0 %v47, 32
    %v85 = vpop.permute.xlu0 %84
    %86 = vrot.lane.b32.xlu0 %v48, 32
    %v87 = vpop.permute.xlu0 %86
    %88 = vrot.lane.b32.xlu0 %v49, 32
    %v89 = vpop.permute.xlu0 %88
    %96 = vrot.lane.b32.xlu0 %v72, 64
    %v97 = vpop.permute.xlu0 %96
    %98 = vrot.lane.b32.xlu0 %v80, 64
    %v99 = vpop.permute.xlu0 %98
    %100 = vrot.lane.b32.xlu0 %v77, 64
    %v101 = vpop.permute.xlu0 %100
    %102 = vrot.lane.b32.xlu0 %v81, 64
    %v103 = vpop.permute.xlu0 %102
    %vm108 = vcmask 261120
    %v109 = vsel %vm108, %v67, %v83
    %v110 = vsel %vm108, %v56, %v85
    %v111 = vsel %vm108, %v68, %v87
    %v112 = vsel %vm108, %v64, %v89
    %vm113 = vcmask 523264
    %v114 = vsel %vm113, %v109, %v97
    %v115 = vsel %vm113, %v110, %v99
    %v116 = vsel %vm113, %v111, %v101
    %v117 = vsel %vm113, %v112, %v103
    %v118 = vpack.c.bf16 %v115, %v114
    %v119 = vpack.c.bf16 %v117, %v116
    %v120 = vld [vmem:[%s2] sm:$0xf]
    %v121 = vld [vmem:[%s2 + $0x4] sm:$0xf]
    %v122 = vld [vmem:[%s2 + $0x8] sm:$0xf]
    %v123 = vld [vmem:[%s2 + $0xc] sm:$0xf]
    %v124 = vld [vmem:[%s2 + $0x10] sm:$0xf]
    %v125 = vld [vmem:[%s2 + $0x14] sm:$0xf]
    %v126 = vld [vmem:[%s2 + $0x18] sm:$0xf]
    %v127 = vld [vmem:[%s2 + $0x1c] sm:$0xf]
    %v128 = vld [vmem:[%s2 + $0x20] sm:$0xf]
    %v129 = vld [vmem:[%s2 + $0x24] sm:$0xf]
    %v130 = vld [vmem:[%s2 + $0x28] sm:$0xf]
    %v131 = vld [vmem:[%s2 + $0x2c] sm:$0xf]
    %v132 = vld [vmem:[%s3] sm:$0x1]
    %v134 = vlaneseq
    %v135 = vshrl.u32 %v134, 7
    %v136 = vsub.s32 0, %v135
    %v137 = vrot.slane %v132, %v136
    %v151 = vunpack.c.l.b16 %v120
    %v152 = vunpack.c.l.b16 %v121
    %v153 = vunpack.c.l.b16 %v122
    %v154 = vunpack.c.l.b16 %v123
    %v155 = vunpack.c.l.b16 %v124
    %v156 = vunpack.c.l.b16 %v125
    %v157 = vunpack.c.l.b16 %v126
    %v158 = vunpack.c.l.b16 %v127
    %v159 = vunpack.c.l.b16 %v128
    %v160 = vunpack.c.l.b16 %v129
    %v161 = vunpack.c.l.b16 %v130
    %v162 = vunpack.c.l.b16 %v131
    %v163 = vpack.c.b16 %v152, %v151
    %v164 = vpack.c.b16 %v154, %v153
    %v165 = vpack.c.b16 %v156, %v155
    %v166 = vpack.c.b16 %v158, %v157
    %v167 = vpack.c.b16 %v160, %v159
    %v168 = vpack.c.b16 %v162, %v161
    %vm175 = vcmask 785408
    %v177 = vsel %vm175, %v118, 0
    %v180 = vsel %vm175, %v119, 0
    %182 = vmatprep.subr.bf16.mxu0 0
    %183 = vmatpush1.bf16.msra.mxu0 %v163
    %184 = vmatprep.subr.bf16.mxu0 0
    %185 = vmatpush1.bf16.msra.mxu0 %v164
    %186 = vmatprep.subr.bf16.mxu0 0
    %187 = vmatpush1.bf16.msra.mxu0 %v165
    %188 = vmatprep.subr.bf16.mxu0 0
    %189 = vmatpush1.bf16.msra.mxu0 %v166
    %190 = vmatprep.subr.bf16.mxu0 0
    %191 = vmatpush1.bf16.msra.mxu0 %v167
    %192 = vmatprep.subr.bf16.mxu0 0
    %193 = vmatpush1.bf16.msra.mxu0 %v168
    %194 = vmatprep.subr.bf16.mxu0 0
    %195 = vmatpush1.bf16.msra.mxu0 0
    %196 = vmatprep.subr.bf16.mxu0 0
    %197 = vmatpush1.bf16.msra.mxu0 0
    %198 = vmatprep.subr.bf16.mxu0 0
    %199 = vmatpush1.bf16.msra.mxu0 0
    %200 = vmatprep.subr.bf16.mxu0 0
    %201 = vmatpush1.bf16.msra.mxu0 0
    %202 = vmatprep.subr.bf16.mxu0 0
    %203 = vmatpush1.bf16.msra.mxu0 0
    %204 = vmatprep.subr.bf16.mxu0 0
    %205 = vmatpush1.bf16.msra.mxu0 0
    %206 = vmatprep.subr.bf16.mxu0 0
    %207 = vmatpush1.bf16.msra.mxu0 0
    %208 = vmatprep.subr.bf16.mxu0 0
    %209 = vmatpush1.bf16.msra.mxu0 0
    %210 = vmatprep.subr.bf16.mxu0 0
    %211 = vmatpush1.bf16.msra.mxu0 0
    %212 = vmatprep.subr.bf16.mxu0 0
    %213 = vmatpush1.bf16.msra.mxu0 0
    %214 = vmatprep.mubr.bf16.mxu0 0
    %215 = vmatmul.mubr.bf16.gmra.mrb[0].mxu0 %v177
    %v216 = vpop.f32.mrb[0].mxu0
    %v217 = vadd.f32 %v137, %v216
    %v218 = vpop.f32.mrb[0].mxu0
    %v219 = vpop.f32.mrb[0].mxu0
    %v220 = vadd.f32 %v137, %v219
    %v221 = vpop.f32.mrb[0].mxu0
    %222 = vmatprep.mubr.bf16.mxu0 0
    %223 = vmatmul.mubr.bf16.gmra.mrb[0].mxu0 %v180
    %v224 = vpop.f32.mrb[0].mxu0
    %v225 = vadd.f32 %v137, %v224
    %v226 = vpop.f32.mrb[0].mxu0
    %v227 = vpop.f32.mrb[0].mxu0
    %v228 = vadd.f32 %v137, %v227
    %v229 = vpop.f32.mrb[0].mxu0
    %230 = vdwg.mxu0
    %v231 = vld [vmem:[%s4] sm:$0xff]
    %v232 = vld [vmem:[%s4 + $0x8] sm:$0xff]
    %v233 = vld [vmem:[%s4 + $0x10] sm:$0xff]
    %v234 = vld [vmem:[%s4 + $0x18] sm:$0xff]
    %v235 = vadd.f32 %v217, %v231
    %v236 = vadd.f32 %v220, %v232
    %v237 = vadd.f32 %v225, %v233
    %v238 = vadd.f32 %v228, %v234
    %v239 = vpack.c.bf16 %v236, %v235
    %v240 = vpack.c.bf16 %v238, %v237
    %v241 = vld [vmem:[%s0] sm:$0xf]
    %v242 = vld [vmem:[%s5] sm:$0xf]
    %v243 = vld [vmem:[%s5 + $0x4] sm:$0xf]
    %v244 = vld [vmem:[%s5 + $0x8] sm:$0xf]
    %v245 = vld [vmem:[%s5 + $0xc] sm:$0xf]
    %v246 = vld [vmem:[%s6] sm:$0x1]
    %v248 = vlaneseq
    %v249 = vshrl.u32 %v248, 7
    %v250 = vsub.s32 0, %v249
    %v251 = vrot.slane %v246, %v250
    %v257 = vunpack.c.l.b16 %v242
    %v258 = vunpack.c.l.b16 %v243
    %v259 = vunpack.c.l.b16 %v244
    %v260 = vunpack.c.l.b16 %v245
    %v261 = vpack.c.b16 %v258, %v257
    %v262 = vpack.c.b16 %v260, %v259
    %v266 = vsel %vm108, %v241, 0
    %268 = vmatprep.subr.bf16.mxu0 0
    %269 = vmatpush1.bf16.msra.mxu0 %v261
    %270 = vmatprep.subr.bf16.mxu0 0
    %271 = vmatpush1.bf16.msra.mxu0 %v262
    %272 = vmatprep.subr.bf16.mxu0 0
    %273 = vmatpush1.bf16.msra.mxu0 0
    %274 = vmatprep.subr.bf16.mxu0 0
    %275 = vmatpush1.bf16.msra.mxu0 0
    %276 = vmatprep.subr.bf16.mxu0 0
    %277 = vmatpush1.bf16.msra.mxu0 0
    %278 = vmatprep.subr.bf16.mxu0 0
    %279 = vmatpush1.bf16.msra.mxu0 0
    %280 = vmatprep.subr.bf16.mxu0 0
    %281 = vmatpush1.bf16.msra.mxu0 0
    %282 = vmatprep.subr.bf16.mxu0 0
    %283 = vmatpush1.bf16.msra.mxu0 0
    %284 = vmatprep.subr.bf16.mxu0 0
    %285 = vmatpush1.bf16.msra.mxu0 0
    %286 = vmatprep.subr.bf16.mxu0 0
    %287 = vmatpush1.bf16.msra.mxu0 0
    %288 = vmatprep.subr.bf16.mxu0 0
    %289 = vmatpush1.bf16.msra.mxu0 0
    %290 = vmatprep.subr.bf16.mxu0 0
    %291 = vmatpush1.bf16.msra.mxu0 0
    %292 = vmatprep.subr.bf16.mxu0 0
    %293 = vmatpush1.bf16.msra.mxu0 0
    %294 = vmatprep.subr.bf16.mxu0 0
    %295 = vmatpush1.bf16.msra.mxu0 0
    %296 = vmatprep.subr.bf16.mxu0 0
    %297 = vmatpush1.bf16.msra.mxu0 0
    %298 = vmatprep.subr.bf16.mxu0 0
    %299 = vmatpush1.bf16.msra.mxu0 0
    %300 = vmatprep.mubr.bf16.mxu0 0
    %301 = vmatmul.mubr.bf16.gmra.mrb[0].mxu0 %v266
    %v302 = vpop.f32.mrb[0].mxu0
    %v303 = vadd.f32 %v251, %v302
    %v304 = vpop.f32.mrb[0].mxu0
    %v305 = vpop.f32.mrb[0].mxu0
    %v306 = vpop.f32.mrb[0].mxu0
    %307 = vdwg.mxu0
    %v309 = vsel %vm108, %v239, 0
    %v312 = vsel %vm108, %v240, 0
    %314 = vmatprep.subr.bf16.mxu0 0
    %315 = vmatpush1.bf16.msra.mxu0 %v261
    %316 = vmatprep.subr.bf16.mxu0 0
    %317 = vmatpush1.bf16.msra.mxu0 %v262
    %318 = vmatprep.subr.bf16.mxu0 0
    %319 = vmatpush1.bf16.msra.mxu0 0
    %320 = vmatprep.subr.bf16.mxu0 0
    %321 = vmatpush1.bf16.msra.mxu0 0
    %322 = vmatprep.subr.bf16.mxu0 0
    %323 = vmatpush1.bf16.msra.mxu0 0
    %324 = vmatprep.subr.bf16.mxu0 0
    %325 = vmatpush1.bf16.msra.mxu0 0
    %326 = vmatprep.subr.bf16.mxu0 0
    %327 = vmatpush1.bf16.msra.mxu0 0
    %328 = vmatprep.subr.bf16.mxu0 0
    %329 = vmatpush1.bf16.msra.mxu0 0
    %330 = vmatprep.subr.bf16.mxu0 0
    %331 = vmatpush1.bf16.msra.mxu0 0
    %332 = vmatprep.subr.bf16.mxu0 0
    %333 = vmatpush1.bf16.msra.mxu0 0
    %334 = vmatprep.subr.bf16.mxu0 0
    %335 = vmatpush1.bf16.msra.mxu0 0
    %336 = vmatprep.subr.bf16.mxu0 0
    %337 = vmatpush1.bf16.msra.mxu0 0
    %338 = vmatprep.subr.bf16.mxu0 0
    %339 = vmatpush1.bf16.msra.mxu0 0
    %340 = vmatprep.subr.bf16.mxu0 0
    %341 = vmatpush1.bf16.msra.mxu0 0
    %342 = vmatprep.subr.bf16.mxu0 0
    %343 = vmatpush1.bf16.msra.mxu0 0
    %344 = vmatprep.subr.bf16.mxu0 0
    %345 = vmatpush1.bf16.msra.mxu0 0
    %346 = vmatprep.mubr.bf16.mxu0 0
    %347 = vmatmul.mubr.bf16.gmra.mrb[0].mxu0 %v309
    %v348 = vpop.f32.mrb[0].mxu0
    %v349 = vadd.f32 %v251, %v348
    %v350 = vpop.f32.mrb[0].mxu0
    %v351 = vpop.f32.mrb[0].mxu0
    %v352 = vadd.f32 %v251, %v351
    %v353 = vpop.f32.mrb[0].mxu0
    %354 = vmatprep.mubr.bf16.mxu0 0
    %355 = vmatmul.mubr.bf16.gmra.mrb[0].mxu0 %v312
    %v356 = vpop.f32.mrb[0].mxu0
    %v357 = vadd.f32 %v251, %v356
    %v358 = vpop.f32.mrb[0].mxu0
    %v359 = vpop.f32.mrb[0].mxu0
    %v360 = vadd.f32 %v251, %v359
    %v361 = vpop.f32.mrb[0].mxu0
    %362 = vdwg.mxu0
    %v364 = vrot.slane %v303, 4
    %v366 = vld [vmem:[%s7] sm:$0xf]
    %v367 = vld [vmem:[%s7 + $0x4] sm:$0xf]
    %v368 = vld [vmem:[%s8] sm:$0xf]
    %v369 = vld [vmem:[%s8 + $0x4] sm:$0xf]
    %v370 = vpack.c.bf16 %v303, %v303
    %v371 = vpack.c.bf16 %v364, %v364
    %v372 = vpack.c.bf16 %v352, %v349
    %v373 = vpack.c.bf16 %v360, %v357
    %v376 = vunpack.c.l.b16 %v368
    %v377 = vunpack.c.l.b16 %v369
    %v378 = vpack.c.b16 %v377, %v376
    %vm379 = vcmask 130048
    %v381 = vsel %vm379, %v378, 0
    %383 = vmatprep.subr.bf16.mxu0 0
    %384 = vmatpush1.bf16.msra.mxu0 %v372
    %385 = vmatprep.subr.bf16.mxu0 0
    %386 = vmatpush1.bf16.msra.mxu0 0
    %387 = vmatprep.subr.bf16.mxu0 0
    %388 = vmatpush1.bf16.msra.mxu0 0
    %389 = vmatprep.subr.bf16.mxu0 0
    %390 = vmatpush1.bf16.msra.mxu0 0
    %391 = vmatprep.subr.bf16.mxu0 0
    %392 = vmatpush1.bf16.msra.mxu0 0
    %393 = vmatprep.subr.bf16.mxu0 0
    %394 = vmatpush1.bf16.msra.mxu0 0
    %395 = vmatprep.subr.bf16.mxu0 0
    %396 = vmatpush1.bf16.msra.mxu0 0
    %397 = vmatprep.subr.bf16.mxu0 0
    %398 = vmatpush1.bf16.msra.mxu0 0
    %399 = vmatprep.subr.bf16.mxu0 0
    %400 = vmatpush1.bf16.msra.mxu0 0
    %401 = vmatprep.subr.bf16.mxu0 0
    %402 = vmatpush1.bf16.msra.mxu0 0
    %403 = vmatprep.subr.bf16.mxu0 0
    %404 = vmatpush1.bf16.msra.mxu0 0
    %405 = vmatprep.subr.bf16.mxu0 0
    %406 = vmatpush1.bf16.msra.mxu0 0
    %407 = vmatprep.subr.bf16.mxu0 0
    %408 = vmatpush1.bf16.msra.mxu0 0
    %409 = vmatprep.subr.bf16.mxu0 0
    %410 = vmatpush1.bf16.msra.mxu0 0
    %411 = vmatprep.subr.bf16.mxu0 0
    %412 = vmatpush1.bf16.msra.mxu0 0
    %413 = vmatprep.subr.bf16.mxu0 0
    %414 = vmatpush1.bf16.msra.mxu0 0
    %415 = vmatprep.mubr.bf16.mxu0 0
    %416 = vmatmul.mubr.bf16.gmra.mrb[0].mxu0 %v381
    %v417 = vpop.f32.mrb[0].mxu0
    %v418 = vadd.f32 0.0, %v417
    %v419 = vpop.f32.mrb[0].mxu0
    %v420 = vpop.f32.mrb[0].mxu0
    %v421 = vadd.f32 0.0, %v420
    %v422 = vpop.f32.mrb[0].mxu0
    %423 = vdwg.mxu0
    %424 = vmatprep.subr.bf16.mxu0 0
    %425 = vmatpush1.bf16.msra.mxu0 %v373
    %426 = vmatprep.subr.bf16.mxu0 0
    %427 = vmatpush1.bf16.msra.mxu0 0
    %428 = vmatprep.subr.bf16.mxu0 0
    %429 = vmatpush1.bf16.msra.mxu0 0
    %430 = vmatprep.subr.bf16.mxu0 0
    %431 = vmatpush1.bf16.msra.mxu0 0
    %432 = vmatprep.subr.bf16.mxu0 0
    %433 = vmatpush1.bf16.msra.mxu0 0
    %434 = vmatprep.subr.bf16.mxu0 0
    %435 = vmatpush1.bf16.msra.mxu0 0
    %436 = vmatprep.subr.bf16.mxu0 0
    %437 = vmatpush1.bf16.msra.mxu0 0
    %438 = vmatprep.subr.bf16.mxu0 0
    %439 = vmatpush1.bf16.msra.mxu0 0
    %440 = vmatprep.subr.bf16.mxu0 0
    %441 = vmatpush1.bf16.msra.mxu0 0
    %442 = vmatprep.subr.bf16.mxu0 0
    %443 = vmatpush1.bf16.msra.mxu0 0
    %444 = vmatprep.subr.bf16.mxu0 0
    %445 = vmatpush1.bf16.msra.mxu0 0
    %446 = vmatprep.subr.bf16.mxu0 0
    %447 = vmatpush1.bf16.msra.mxu0 0
    %448 = vmatprep.subr.bf16.mxu0 0
    %449 = vmatpush1.bf16.msra.mxu0 0
    %450 = vmatprep.subr.bf16.mxu0 0
    %451 = vmatpush1.bf16.msra.mxu0 0
    %452 = vmatprep.subr.bf16.mxu0 0
    %453 = vmatpush1.bf16.msra.mxu0 0
    %454 = vmatprep.subr.bf16.mxu0 0
    %455 = vmatpush1.bf16.msra.mxu0 0
    %456 = vmatprep.mubr.bf16.mxu0 0
    %457 = vmatmul.mubr.bf16.gmra.mrb[0].mxu0 %v381
    %v458 = vpop.f32.mrb[0].mxu0
    %v459 = vadd.f32 0.0, %v458
    %v460 = vpop.f32.mrb[0].mxu0
    %v461 = vpop.f32.mrb[0].mxu0
    %v462 = vadd.f32 0.0, %v461
    %v463 = vpop.f32.mrb[0].mxu0
    %464 = vdwg.mxu0
    %v467 = vunpack.c.l.b16 %v366
    %v468 = vunpack.c.l.b16 %v367
    %v469 = vpack.c.b16 %v468, %v467
    %vm470 = vcmask 31744
    %v472 = vsel %vm470, %v469, 0
    %vm474 = vcmask 1041408
    %v476 = vsel %vm474, %v370, 0
    %478 = vmatprep.subr.bf16.mxu0 0
    %479 = vmatpush1.bf16.msra.mxu0 %v476
    %480 = vmatprep.subr.bf16.mxu0 0
    %481 = vmatpush1.bf16.msra.mxu0 0
    %482 = vmatprep.subr.bf16.mxu0 0
    %483 = vmatpush1.bf16.msra.mxu0 0
    %484 = vmatprep.subr.bf16.mxu0 0
    %485 = vmatpush1.bf16.msra.mxu0 0
    %486 = vmatprep.subr.bf16.mxu0 0
    %487 = vmatpush1.bf16.msra.mxu0 0
    %488 = vmatprep.subr.bf16.mxu0 0
    %489 = vmatpush1.bf16.msra.mxu0 0
    %490 = vmatprep.subr.bf16.mxu0 0
    %491 = vmatpush1.bf16.msra.mxu0 0
    %492 = vmatprep.subr.bf16.mxu0 0
    %493 = vmatpush1.bf16.msra.mxu0 0
    %494 = vmatprep.subr.bf16.mxu0 0
    %495 = vmatpush1.bf16.msra.mxu0 0
    %496 = vmatprep.subr.bf16.mxu0 0
    %497 = vmatpush1.bf16.msra.mxu0 0
    %498 = vmatprep.subr.bf16.mxu0 0
    %499 = vmatpush1.bf16.msra.mxu0 0
    %500 = vmatprep.subr.bf16.mxu0 0
    %501 = vmatpush1.bf16.msra.mxu0 0
    %502 = vmatprep.subr.bf16.mxu0 0
    %503 = vmatpush1.bf16.msra.mxu0 0
    %504 = vmatprep.subr.bf16.mxu0 0
    %505 = vmatpush1.bf16.msra.mxu0 0
    %506 = vmatprep.subr.bf16.mxu0 0
    %507 = vmatpush1.bf16.msra.mxu0 0
    %508 = vmatprep.subr.bf16.mxu0 0
    %509 = vmatpush1.bf16.msra.mxu0 0
    %510 = vmatprep.mubr.bf16.mxu0 0
    %511 = vmatmul.mubr.bf16.gmra.mrb[0].mxu0 %v472
    %v512 = vpop.f32.mrb[0].mxu0
    %v513 = vadd.f32 %v418, %v512
    %v514 = vpop.f32.mrb[0].mxu0
    %v515 = vpop.f32.mrb[0].mxu0
    %v516 = vadd.f32 %v421, %v515
    %v517 = vpop.f32.mrb[0].mxu0
    %518 = vdwg.mxu0
    %v520 = vsel %vm474, %v371, 0
    %522 = vmatprep.subr.bf16.mxu0 0
    %523 = vmatpush1.bf16.msra.mxu0 %v520
    %524 = vmatprep.subr.bf16.mxu0 0
    %525 = vmatpush1.bf16.msra.mxu0 0
    %526 = vmatprep.subr.bf16.mxu0 0
    %527 = vmatpush1.bf16.msra.mxu0 0
    %528 = vmatprep.subr.bf16.mxu0 0
    %529 = vmatpush1.bf16.msra.mxu0 0
    %530 = vmatprep.subr.bf16.mxu0 0
    %531 = vmatpush1.bf16.msra.mxu0 0
    %532 = vmatprep.subr.bf16.mxu0 0
    %533 = vmatpush1.bf16.msra.mxu0 0
    %534 = vmatprep.subr.bf16.mxu0 0
    %535 = vmatpush1.bf16.msra.mxu0 0
    %536 = vmatprep.subr.bf16.mxu0 0
    %537 = vmatpush1.bf16.msra.mxu0 0
    %538 = vmatprep.subr.bf16.mxu0 0
    %539 = vmatpush1.bf16.msra.mxu0 0
    %540 = vmatprep.subr.bf16.mxu0 0
    %541 = vmatpush1.bf16.msra.mxu0 0
    %542 = vmatprep.subr.bf16.mxu0 0
    %543 = vmatpush1.bf16.msra.mxu0 0
    %544 = vmatprep.subr.bf16.mxu0 0
    %545 = vmatpush1.bf16.msra.mxu0 0
    %546 = vmatprep.subr.bf16.mxu0 0
    %547 = vmatpush1.bf16.msra.mxu0 0
    %548 = vmatprep.subr.bf16.mxu0 0
    %549 = vmatpush1.bf16.msra.mxu0 0
    %550 = vmatprep.subr.bf16.mxu0 0
    %551 = vmatpush1.bf16.msra.mxu0 0
    %552 = vmatprep.subr.bf16.mxu0 0
    %553 = vmatpush1.bf16.msra.mxu0 0
    %554 = vmatprep.mubr.bf16.mxu0 0
    %555 = vmatmul.mubr.bf16.gmra.mrb[0].mxu0 %v472
    %v556 = vpop.f32.mrb[0].mxu0
    %v557 = vadd.f32 %v459, %v556
    %v558 = vpop.f32.mrb[0].mxu0
    %v559 = vpop.f32.mrb[0].mxu0
    %v560 = vadd.f32 %v462, %v559
    %v561 = vpop.f32.mrb[0].mxu0
    %562 = vdwg.mxu0
    %v563 = vld [vmem:[%s9] sm:$0xff]
    %v564 = vld [vmem:[%s9 + $0x8] sm:$0xff]
    %566 = vset.pattern.permute.xlu0 0
    %567 = vperm.xlu0 %566, %v563
    %v568 = vpop.permute.xlu0 %567
    %571 = vset.pattern.permute.xlu0 0
    %572 = vperm.xlu0 %571, %v564
    %v573 = vpop.permute.xlu0 %572
    %v575 = vadd.f32 %v513, %v568
    %v576 = vadd.f32 %v516, %v573
    %v577 = vadd.f32 %v557, %v568
    %v578 = vadd.f32 %v560, %v573
    %579 = vst.msk [vmem:[#allocation2] sm:$0xff] %vm470, %v575
    %580 = vst.msk [vmem:[#allocation2 + $0x8] sm:$0xff] %vm470, %v576
    %581 = vst.msk [vmem:[#allocation2 + $0x10] sm:$0xff] %vm470, %v577
    %582 = vst.msk [vmem:[#allocation2 + $0x18] sm:$0xff] %vm470, %v578
    %v583 = vld [vmem:[%s10] sm:$0xff]
    %v584 = vld [vmem:[%s10 + $0x8] sm:$0xff]
    %v585 = vld [vmem:[%s10 + $0x10] sm:$0xff]
    %v586 = vld [vmem:[%s10 + $0x18] sm:$0xff]
    %v587 = vsub.f32 %v575, %v583
    %v588 = vsub.f32 %v576, %v584
    %v589 = vsub.f32 %v577, %v585
    %v590 = vsub.f32 %v578, %v586
    %v591 = vmul.f32 %v587, %v587
    %v592 = vmul.f32 %v588, %v588
    %v593 = vmul.f32 %v589, %v589
    %v594 = vmul.f32 %v590, %v590
    %v595 = vsel %vm470, %v591, 0.0
    %596 = vadd.xlane.f32.xlu0 %v595
    %v597 = vpop.xlane.xlu0 %596
    %v598 = vsel %vm470, %v592, 0.0
    %599 = vadd.xlane.f32.xlu0 %v598
    %v600 = vpop.xlane.xlu0 %599
    %v601 = vsel %vm470, %v593, 0.0
    %602 = vadd.xlane.f32.xlu0 %v601
    %v603 = vpop.xlane.xlu0 %602
    %v604 = vsel %vm470, %v594, 0.0
    %605 = vadd.xlane.f32.xlu0 %v604
    %v606 = vpop.xlane.xlu0 %605
    %v607 = vrcp.pop 4.0
    %v608 = vmul.f32 %v597, %v607
    %v609 = vmul.f32 %v600, %v607
    %v610 = vmul.f32 %v603, %v607
    %v611 = vmul.f32 %v606, %v607
    %v612 = vld [vmem:[%s11] sm:$0xff]
    %v613 = vld [vmem:[%s11 + $0x8] sm:$0xff]
    %v614 = vld [vmem:[%s11 + $0x10] sm:$0xff]
    %v615 = vld [vmem:[%s11 + $0x18] sm:$0xff]
    %v616 = vmul.f32 %v608, %v612
    %v617 = vmul.f32 %v609, %v613
    %v618 = vmul.f32 %v610, %v614
    %v619 = vmul.f32 %v611, %v615
    %vm620 = vcmask 7168
    %v621 = vsel %vm620, %v616, 0.0
    %v622 = vsel %vm620, %v617, 0.0
    %v623 = vadd.f32 %v621, %v622
    %v624 = vrot.slane %v623, 4
    %v625 = vadd.f32 %v623, %v624
    %v626 = vrot.slane %v625, 2
    %v627 = vadd.f32 %v625, %v626
    %v628 = vrot.slane %v627, 1
    %v629 = vadd.f32 %v627, %v628
    %v630 = vsel %vm620, %v618, 0.0
    %v631 = vsel %vm620, %v619, 0.0
    %v632 = vadd.f32 %v630, %v631
    %v633 = vrot.slane %v632, 4
    %v634 = vadd.f32 %v632, %v633
    %v635 = vrot.slane %v634, 2
    %v636 = vadd.f32 %v634, %v635
    %v637 = vrot.slane %v636, 1
    %v638 = vadd.f32 %v636, %v637
    %v639 = vsel %vm620, %v629, 0.0
    %v640 = vsel %vm620, %v638, 0.0
    %v641 = vadd.f32 %v639, %v640
    %vm642 = vcmask 0
    %643 = vst.msk [vmem:[#allocation4] sm:$0x1] %vm642, %v641
    // Predicated region
    $region50: #{_lambda_.9} parent=1 // pred_check
      _
    $region51: #{_lambda_.9} parent=1 // pred_check_branch
      %645 = sbr.rel (0) target = $region53
    $region52: #{_lambda_.9} parent=1 // pred_region
      %s647 = ssub.s32 512, 512
      %648 = vsyncadd [#allocation3], %s647
      %s649 = sshll.u32 [#allocation2], 4
      %s650 = int_to_ptr.vmem [resolvable:$true] %s649
      %655 = dma.vmem_to_hbm [thread:$0]  %s650, 512, %s12, [#allocation3], 128, 128, 8
    $region53: #{_lambda_.9} parent=1 // pred_fallthru
      _
    // Predicated region
    $region54: #{_lambda_.9} parent=1 // pred_check
      _
    $region55: #{_lambda_.9} parent=1 // pred_check_branch
      %657 = sbr.rel (0) target = $region57
    $region56: #{_lambda_.9} parent=1 // pred_region
      %s659 = ssub.s32 16, 16
      %660 = vsyncadd [#allocation5], %s659
      %s662 = sshll.u32 [#allocation4], 4
      %s663 = int_to_ptr.vmem [resolvable:$true] %s662
      %665 = dma.vmem_to_hbm [thread:$0]  %s663, 16, %s13, [#allocation5]
    $region57: #{_lambda_.9} parent=1 // pred_fallthru
      _
    // Predicated region
    $region58: #{_lambda_.9} parent=1 // pred_check
      _
    $region59: #{_lambda_.9} parent=1 // pred_check_branch
      %667 = sbr.rel (0) target = $region61
    $region60: #{_lambda_.9} parent=1 // pred_region
      %668 = dma.done [#allocation3], 512
    $region61: #{_lambda_.9} parent=1 // pred_fallthru
      _
    // Predicated region
    $region62: #{_lambda_.9} parent=1 // pred_check
      _
    $region63: #{_lambda_.9} parent=1 // pred_check_branch
      %670 = sbr.rel (0) target = $region65
    $region64: #{_lambda_.9} parent=1 // pred_region
      %671 = dma.done [#allocation5], 16
    $region65: #{_lambda_.9} parent=1 // pred_fallthru
      _
    %672 = vsyncpa [#allocation3], 1
    %673 = vsyncpa [#allocation5], 1

// kernel: _lambda_.6
$region0: #{_lambda_.6}
  #allocation0 [shape = 'u32[]', space=smem, size = 0x4, offset = 0x4, fixed_abs, tag = 'smem constant byte address 0x4 - core index']
  #allocation1 [shape = 'u32[144,128]{1,0:T(1,128)}', space=vmem, size = 0x12000, scoped, tag = 'internal scratch']
  %s0 = inlined_call_operand.vmem [shape: f32[24,32], index: 0, kind: input, shape index: {}]
  %s1 = inlined_call_operand.vmem [shape: bf16[1,32,32], index: 1, kind: input, shape index: {}]
  %s2 = inlined_call_operand.vmem [shape: bf16[1,32,32], index: 2, kind: input, shape index: {}]
  %s3 = inlined_call_operand.vmem [shape: bf16[1,32,32], index: 3, kind: input, shape index: {}]
  %s4 = inlined_call_operand.vmem [shape: f32[1,1,32], index: 4, kind: input, shape index: {}]
  %s5 = inlined_call_operand.vmem [shape: f32[1,1,32], index: 5, kind: input, shape index: {}]
  %s6 = inlined_call_operand.vmem [shape: f32[1,1,32], index: 6, kind: input, shape index: {}]
  %s7 = inlined_call_operand.vmem [shape: bf16[1,32,32], index: 7, kind: input, shape index: {}]
  %s8 = inlined_call_operand.vmem [shape: f32[1,1,32], index: 8, kind: input, shape index: {}]
  %s9 = inlined_call_operand.vmem [shape: f32[1,1,32], index: 9, kind: input, shape index: {}]
  %s10 = inlined_call_operand.vmem [shape: f32[1,1,32], index: 10, kind: input, shape index: {}]
  %s11 = inlined_call_operand.vmem [shape: f32[1,1,32], index: 11, kind: input, shape index: {}]
  %s12 = inlined_call_operand.vmem [shape: f32[1,1,32], index: 12, kind: input, shape index: {}]
  %s13 = inlined_call_operand.vmem [shape: bf16[1,32,2048], index: 13, kind: input, shape index: {}]
  %s14 = inlined_call_operand.vmem [shape: f32[1,1,2048], index: 14, kind: input, shape index: {}]
  %s15 = inlined_call_operand.vmem [shape: bf16[1,2048,32], index: 15, kind: input, shape index: {}]
  %s16 = inlined_call_operand.vmem [shape: f32[1,1,32], index: 16, kind: input, shape index: {}]
  %s17 = inlined_call_operand.vmem [shape: f32[24,32], index: 17, kind: output, shape index: {}]
  %s18 = sld [smem:[#allocation0]]
  $region78: #{_lambda_.6} parent=0
    _
  %s20 = ssub.s32 1, %s18
  %s21 = scalar_select 0, %s20, %s18
  // Predicated region
  $region2: #{_lambda_.6} parent=0 // pred_check
    _
  $region3: #{_lambda_.6} parent=0 // pred_check_branch
    %23 = sbr.rel (0) target = $region5
  $region4: #{_lambda_.6} parent=0 // pred_region
    _
  $region5: #{_lambda_.6} parent=0 // pred_fallthru
    _
  // Predicated region
  $region6: #{_lambda_.6} parent=0 // pred_check
    _
  $region7: #{_lambda_.6} parent=0 // pred_check_branch
    %25 = sbr.rel (0) target = $region9
  $region8: #{_lambda_.6} parent=0 // pred_region
    _
  $region9: #{_lambda_.6} parent=0 // pred_fallthru
    _
  // Predicated region
  $region10: #{_lambda_.6} parent=0 // pred_check
    _
  $region11: #{_lambda_.6} parent=0 // pred_check_branch
    %27 = sbr.rel (0) target = $region13
  $region12: #{_lambda_.6} parent=0 // pred_region
    _
  $region13: #{_lambda_.6} parent=0 // pred_fallthru
    _
  // Predicated region
  $region14: #{_lambda_.6} parent=0 // pred_check
    _
  $region15: #{_lambda_.6} parent=0 // pred_check_branch
    %29 = sbr.rel (0) target = $region17
  $region16: #{_lambda_.6} parent=0 // pred_region
    _
  $region17: #{_lambda_.6} parent=0 // pred_fallthru
    _
  // Predicated region
  $region18: #{_lambda_.6} parent=0 // pred_check
    _
  $region19: #{_lambda_.6} parent=0 // pred_check_branch
    %31 = sbr.rel (0) target = $region21
  $region20: #{_lambda_.6} parent=0 // pred_region
    _
  $region21: #{_lambda_.6} parent=0 // pred_fallthru
    _
  // Predicated region
  $region22: #{_lambda_.6} parent=0 // pred_check
    _
  $region23: #{_lambda_.6} parent=0 // pred_check_branch
    %33 = sbr.rel (0) target = $region25
  $region24: #{_lambda_.6} parent=0 // pred_region
    _
  $region25: #{_lambda_.6} parent=0 // pred_fallthru
    _
  // Predicated region
  $region26: #{_lambda_.6} parent=0 // pred_check
    _
  $region27: #{_lambda_.6} parent=0 // pred_check_branch
    %35 = sbr.rel (0) target = $region29
  $region28: #{_lambda_.6} parent=0 // pred_region
    _
  $region29: #{_lambda_.6} parent=0 // pred_fallthru
    _
  // Predicated region
  $region30: #{_lambda_.6} parent=0 // pred_check
    _
  $region31: #{_lambda_.6} parent=0 // pred_check_branch
    %37 = sbr.rel (0) target = $region33
  $region32: #{_lambda_.6} parent=0 // pred_region
    _
  $region33: #{_lambda_.6} parent=0 // pred_fallthru
    _
  // Predicated region
  $region34: #{_lambda_.6} parent=0 // pred_check
    _
  $region35: #{_lambda_.6} parent=0 // pred_check_branch
    %39 = sbr.rel (0) target = $region37
  $region36: #{_lambda_.6} parent=0 // pred_region
    _
  $region37: #{_lambda_.6} parent=0 // pred_fallthru
    _
  // Predicated region
  $region38: #{_lambda_.6} parent=0 // pred_check
    _
  $region39: #{_lambda_.6} parent=0 // pred_check_branch
    %41 = sbr.rel (0) target = $region41
  $region40: #{_lambda_.6} parent=0 // pred_region
    _
  $region41: #{_lambda_.6} parent=0 // pred_fallthru
    _
  // Predicated region
  $region42: #{_lambda_.6} parent=0 // pred_check
    _
  $region43: #{_lambda_.6} parent=0 // pred_check_branch
    %43 = sbr.rel (0) target = $region45
  $region44: #{_lambda_.6} parent=0 // pred_region
    _
  $region45: #{_lambda_.6} parent=0 // pred_fallthru
    _
  // Predicated region
  $region46: #{_lambda_.6} parent=0 // pred_check
    _
  $region47: #{_lambda_.6} parent=0 // pred_check_branch
    %45 = sbr.rel (0) target = $region49
  $region48: #{_lambda_.6} parent=0 // pred_region
    _
  $region49: #{_lambda_.6} parent=0 // pred_fallthru
    _
  // Predicated region
  $region50: #{_lambda_.6} parent=0 // pred_check
    _
  $region51: #{_lambda_.6} parent=0 // pred_check_branch
    %47 = sbr.rel (0) target = $region53
  $region52: #{_lambda_.6} parent=0 // pred_region
    _
  $region53: #{_lambda_.6} parent=0 // pred_fallthru
    _
  // Predicated region
  $region54: #{_lambda_.6} parent=0 // pred_check
    _
  $region55: #{_lambda_.6} parent=0 // pred_check_branch
    %49 = sbr.rel (0) target = $region57
  $region56: #{_lambda_.6} parent=0 // pred_region
    _
  $region57: #{_lambda_.6} parent=0 // pred_fallthru
    _
  // Predicated region
  $region58: #{_lambda_.6} parent=0 // pred_check
    _
  $region59: #{_lambda_.6} parent=0 // pred_check_branch
    %51 = sbr.rel (0) target = $region61
  $region60: #{_lambda_.6} parent=0 // pred_region
    _
  $region61: #{_lambda_.6} parent=0 // pred_fallthru
    _
  // Predicated region
  $region62: #{_lambda_.6} parent=0 // pred_check
    _
  $region63: #{_lambda_.6} parent=0 // pred_check_branch
    %53 = sbr.rel (0) target = $region65
  $region64: #{_lambda_.6} parent=0 // pred_region
    _
  $region65: #{_lambda_.6} parent=0 // pred_fallthru
    _
  // Predicated region
  $region66: #{_lambda_.6} parent=0 // pred_check
    _
  $region67: #{_lambda_.6} parent=0 // pred_check_branch
    %55 = sbr.rel (0) target = $region69
  $region68: #{_lambda_.6} parent=0 // pred_region
    _
  $region69: #{_lambda_.6} parent=0 // pred_fallthru
    _
  %v57 = vld [vmem:[%s0] sm:$0xff]
  %v58 = vld [vmem:[%s0 + $0x8] sm:$0xff]
  %v59 = vld [vmem:[%s0 + $0x10] sm:$0xff]
  %v60 = vld [vmem:[%s9] sm:$0x1]
  %v61 = vld [vmem:[%s10] sm:$0x1]
  %vm62 = vcmask 261120
  %v63 = vsel %vm62, %v57, 0.0
  %64 = vadd.xlane.f32.xlu0 %v63
  %v65 = vpop.xlane.xlu0 %64
  %v66 = vsel %vm62, %v58, 0.0
  %67 = vadd.xlane.f32.xlu0 %v66
  %v68 = vpop.xlane.xlu0 %67
  %v69 = vsel %vm62, %v59, 0.0
  %70 = vadd.xlane.f32.xlu0 %v69
  %v71 = vpop.xlane.xlu0 %70
  %v72 = vrcp.pop 32.0
  %v73 = vmul.f32 %v65, %v72
  %v74 = vmul.f32 %v68, %v72
  %v75 = vmul.f32 %v71, %v72
  %v76 = vsub.f32 %v57, %v73
  %v77 = vsub.f32 %v58, %v74
  %v78 = vsub.f32 %v59, %v75
  %v79 = vmul.f32 %v76, %v76
  %v80 = vmul.f32 %v77, %v77
  %v81 = vmul.f32 %v78, %v78
  %v82 = vsel %vm62, %v79, 0.0
  %83 = vadd.xlane.f32.xlu0 %v82
  %v84 = vpop.xlane.xlu0 %83
  %v85 = vsel %vm62, %v80, 0.0
  %86 = vadd.xlane.f32.xlu0 %v85
  %v87 = vpop.xlane.xlu0 %86
  %v88 = vsel %vm62, %v81, 0.0
  %89 = vadd.xlane.f32.xlu0 %v88
  %v90 = vpop.xlane.xlu0 %89
  %v91 = vmul.f32 %v84, %v72
  %v92 = vmul.f32 %v87, %v72
  %v93 = vmul.f32 %v90, %v72
  %v94 = vadd.f32 %v91, 1e-05
  %v95 = vadd.f32 %v92, 1e-05
  %v96 = vadd.f32 %v93, 1e-05
  %v97 = vrsqrt.pop %v94
  %v98 = vrsqrt.pop %v95
  %v99 = vrsqrt.pop %v96
  %v100 = vmul.f32 %v76, %v97
  %v101 = vmul.f32 %v77, %v98
  %v102 = vmul.f32 %v78, %v99
  %v104 = vlaneseq
  %v105 = vshrl.u32 %v104, 7
  %v106 = vsub.s32 0, %v105
  %v107 = vrot.slane %v60, %v106
  %v109 = vmul.f32 %v100, %v107
  %v110 = vmul.f32 %v101, %v107
  %v111 = vmul.f32 %v102, %v107
  %v113 = vlaneseq
  %v114 = vshrl.u32 %v113, 7
  %v115 = vsub.s32 0, %v114
  %v116 = vrot.slane %v61, %v115
  %v118 = vadd.f32 %v109, %v116
  %v119 = vadd.f32 %v110, %v116
  %v120 = vadd.f32 %v111, %v116
  %v121 = vpack.c.bf16 %v119, %v118
  %v122 = vpack.c.bf16 %v120, %v120
  %v123 = vld [vmem:[%s1] sm:$0xf]
  %v124 = vld [vmem:[%s1 + $0x4] sm:$0xf]
  %v125 = vld [vmem:[%s1 + $0x8] sm:$0xf]
  %v126 = vld [vmem:[%s1 + $0xc] sm:$0xf]
  %v127 = vld [vmem:[%s4] sm:$0x1]
  %v129 = vlaneseq
  %v130 = vshrl.u32 %v129, 7
  %v131 = vsub.s32 0, %v130
  %v132 = vrot.slane %v127, %v131
  %v138 = vunpack.c.l.b16 %v123
  %v139 = vunpack.c.l.b16 %v124
  %v140 = vunpack.c.l.b16 %v125
  %v141 = vunpack.c.l.b16 %v126
  %v142 = vpack.c.b16 %v139, %v138
  %v143 = vpack.c.b16 %v141, %v140
  %v147 = vsel %vm62, %v121, 0
  %v150 = vsel %vm62, %v122, 0
  %152 = vmatprep.subr.bf16.mxu0 0
  %153 = vmatpush1.bf16.msra.mxu0 %v142
  %154 = vmatprep.subr.bf16.mxu0 0
  %155 = vmatpush1.bf16.msra.mxu0 %v143
  %156 = vmatprep.subr.bf16.mxu0 0
  %157 = vmatpush1.bf16.msra.mxu0 0
  %158 = vmatprep.subr.bf16.mxu0 0
  %159 = vmatpush1.bf16.msra.mxu0 0
  %160 = vmatprep.subr.bf16.mxu0 0
  %161 = vmatpush1.bf16.msra.mxu0 0
  %162 = vmatprep.subr.bf16.mxu0 0
  %163 = vmatpush1.bf16.msra.mxu0 0
  %164 = vmatprep.subr.bf16.mxu0 0
  %165 = vmatpush1.bf16.msra.mxu0 0
  %166 = vmatprep.subr.bf16.mxu0 0
  %167 = vmatpush1.bf16.msra.mxu0 0
  %168 = vmatprep.subr.bf16.mxu0 0
  %169 = vmatpush1.bf16.msra.mxu0 0
  %170 = vmatprep.subr.bf16.mxu0 0
  %171 = vmatpush1.bf16.msra.mxu0 0
  %172 = vmatprep.subr.bf16.mxu0 0
  %173 = vmatpush1.bf16.msra.mxu0 0
  %174 = vmatprep.subr.bf16.mxu0 0
  %175 = vmatpush1.bf16.msra.mxu0 0
  %176 = vmatprep.subr.bf16.mxu0 0
  %177 = vmatpush1.bf16.msra.mxu0 0
  %178 = vmatprep.subr.bf16.mxu0 0
  %179 = vmatpush1.bf16.msra.mxu0 0
  %180 = vmatprep.subr.bf16.mxu0 0
  %181 = vmatpush1.bf16.msra.mxu0 0
  %182 = vmatprep.subr.bf16.mxu0 0
  %183 = vmatpush1.bf16.msra.mxu0 0
  %184 = vmatprep.mubr.bf16.mxu0 0
  %185 = vmatmul.mubr.bf16.gmra.mrb[0].mxu0 %v147
  %v186 = vpop.f32.mrb[0].mxu0
  %v187 = vadd.f32 %v132, %v186
  %v188 = vpop.f32.mrb[0].mxu0
  %v189 = vpop.f32.mrb[0].mxu0
  %v190 = vadd.f32 %v132, %v189
  %v191 = vpop.f32.mrb[0].mxu0
  %192 = vmatprep.mubr.bf16.mxu0 0
  %193 = vmatmul.mubr.bf16.gmra.mrb[0].mxu0 %v150
  %v194 = vpop.f32.mrb[0].mxu0
  %v195 = vadd.f32 %v132, %v194
  %v196 = vpop.f32.mrb[0].mxu0
  %v197 = vpop.f32.mrb[0].mxu0
  %v198 = vpop.f32.mrb[0].mxu0
  %199 = vdwg.mxu0
  %v200 = vld [vmem:[%s2] sm:$0xf]
  %v201 = vld [vmem:[%s2 + $0x4] sm:$0xf]
  %v202 = vld [vmem:[%s2 + $0x8] sm:$0xf]
  %v203 = vld [vmem:[%s2 + $0xc] sm:$0xf]
  %v204 = vld [vmem:[%s5] sm:$0x1]
  %v206 = vlaneseq
  %v207 = vshrl.u32 %v206, 7
  %v208 = vsub.s32 0, %v207
  %v209 = vrot.slane %v204, %v208
  %v215 = vunpack.c.l.b16 %v200
  %v216 = vunpack.c.l.b16 %v201
  %v217 = vunpack.c.l.b16 %v202
  %v218 = vunpack.c.l.b16 %v203
  %v219 = vpack.c.b16 %v216, %v215
  %v220 = vpack.c.b16 %v218, %v217
  %223 = vmatprep.subr.bf16.mxu0 0
  %224 = vmatpush1.bf16.msra.mxu0 %v219
  %225 = vmatprep.subr.bf16.mxu0 0
  %226 = vmatpush1.bf16.msra.mxu0 %v220
  %227 = vmatprep.subr.bf16.mxu0 0
  %228 = vmatpush1.bf16.msra.mxu0 0
  %229 = vmatprep.subr.bf16.mxu0 0
  %230 = vmatpush1.bf16.msra.mxu0 0
  %231 = vmatprep.subr.bf16.mxu0 0
  %232 = vmatpush1.bf16.msra.mxu0 0
  %233 = vmatprep.subr.bf16.mxu0 0
  %234 = vmatpush1.bf16.msra.mxu0 0
  %235 = vmatprep.subr.bf16.mxu0 0
  %236 = vmatpush1.bf16.msra.mxu0 0
  %237 = vmatprep.subr.bf16.mxu0 0
  %238 = vmatpush1.bf16.msra.mxu0 0
  %239 = vmatprep.subr.bf16.mxu0 0
  %240 = vmatpush1.bf16.msra.mxu0 0
  %241 = vmatprep.subr.bf16.mxu0 0
  %242 = vmatpush1.bf16.msra.mxu0 0
  %243 = vmatprep.subr.bf16.mxu0 0
  %244 = vmatpush1.bf16.msra.mxu0 0
  %245 = vmatprep.subr.bf16.mxu0 0
  %246 = vmatpush1.bf16.msra.mxu0 0
  %247 = vmatprep.subr.bf16.mxu0 0
  %248 = vmatpush1.bf16.msra.mxu0 0
  %249 = vmatprep.subr.bf16.mxu0 0
  %250 = vmatpush1.bf16.msra.mxu0 0
  %251 = vmatprep.subr.bf16.mxu0 0
  %252 = vmatpush1.bf16.msra.mxu0 0
  %253 = vmatprep.subr.bf16.mxu0 0
  %254 = vmatpush1.bf16.msra.mxu0 0
  %255 = vmatprep.mubr.bf16.mxu0 0
  %256 = vmatmul.mubr.bf16.gmra.mrb[0].mxu0 %v147
  %v257 = vpop.f32.mrb[0].mxu0
  %v258 = vadd.f32 %v209, %v257
  %v259 = vpop.f32.mrb[0].mxu0
  %v260 = vpop.f32.mrb[0].mxu0
  %v261 = vadd.f32 %v209, %v260
  %v262 = vpop.f32.mrb[0].mxu0
  %263 = vmatprep.mubr.bf16.mxu0 0
  %264 = vmatmul.mubr.bf16.gmra.mrb[0].mxu0 %v150
  %v265 = vpop.f32.mrb[0].mxu0
  %v266 = vadd.f32 %v209, %v265
  %v267 = vpop.f32.mrb[0].mxu0
  %v268 = vpop.f32.mrb[0].mxu0
  %v269 = vpop.f32.mrb[0].mxu0
  %270 = vdwg.mxu0
  %v271 = vld [vmem:[%s3] sm:$0xf]
  %v272 = vld [vmem:[%s3 + $0x4] sm:$0xf]
  %v273 = vld [vmem:[%s3 + $0x8] sm:$0xf]
  %v274 = vld [vmem:[%s3 + $0xc] sm:$0xf]
  %v275 = vld [vmem:[%s6] sm:$0x1]
  %v277 = vlaneseq
  %v278 = vshrl.u32 %v277, 7
  %v279 = vsub.s32 0, %v278
  %v280 = vrot.slane %v275, %v279
  %v286 = vunpack.c.l.b16 %v271
  %v287 = vunpack.c.l.b16 %v272
  %v288 = vunpack.c.l.b16 %v273
  %v289 = vunpack.c.l.b16 %v274
  %v290 = vpack.c.b16 %v287, %v286
  %v291 = vpack.c.b16 %v289, %v288
  %294 = vmatprep.subr.bf16.mxu0 0
  %295 = vmatpush1.bf16.msra.mxu0 %v290
  %296 = vmatprep.subr.bf16.mxu0 0
  %297 = vmatpush1.bf16.msra.mxu0 %v291
  %298 = vmatprep.subr.bf16.mxu0 0
  %299 = vmatpush1.bf16.msra.mxu0 0
  %300 = vmatprep.subr.bf16.mxu0 0
  %301 = vmatpush1.bf16.msra.mxu0 0
  %302 = vmatprep.subr.bf16.mxu0 0
  %303 = vmatpush1.bf16.msra.mxu0 0
  %304 = vmatprep.subr.bf16.mxu0 0
  %305 = vmatpush1.bf16.msra.mxu0 0
  %306 = vmatprep.subr.bf16.mxu0 0
  %307 = vmatpush1.bf16.msra.mxu0 0
  %308 = vmatprep.subr.bf16.mxu0 0
  %309 = vmatpush1.bf16.msra.mxu0 0
  %310 = vmatprep.subr.bf16.mxu0 0
  %311 = vmatpush1.bf16.msra.mxu0 0
  %312 = vmatprep.subr.bf16.mxu0 0
  %313 = vmatpush1.bf16.msra.mxu0 0
  %314 = vmatprep.subr.bf16.mxu0 0
  %315 = vmatpush1.bf16.msra.mxu0 0
  %316 = vmatprep.subr.bf16.mxu0 0
  %317 = vmatpush1.bf16.msra.mxu0 0
  %318 = vmatprep.subr.bf16.mxu0 0
  %319 = vmatpush1.bf16.msra.mxu0 0
  %320 = vmatprep.subr.bf16.mxu0 0
  %321 = vmatpush1.bf16.msra.mxu0 0
  %322 = vmatprep.subr.bf16.mxu0 0
  %323 = vmatpush1.bf16.msra.mxu0 0
  %324 = vmatprep.subr.bf16.mxu0 0
  %325 = vmatpush1.bf16.msra.mxu0 0
  %326 = vmatprep.mubr.bf16.mxu0 0
  %327 = vmatmul.mubr.bf16.gmra.mrb[0].mxu0 %v147
  %v328 = vpop.f32.mrb[0].mxu0
  %v329 = vadd.f32 %v280, %v328
  %v330 = vpop.f32.mrb[0].mxu0
  %v331 = vpop.f32.mrb[0].mxu0
  %v332 = vadd.f32 %v280, %v331
  %v333 = vpop.f32.mrb[0].mxu0
  %334 = vmatprep.mubr.bf16.mxu0 0
  %335 = vmatmul.mubr.bf16.gmra.mrb[0].mxu0 %v150
  %v336 = vpop.f32.mrb[0].mxu0
  %v337 = vadd.f32 %v280, %v336
  %v338 = vpop.f32.mrb[0].mxu0
  %v339 = vpop.f32.mrb[0].mxu0
  %v340 = vpop.f32.mrb[0].mxu0
  %341 = vdwg.mxu0
  %vm344 = vcmask 1043456
  %v345 = vrot.slane %v190, 4
  %v346 = vrot.slane %v195, 4
  %v347 = vsel %vm344, %v345, %v346
  %351 = vrot.lane.b32.xlu0 %v187, 120
  %v352 = vpop.permute.xlu0 %351
  %353 = vrot.lane.b32.xlu0 %v190, 120
  %v354 = vpop.permute.xlu0 %353
  %357 = vrot.lane.b32.xlu0 %v347, 120
  %v358 = vpop.permute.xlu0 %357
  %359 = vrot.lane.b32.xlu0 %v346, 120
  %v360 = vpop.permute.xlu0 %359
  %363 = vrot.lane.b32.xlu0 %v187, 112
  %v364 = vpop.permute.xlu0 %363
  %365 = vrot.lane.b32.xlu0 %v190, 112
  %v366 = vpop.permute.xlu0 %365
  %369 = vrot.lane.b32.xlu0 %v347, 112
  %v370 = vpop.permute.xlu0 %369
  %371 = vrot.lane.b32.xlu0 %v346, 112
  %v372 = vpop.permute.xlu0 %371
  %375 = vrot.lane.b32.xlu0 %v187, 104
  %v376 = vpop.permute.xlu0 %375
  %377 = vrot.lane.b32.xlu0 %v190, 104
  %v378 = vpop.permute.xlu0 %377
  %381 = vrot.lane.b32.xlu0 %v347, 104
  %v382 = vpop.permute.xlu0 %381
  %383 = vrot.lane.b32.xlu0 %v346, 104
  %v384 = vpop.permute.xlu0 %383
  %v389 = vrot.slane %v261, 4
  %v390 = vrot.slane %v266, 4
  %v391 = vsel %vm344, %v389, %v390
  %395 = vrot.lane.b32.xlu0 %v258, 120
  %v396 = vpop.permute.xlu0 %395
  %397 = vrot.lane.b32.xlu0 %v261, 120
  %v398 = vpop.permute.xlu0 %397
  %401 = vrot.lane.b32.xlu0 %v391, 120
  %v402 = vpop.permute.xlu0 %401
  %403 = vrot.lane.b32.xlu0 %v390, 120
  %v404 = vpop.permute.xlu0 %403
  %407 = vrot.lane.b32.xlu0 %v258, 112
  %v408 = vpop.permute.xlu0 %407
  %409 = vrot.lane.b32.xlu0 %v261, 112
  %v410 = vpop.permute.xlu0 %409
  %413 = vrot.lane.b32.xlu0 %v391, 112
  %v414 = vpop.permute.xlu0 %413
  %415 = vrot.lane.b32.xlu0 %v390, 112
  %v416 = vpop.permute.xlu0 %415
  %419 = vrot.lane.b32.xlu0 %v258, 104
  %v420 = vpop.permute.xlu0 %419
  %421 = vrot.lane.b32.xlu0 %v261, 104
  %v422 = vpop.permute.xlu0 %421
  %425 = vrot.lane.b32.xlu0 %v391, 104
  %v426 = vpop.permute.xlu0 %425
  %427 = vrot.lane.b32.xlu0 %v390, 104
  %v428 = vpop.permute.xlu0 %427
  %v433 = vrot.slane %v332, 4
  %v434 = vrot.slane %v337, 4
  %v435 = vsel %vm344, %v433, %v434
  %439 = vrot.lane.b32.xlu0 %v329, 120
  %v440 = vpop.permute.xlu0 %439
  %441 = vrot.lane.b32.xlu0 %v332, 120
  %v442 = vpop.permute.xlu0 %441
  %445 = vrot.lane.b32.xlu0 %v435, 120
  %v446 = vpop.permute.xlu0 %445
  %447 = vrot.lane.b32.xlu0 %v434, 120
  %v448 = vpop.permute.xlu0 %447
  %451 = vrot.lane.b32.xlu0 %v329, 112
  %v452 = vpop.permute.xlu0 %451
  %453 = vrot.lane.b32.xlu0 %v332, 112
  %v454 = vpop.permute.xlu0 %453
  %457 = vrot.lane.b32.xlu0 %v435, 112
  %v458 = vpop.permute.xlu0 %457
  %459 = vrot.lane.b32.xlu0 %v434, 112
  %v460 = vpop.permute.xlu0 %459
  %463 = vrot.lane.b32.xlu0 %v329, 104
  %v464 = vpop.permute.xlu0 %463
  %465 = vrot.lane.b32.xlu0 %v332, 104
  %v466 = vpop.permute.xlu0 %465
  %469 = vrot.lane.b32.xlu0 %v435, 104
  %v470 = vpop.permute.xlu0 %469
  %471 = vrot.lane.b32.xlu0 %v434, 104
  %v472 = vpop.permute.xlu0 %471
  %v475 = vpack.c.bf16 %v190, %v187
  %v476 = vpack.c.bf16 %v346, %v347
  %v477 = vpack.c.bf16 %v354, %v352
  %v478 = vpack.c.bf16 %v360, %v358
  %v479 = vpack.c.bf16 %v366, %v364
  %v480 = vpack.c.bf16 %v372, %v370
  %v481 = vpack.c.bf16 %v378, %v376
  %v482 = vpack.c.bf16 %v384, %v382
  %v483 = vpack.c.bf16 %v261, %v258
  %v484 = vpack.c.bf16 %v390, %v391
  %v485 = vpack.c.bf16 %v398, %v396
  %v486 = vpack.c.bf16 %v404, %v402
  %v487 = vpack.c.bf16 %v410, %v408
  %v488 = vpack.c.bf16 %v416, %v414
  %v489 = vpack.c.bf16 %v422, %v420
  %v490 = vpack.c.bf16 %v428, %v426
  %vm491 = vcmask 64512
  %v493 = vsel %vm491, %v475, 0
  %v496 = vsel %vm491, %v483, 0
  %498 = vmatprep.subr.bf16.mxu0 0
  %499 = vmatpush1.bf16.xpose.msra.mxu0 %v496
  %500 = vmatprep.subr.bf16.mxu0 0
  %501 = vmatpush1.bf16.xpose.msra.mxu0 0
  %502 = vmatprep.subr.bf16.mxu0 0
  %503 = vmatpush1.bf16.xpose.msra.mxu0 0
  %504 = vmatprep.subr.bf16.mxu0 0
  %505 = vmatpush1.bf16.xpose.msra.mxu0 0
  %506 = vmatprep.subr.bf16.mxu0 0
  %507 = vmatpush1.bf16.xpose.msra.mxu0 0
  %508 = vmatprep.subr.bf16.mxu0 0
  %509 = vmatpush1.bf16.xpose.msra.mxu0 0
  %510 = vmatprep.subr.bf16.mxu0 0
  %511 = vmatpush1.bf16.xpose.msra.mxu0 0
  %512 = vmatprep.subr.bf16.mxu0 0
  %513 = vmatpush1.bf16.xpose.msra.mxu0 0
  %514 = vmatprep.subr.bf16.mxu0 0
  %515 = vmatpush1.bf16.xpose.msra.mxu0 0
  %516 = vmatprep.subr.bf16.mxu0 0
  %517 = vmatpush1.bf16.xpose.msra.mxu0 0
  %518 = vmatprep.subr.bf16.mxu0 0
  %519 = vmatpush1.bf16.xpose.msra.mxu0 0
  %520 = vmatprep.subr.bf16.mxu0 0
  %521 = vmatpush1.bf16.xpose.msra.mxu0 0
  %522 = vmatprep.subr.bf16.mxu0 0
  %523 = vmatpush1.bf16.xpose.msra.mxu0 0
  %524 = vmatprep.subr.bf16.mxu0 0
  %525 = vmatpush1.bf16.xpose.msra.mxu0 0
  %526 = vmatprep.subr.bf16.mxu0 0
  %527 = vmatpush1.bf16.xpose.msra.mxu0 0
  %528 = vmatprep.subr.bf16.mxu0 0
  %529 = vmatpush1.bf16.xpose.msra.mxu0 0
  %530 = vmatprep.mubr.bf16.mxu0 0
  %531 = vmatmul.mubr.bf16.gmra.mrb[0].mxu0 %v493
  %v532 = vpop.f32.mrb[0].mxu0
  %v533 = vadd.f32 0.0, %v532
  %v534 = vpop.f32.mrb[0].mxu0
  %v535 = vpop.f32.mrb[0].mxu0
  %v536 = vadd.f32 0.0, %v535
  %v537 = vpop.f32.mrb[0].mxu0
  %538 = vdwg.mxu0
  %v540 = vsel %vm491, %v476, 0
  %v543 = vsel %vm491, %v484, 0
  %545 = vmatprep.subr.bf16.mxu0 0
  %546 = vmatpush1.bf16.xpose.msra.mxu0 %v543
  %547 = vmatprep.subr.bf16.mxu0 0
  %548 = vmatpush1.bf16.xpose.msra.mxu0 0
  %549 = vmatprep.subr.bf16.mxu0 0
  %550 = vmatpush1.bf16.xpose.msra.mxu0 0
  %551 = vmatprep.subr.bf16.mxu0 0
  %552 = vmatpush1.bf16.xpose.msra.mxu0 0
  %553 = vmatprep.subr.bf16.mxu0 0
  %554 = vmatpush1.bf16.xpose.msra.mxu0 0
  %555 = vmatprep.subr.bf16.mxu0 0
  %556 = vmatpush1.bf16.xpose.msra.mxu0 0
  %557 = vmatprep.subr.bf16.mxu0 0
  %558 = vmatpush1.bf16.xpose.msra.mxu0 0
  %559 = vmatprep.subr.bf16.mxu0 0
  %560 = vmatpush1.bf16.xpose.msra.mxu0 0
  %561 = vmatprep.subr.bf16.mxu0 0
  %562 = vmatpush1.bf16.xpose.msra.mxu0 0
  %563 = vmatprep.subr.bf16.mxu0 0
  %564 = vmatpush1.bf16.xpose.msra.mxu0 0
  %565 = vmatprep.subr.bf16.mxu0 0
  %566 = vmatpush1.bf16.xpose.msra.mxu0 0
  %567 = vmatprep.subr.bf16.mxu0 0
  %568 = vmatpush1.bf16.xpose.msra.mxu0 0
  %569 = vmatprep.subr.bf16.mxu0 0
  %570 = vmatpush1.bf16.xpose.msra.mxu0 0
  %571 = vmatprep.subr.bf16.mxu0 0
  %572 = vmatpush1.bf16.xpose.msra.mxu0 0
  %573 = vmatprep.subr.bf16.mxu0 0
  %574 = vmatpush1.bf16.xpose.msra.mxu0 0
  %575 = vmatprep.subr.bf16.mxu0 0
  %576 = vmatpush1.bf16.xpose.msra.mxu0 0
  %577 = vmatprep.mubr.bf16.mxu0 0
  %578 = vmatmul.mubr.bf16.gmra.mrb[0].mxu0 %v540
  %v579 = vpop.f32.mrb[0].mxu0
  %v580 = vadd.f32 0.0, %v579
  %v581 = vpop.f32.mrb[0].mxu0
  %v582 = vpop.f32.mrb[0].mxu0
  %v583 = vadd.f32 0.0, %v582
  %v584 = vpop.f32.mrb[0].mxu0
  %585 = vdwg.mxu0
  %v587 = vsel %vm491, %v477, 0
  %v590 = vsel %vm491, %v485, 0
  %592 = vmatprep.subr.bf16.mxu0 0
  %593 = vmatpush1.bf16.xpose.msra.mxu0 %v590
  %594 = vmatprep.subr.bf16.mxu0 0
  %595 = vmatpush1.bf16.xpose.msra.mxu0 0
  %596 = vmatprep.subr.bf16.mxu0 0
  %597 = vmatpush1.bf16.xpose.msra.mxu0 0
  %598 = vmatprep.subr.bf16.mxu0 0
  %599 = vmatpush1.bf16.xpose.msra.mxu0 0
  %600 = vmatprep.subr.bf16.mxu0 0
  %601 = vmatpush1.bf16.xpose.msra.mxu0 0
  %602 = vmatprep.subr.bf16.mxu0 0
  %603 = vmatpush1.bf16.xpose.msra.mxu0 0
  %604 = vmatprep.subr.bf16.mxu0 0
  %605 = vmatpush1.bf16.xpose.msra.mxu0 0
  %606 = vmatprep.subr.bf16.mxu0 0
  %607 = vmatpush1.bf16.xpose.msra.mxu0 0
  %608 = vmatprep.subr.bf16.mxu0 0
  %609 = vmatpush1.bf16.xpose.msra.mxu0 0
  %610 = vmatprep.subr.bf16.mxu0 0
  %611 = vmatpush1.bf16.xpose.msra.mxu0 0
  %612 = vmatprep.subr.bf16.mxu0 0
  %613 = vmatpush1.bf16.xpose.msra.mxu0 0
  %614 = vmatprep.subr.bf16.mxu0 0
  %615 = vmatpush1.bf16.xpose.msra.mxu0 0
  %616 = vmatprep.subr.bf16.mxu0 0
  %617 = vmatpush1.bf16.xpose.msra.mxu0 0
  %618 = vmatprep.subr.bf16.mxu0 0
  %619 = vmatpush1.bf16.xpose.msra.mxu0 0
  %620 = vmatprep.subr.bf16.mxu0 0
  %621 = vmatpush1.bf16.xpose.msra.mxu0 0
  %622 = vmatprep.subr.bf16.mxu0 0
  %623 = vmatpush1.bf16.xpose.msra.mxu0 0
  %624 = vmatprep.mubr.bf16.mxu0 0
  %625 = vmatmul.mubr.bf16.gmra.mrb[0].mxu0 %v587
  %v626 = vpop.f32.mrb[0].mxu0
  %v627 = vadd.f32 0.0, %v626
  %v628 = vpop.f32.mrb[0].mxu0
  %v629 = vpop.f32.mrb[0].mxu0
  %v630 = vadd.f32 0.0, %v629
  %v631 = vpop.f32.mrb[0].mxu0
  %632 = vdwg.mxu0
  %v634 = vsel %vm491, %v478, 0
  %v637 = vsel %vm491, %v486, 0
  %639 = vmatprep.subr.bf16.mxu0 0
  %640 = vmatpush1.bf16.xpose.msra.mxu0 %v637
  %641 = vmatprep.subr.bf16.mxu0 0
  %642 = vmatpush1.bf16.xpose.msra.mxu0 0
  %643 = vmatprep.subr.bf16.mxu0 0
  %644 = vmatpush1.bf16.xpose.msra.mxu0 0
  %645 = vmatprep.subr.bf16.mxu0 0
  %646 = vmatpush1.bf16.xpose.msra.mxu0 0
  %647 = vmatprep.subr.bf16.mxu0 0
  %648 = vmatpush1.bf16.xpose.msra.mxu0 0
  %649 = vmatprep.subr.bf16.mxu0 0
  %650 = vmatpush1.bf16.xpose.msra.mxu0 0
  %651 = vmatprep.subr.bf16.mxu0 0
  %652 = vmatpush1.bf16.xpose.msra.mxu0 0
  %653 = vmatprep.subr.bf16.mxu0 0
  %654 = vmatpush1.bf16.xpose.msra.mxu0 0
  %655 = vmatprep.subr.bf16.mxu0 0
  %656 = vmatpush1.bf16.xpose.msra.mxu0 0
  %657 = vmatprep.subr.bf16.mxu0 0
  %658 = vmatpush1.bf16.xpose.msra.mxu0 0
  %659 = vmatprep.subr.bf16.mxu0 0
  %660 = vmatpush1.bf16.xpose.msra.mxu0 0
  %661 = vmatprep.subr.bf16.mxu0 0
  %662 = vmatpush1.bf16.xpose.msra.mxu0 0
  %663 = vmatprep.subr.bf16.mxu0 0
  %664 = vmatpush1.bf16.xpose.msra.mxu0 0
  %665 = vmatprep.subr.bf16.mxu0 0
  %666 = vmatpush1.bf16.xpose.msra.mxu0 0
  %667 = vmatprep.subr.bf16.mxu0 0
  %668 = vmatpush1.bf16.xpose.msra.mxu0 0
  %669 = vmatprep.subr.bf16.mxu0 0
  %670 = vmatpush1.bf16.xpose.msra.mxu0 0
  %671 = vmatprep.mubr.bf16.mxu0 0
  %672 = vmatmul.mubr.bf16.gmra.mrb[0].mxu0 %v634
  %v673 = vpop.f32.mrb[0].mxu0
  %v674 = vadd.f32 0.0, %v673
  %v675 = vpop.f32.mrb[0].mxu0
  %v676 = vpop.f32.mrb[0].mxu0
  %v677 = vadd.f32 0.0, %v676
  %v678 = vpop.f32.mrb[0].mxu0
  %679 = vdwg.mxu0
  %v681 = vsel %vm491, %v479, 0
  %v684 = vsel %vm491, %v487, 0
  %686 = vmatprep.subr.bf16.mxu0 0
  %687 = vmatpush1.bf16.xpose.msra.mxu0 %v684
  %688 = vmatprep.subr.bf16.mxu0 0
  %689 = vmatpush1.bf16.xpose.msra.mxu0 0
  %690 = vmatprep.subr.bf16.mxu0 0
  %691 = vmatpush1.bf16.xpose.msra.mxu0 0
  %692 = vmatprep.subr.bf16.mxu0 0
  %693 = vmatpush1.bf16.xpose.msra.mxu0 0
  %694 = vmatprep.subr.bf16.mxu0 0
  %695 = vmatpush1.bf16.xpose.msra.mxu0 0
  %696 = vmatprep.subr.bf16.mxu0 0
  %697 = vmatpush1.bf16.xpose.msra.mxu0 0
  %698 = vmatprep.subr.bf16.mxu0 0
  %699 = vmatpush1.bf16.xpose.msra.mxu0 0
  %700 = vmatprep.subr.bf16.mxu0 0
  %701 = vmatpush1.bf16.xpose.msra.mxu0 0
  %702 = vmatprep.subr.bf16.mxu0 0
  %703 = vmatpush1.bf16.xpose.msra.mxu0 0
  %704 = vmatprep.subr.bf16.mxu0 0
  %705 = vmatpush1.bf16.xpose.msra.mxu0 0
  %706 = vmatprep.subr.bf16.mxu0 0
  %707 = vmatpush1.bf16.xpose.msra.mxu0 0
  %708 = vmatprep.subr.bf16.mxu0 0
  %709 = vmatpush1.bf16.xpose.msra.mxu0 0
  %710 = vmatprep.subr.bf16.mxu0 0
  %711 = vmatpush1.bf16.xpose.msra.mxu0 0
  %712 = vmatprep.subr.bf16.mxu0 0
  %713 = vmatpush1.bf16.xpose.msra.mxu0 0
  %714 = vmatprep.subr.bf16.mxu0 0
  %715 = vmatpush1.bf16.xpose.msra.mxu0 0
  %716 = vmatprep.subr.bf16.mxu0 0
  %717 = vmatpush1.bf16.xpose.msra.mxu0 0
  %718 = vmatprep.mubr.bf16.mxu0 0
  %719 = vmatmul.mubr.bf16.gmra.mrb[0].mxu0 %v681
  %v720 = vpop.f32.mrb[0].mxu0
  %v721 = vadd.f32 0.0, %v720
  %v722 = vpop.f32.mrb[0].mxu0
  %v723 = vpop.f32.mrb[0].mxu0
  %v724 = vadd.f32 0.0, %v723
  %v725 = vpop.f32.mrb[0].mxu0
  %726 = vdwg.mxu0
  %v728 = vsel %vm491, %v480, 0
  %v731 = vsel %vm491, %v488, 0
  %733 = vmatprep.subr.bf16.mxu0 0
  %734 = vmatpush1.bf16.xpose.msra.mxu0 %v731
  %735 = vmatprep.subr.bf16.mxu0 0
  %736 = vmatpush1.bf16.xpose.msra.mxu0 0
  %737 = vmatprep.subr.bf16.mxu0 0
  %738 = vmatpush1.bf16.xpose.msra.mxu0 0
  %739 = vmatprep.subr.bf16.mxu0 0
  %740 = vmatpush1.bf16.xpose.msra.mxu0 0
  %741 = vmatprep.subr.bf16.mxu0 0
  %742 = vmatpush1.bf16.xpose.msra.mxu0 0
  %743 = vmatprep.subr.bf16.mxu0 0
  %744 = vmatpush1.bf16.xpose.msra.mxu0 0
  %745 = vmatprep.subr.bf16.mxu0 0
  %746 = vmatpush1.bf16.xpose.msra.mxu0 0
  %747 = vmatprep.subr.bf16.mxu0 0
  %748 = vmatpush1.bf16.xpose.msra.mxu0 0
  %749 = vmatprep.subr.bf16.mxu0 0
  %750 = vmatpush1.bf16.xpose.msra.mxu0 0
  %751 = vmatprep.subr.bf16.mxu0 0
  %752 = vmatpush1.bf16.xpose.msra.mxu0 0
  %753 = vmatprep.subr.bf16.mxu0 0
  %754 = vmatpush1.bf16.xpose.msra.mxu0 0
  %755 = vmatprep.subr.bf16.mxu0 0
  %756 = vmatpush1.bf16.xpose.msra.mxu0 0
  %757 = vmatprep.subr.bf16.mxu0 0
  %758 = vmatpush1.bf16.xpose.msra.mxu0 0
  %759 = vmatprep.subr.bf16.mxu0 0
  %760 = vmatpush1.bf16.xpose.msra.mxu0 0
  %761 = vmatprep.subr.bf16.mxu0 0
  %762 = vmatpush1.bf16.xpose.msra.mxu0 0
  %763 = vmatprep.subr.bf16.mxu0 0
  %764 = vmatpush1.bf16.xpose.msra.mxu0 0
  %765 = vmatprep.mubr.bf16.mxu0 0
  %766 = vmatmul.mubr.bf16.gmra.mrb[0].mxu0 %v728
  %v767 = vpop.f32.mrb[0].mxu0
  %v768 = vadd.f32 0.0, %v767
  %v769 = vpop.f32.mrb[0].mxu0
  %v770 = vpop.f32.mrb[0].mxu0
  %v771 = vadd.f32 0.0, %v770
  %v772 = vpop.f32.mrb[0].mxu0
  %773 = vdwg.mxu0
  %v775 = vsel %vm491, %v481, 0
  %v778 = vsel %vm491, %v489, 0
  %780 = vmatprep.subr.bf16.mxu0 0
  %781 = vmatpush1.bf16.xpose.msra.mxu0 %v778
  %782 = vmatprep.subr.bf16.mxu0 0
  %783 = vmatpush1.bf16.xpose.msra.mxu0 0
  %784 = vmatprep.subr.bf16.mxu0 0
  %785 = vmatpush1.bf16.xpose.msra.mxu0 0
  %786 = vmatprep.subr.bf16.mxu0 0
  %787 = vmatpush1.bf16.xpose.msra.mxu0 0
  %788 = vmatprep.subr.bf16.mxu0 0
  %789 = vmatpush1.bf16.xpose.msra.mxu0 0
  %790 = vmatprep.subr.bf16.mxu0 0
  %791 = vmatpush1.bf16.xpose.msra.mxu0 0
  %792 = vmatprep.subr.bf16.mxu0 0
  %793 = vmatpush1.bf16.xpose.msra.mxu0 0
  %794 = vmatprep.subr.bf16.mxu0 0
  %795 = vmatpush1.bf16.xpose.msra.mxu0 0
  %796 = vmatprep.subr.bf16.mxu0 0
  %797 = vmatpush1.bf16.xpose.msra.mxu0 0
  %798 = vmatprep.subr.bf16.mxu0 0
  %799 = vmatpush1.bf16.xpose.msra.mxu0 0
  %800 = vmatprep.subr.bf16.mxu0 0
  %801 = vmatpush1.bf16.xpose.msra.mxu0 0
  %802 = vmatprep.subr.bf16.mxu0 0
  %803 = vmatpush1.bf16.xpose.msra.mxu0 0
  %804 = vmatprep.subr.bf16.mxu0 0
  %805 = vmatpush1.bf16.xpose.msra.mxu0 0
  %806 = vmatprep.subr.bf16.mxu0 0
  %807 = vmatpush1.bf16.xpose.msra.mxu0 0
  %808 = vmatprep.subr.bf16.mxu0 0
  %809 = vmatpush1.bf16.xpose.msra.mxu0 0
  %810 = vmatprep.subr.bf16.mxu0 0
  %811 = vmatpush1.bf16.xpose.msra.mxu0 0
  %812 = vmatprep.mubr.bf16.mxu0 0
  %813 = vmatmul.mubr.bf16.gmra.mrb[0].mxu0 %v775
  %v814 = vpop.f32.mrb[0].mxu0
  %v815 = vadd.f32 0.0, %v814
  %v816 = vpop.f32.mrb[0].mxu0
  %v817 = vpop.f32.mrb[0].mxu0
  %v818 = vadd.f32 0.0, %v817
  %v819 = vpop.f32.mrb[0].mxu0
  %820 = vdwg.mxu0
  %v822 = vsel %vm491, %v482, 0
  %v825 = vsel %vm491, %v490, 0
  %827 = vmatprep.subr.bf16.mxu0 0
  %828 = vmatpush1.bf16.xpose.msra.mxu0 %v825
  %829 = vmatprep.subr.bf16.mxu0 0
  %830 = vmatpush1.bf16.xpose.msra.mxu0 0
  %831 = vmatprep.subr.bf16.mxu0 0
  %832 = vmatpush1.bf16.xpose.msra.mxu0 0
  %833 = vmatprep.subr.bf16.mxu0 0
  %834 = vmatpush1.bf16.xpose.msra.mxu0 0
  %835 = vmatprep.subr.bf16.mxu0 0
  %836 = vmatpush1.bf16.xpose.msra.mxu0 0
  %837 = vmatprep.subr.bf16.mxu0 0
  %838 = vmatpush1.bf16.xpose.msra.mxu0 0
  %839 = vmatprep.subr.bf16.mxu0 0
  %840 = vmatpush1.bf16.xpose.msra.mxu0 0
  %841 = vmatprep.subr.bf16.mxu0 0
  %842 = vmatpush1.bf16.xpose.msra.mxu0 0
  %843 = vmatprep.subr.bf16.mxu0 0
  %844 = vmatpush1.bf16.xpose.msra.mxu0 0
  %845 = vmatprep.subr.bf16.mxu0 0
  %846 = vmatpush1.bf16.xpose.msra.mxu0 0
  %847 = vmatprep.subr.bf16.mxu0 0
  %848 = vmatpush1.bf16.xpose.msra.mxu0 0
  %849 = vmatprep.subr.bf16.mxu0 0
  %850 = vmatpush1.bf16.xpose.msra.mxu0 0
  %851 = vmatprep.subr.bf16.mxu0 0
  %852 = vmatpush1.bf16.xpose.msra.mxu0 0
  %853 = vmatprep.subr.bf16.mxu0 0
  %854 = vmatpush1.bf16.xpose.msra.mxu0 0
  %855 = vmatprep.subr.bf16.mxu0 0
  %856 = vmatpush1.bf16.xpose.msra.mxu0 0
  %857 = vmatprep.subr.bf16.mxu0 0
  %858 = vmatpush1.bf16.xpose.msra.mxu0 0
  %859 = vmatprep.mubr.bf16.mxu0 0
  %860 = vmatmul.mubr.bf16.gmra.mrb[0].mxu0 %v822
  %v861 = vpop.f32.mrb[0].mxu0
  %v862 = vadd.f32 0.0, %v861
  %v863 = vpop.f32.mrb[0].mxu0
  %v864 = vpop.f32.mrb[0].mxu0
  %v865 = vadd.f32 0.0, %v864
  %v866 = vpop.f32.mrb[0].mxu0
  %867 = vdwg.mxu0
  %vm868 = vcmask 97280
  %v869 = vsel %vm868, %v533, -inf
  %870 = vmax.xlane.f32.xlu0 %v869
  %v871 = vpop.xlane.xlu0 %870
  %vm872 = vcmask 93184
  %v873 = vsel %vm872, %v536, -inf
  %874 = vmax.xlane.f32.xlu0 %v873
  %v875 = vpop.xlane.xlu0 %874
  %v876 = vsel %vm868, %v580, -inf
  %877 = vmax.xlane.f32.xlu0 %v876
  %v878 = vpop.xlane.xlu0 %877
  %v879 = vsel %vm872, %v583, -inf
  %880 = vmax.xlane.f32.xlu0 %v879
  %v881 = vpop.xlane.xlu0 %880
  %v882 = vsel %vm868, %v627, -inf
  %883 = vmax.xlane.f32.xlu0 %v882
  %v884 = vpop.xlane.xlu0 %883
  %v885 = vsel %vm872, %v630, -inf
  %886 = vmax.xlane.f32.xlu0 %v885
  %v887 = vpop.xlane.xlu0 %886
  %v888 = vsel %vm868, %v674, -inf
  %889 = vmax.xlane.f32.xlu0 %v888
  %v890 = vpop.xlane.xlu0 %889
  %v891 = vsel %vm872, %v677, -inf
  %892 = vmax.xlane.f32.xlu0 %v891
  %v893 = vpop.xlane.xlu0 %892
  %v894 = vsel %vm868, %v721, -inf
  %895 = vmax.xlane.f32.xlu0 %v894
  %v896 = vpop.xlane.xlu0 %895
  %v897 = vsel %vm872, %v724, -inf
  %898 = vmax.xlane.f32.xlu0 %v897
  %v899 = vpop.xlane.xlu0 %898
  %v900 = vsel %vm868, %v768, -inf
  %901 = vmax.xlane.f32.xlu0 %v900
  %v902 = vpop.xlane.xlu0 %901
  %v903 = vsel %vm872, %v771, -inf
  %904 = vmax.xlane.f32.xlu0 %v903
  %v905 = vpop.xlane.xlu0 %904
  %v906 = vsel %vm868, %v815, -inf
  %907 = vmax.xlane.f32.xlu0 %v906
  %v908 = vpop.xlane.xlu0 %907
  %v909 = vsel %vm872, %v818, -inf
  %910 = vmax.xlane.f32.xlu0 %v909
  %v911 = vpop.xlane.xlu0 %910
  %v912 = vsel %vm868, %v862, -inf
  %913 = vmax.xlane.f32.xlu0 %v912
  %v914 = vpop.xlane.xlu0 %913
  %v915 = vsel %vm872, %v865, -inf
  %916 = vmax.xlane.f32.xlu0 %v915
  %v917 = vpop.xlane.xlu0 %916
  %v918 = vsub.f32 %v533, %v871
  %v919 = vsub.f32 %v536, %v875
  %v920 = vsub.f32 %v580, %v878
  %v921 = vsub.f32 %v583, %v881
  %v922 = vsub.f32 %v627, %v884
  %v923 = vsub.f32 %v630, %v887
  %v924 = vsub.f32 %v674, %v890
  %v925 = vsub.f32 %v677, %v893
  %v926 = vsub.f32 %v721, %v896
  %v927 = vsub.f32 %v724, %v899
  %v928 = vsub.f32 %v768, %v902
  %v929 = vsub.f32 %v771, %v905
  %v930 = vsub.f32 %v815, %v908
  %v931 = vsub.f32 %v818, %v911
  %v932 = vsub.f32 %v862, %v914
  %v933 = vsub.f32 %v865, %v917
  %v934 = vmul.f32 %v918, 1.442695
  %v935 = vpow.pop %v934
  %v936 = vmul.f32 %v919, 1.442695
  %v937 = vpow.pop %v936
  %v938 = vmul.f32 %v920, 1.442695
  %v939 = vpow.pop %v938
  %v940 = vmul.f32 %v921, 1.442695
  %v941 = vpow.pop %v940
  %v942 = vmul.f32 %v922, 1.442695
  %v943 = vpow.pop %v942
  %v944 = vmul.f32 %v923, 1.442695
  %v945 = vpow.pop %v944
  %v946 = vmul.f32 %v924, 1.442695
  %v947 = vpow.pop %v946
  %v948 = vmul.f32 %v925, 1.442695
  %v949 = vpow.pop %v948
  %v950 = vmul.f32 %v926, 1.442695
  %v951 = vpow.pop %v950
  %v952 = vmul.f32 %v927, 1.442695
  %v953 = vpow.pop %v952
  %v954 = vmul.f32 %v928, 1.442695
  %v955 = vpow.pop %v954
  %v956 = vmul.f32 %v929, 1.442695
  %v957 = vpow.pop %v956
  %v958 = vmul.f32 %v930, 1.442695
  %v959 = vpow.pop %v958
  %v960 = vmul.f32 %v931, 1.442695
  %v961 = vpow.pop %v960
  %v962 = vmul.f32 %v932, 1.442695
  %v963 = vpow.pop %v962
  %v964 = vmul.f32 %v933, 1.442695
  %v965 = vpow.pop %v964
  %v966 = vsel %vm868, %v935, 0.0
  %967 = vadd.xlane.f32.xlu0 %v966
  %v968 = vpop.xlane.xlu0 %967
  %v969 = vsel %vm872, %v937, 0.0
  %970 = vadd.xlane.f32.xlu0 %v969
  %v971 = vpop.xlane.xlu0 %970
  %v972 = vsel %vm868, %v939, 0.0
  %973 = vadd.xlane.f32.xlu0 %v972
  %v974 = vpop.xlane.xlu0 %973
  %v975 = vsel %vm872, %v941, 0.0
  %976 = vadd.xlane.f32.xlu0 %v975
  %v977 = vpop.xlane.xlu0 %976
  %v978 = vsel %vm868, %v943, 0.0
  %979 = vadd.xlane.f32.xlu0 %v978
  %v980 = vpop.xlane.xlu0 %979
  %v981 = vsel %vm872, %v945, 0.0
  %982 = vadd.xlane.f32.xlu0 %v981
  %v983 = vpop.xlane.xlu0 %982
  %v984 = vsel %vm868, %v947, 0.0
  %985 = vadd.xlane.f32.xlu0 %v984
  %v986 = vpop.xlane.xlu0 %985
  %v987 = vsel %vm872, %v949, 0.0
  %988 = vadd.xlane.f32.xlu0 %v987
  %v989 = vpop.xlane.xlu0 %988
  %v990 = vsel %vm868, %v951, 0.0
  %991 = vadd.xlane.f32.xlu0 %v990
  %v992 = vpop.xlane.xlu0 %991
  %v993 = vsel %vm872, %v953, 0.0
  %994 = vadd.xlane.f32.xlu0 %v993
  %v995 = vpop.xlane.xlu0 %994
  %v996 = vsel %vm868, %v955, 0.0
  %997 = vadd.xlane.f32.xlu0 %v996
  %v998 = vpop.xlane.xlu0 %997
  %v999 = vsel %vm872, %v957, 0.0
  %1000 = vadd.xlane.f32.xlu0 %v999
  %v1001 = vpop.xlane.xlu0 %1000
  %v1002 = vsel %vm868, %v959, 0.0
  %1003 = vadd.xlane.f32.xlu0 %v1002
  %v1004 = vpop.xlane.xlu0 %1003
  %v1005 = vsel %vm872, %v961, 0.0
  %1006 = vadd.xlane.f32.xlu0 %v1005
  %v1007 = vpop.xlane.xlu0 %1006
  %v1008 = vsel %vm868, %v963, 0.0
  %1009 = vadd.xlane.f32.xlu0 %v1008
  %v1010 = vpop.xlane.xlu0 %1009
  %v1011 = vsel %vm872, %v965, 0.0
  %1012 = vadd.xlane.f32.xlu0 %v1011
  %v1013 = vpop.xlane.xlu0 %1012
  %v1014 = vrcp.pop %v968
  %v1015 = vrcp.pop %v971
  %v1016 = vrcp.pop %v974
  %v1017 = vrcp.pop %v977
  %v1018 = vrcp.pop %v980
  %v1019 = vrcp.pop %v983
  %v1020 = vrcp.pop %v986
  %v1021 = vrcp.pop %v989
  %v1022 = vrcp.pop %v992
  %v1023 = vrcp.pop %v995
  %v1024 = vrcp.pop %v998
  %v1025 = vrcp.pop %v1001
  %v1026 = vrcp.pop %v1004
  %v1027 = vrcp.pop %v1007
  %v1028 = vrcp.pop %v1010
  %v1029 = vrcp.pop %v1013
  %v1030 = vmul.f32 %v935, %v1014
  %v1031 = vmul.f32 %v937, %v1015
  %v1032 = vmul.f32 %v939, %v1016
  %v1033 = vmul.f32 %v941, %v1017
  %v1034 = vmul.f32 %v943, %v1018
  %v1035 = vmul.f32 %v945, %v1019
  %v1036 = vmul.f32 %v947, %v1020
  %v1037 = vmul.f32 %v949, %v1021
  %v1038 = vmul.f32 %v951, %v1022
  %v1039 = vmul.f32 %v953, %v1023
  %v1040 = vmul.f32 %v955, %v1024
  %v1041 = vmul.f32 %v957, %v1025
  %v1042 = vmul.f32 %v959, %v1026
  %v1043 = vmul.f32 %v961, %v1027
  %v1044 = vmul.f32 %v963, %v1028
  %v1045 = vmul.f32 %v965, %v1029
  %v1046 = vpack.c.bf16 %v1031, %v1030
  %v1047 = vpack.c.bf16 %v1033, %v1032
  %v1048 = vpack.c.bf16 %v1035, %v1034
  %v1049 = vpack.c.bf16 %v1037, %v1036
  %v1050 = vpack.c.bf16 %v1039, %v1038
  %v1051 = vpack.c.bf16 %v1041, %v1040
  %v1052 = vpack.c.bf16 %v1043, %v1042
  %v1053 = vpack.c.bf16 %v1045, %v1044
  %v1054 = vpack.c.bf16 %v332, %v329
  %v1055 = vpack.c.bf16 %v434, %v435
  %v1056 = vpack.c.bf16 %v442, %v440
  %v1057 = vpack.c.bf16 %v448, %v446
  %v1058 = vpack.c.bf16 %v454, %v452
  %v1059 = vpack.c.bf16 %v460, %v458
  %v1060 = vpack.c.bf16 %v466, %v464
  %v1061 = vpack.c.bf16 %v472, %v470
  %v1063 = vsel %vm868, %v1046, 0
  %vm1065 = vcmask 1045504
  %v1067 = vsel %vm1065, %v1054, 0
  %1069 = vmatprep.subr.bf16.mxu0 0
  %1070 = vmatpush1.bf16.msra.mxu0 %v1067
  %1071 = vmatprep.subr.bf16.mxu0 0
  %1072 = vmatpush1.bf16.msra.mxu0 0
  %1073 = vmatprep.subr.bf16.mxu0 0
  %1074 = vmatpush1.bf16.msra.mxu0 0
  %1075 = vmatprep.subr.bf16.mxu0 0
  %1076 = vmatpush1.bf16.msra.mxu0 0
  %1077 = vmatprep.subr.bf16.mxu0 0
  %1078 = vmatpush1.bf16.msra.mxu0 0
  %1079 = vmatprep.subr.bf16.mxu0 0
  %1080 = vmatpush1.bf16.msra.mxu0 0
  %1081 = vmatprep.subr.bf16.mxu0 0
  %1082 = vmatpush1.bf16.msra.mxu0 0
  %1083 = vmatprep.subr.bf16.mxu0 0
  %1084 = vmatpush1.bf16.msra.mxu0 0
  %1085 = vmatprep.subr.bf16.mxu0 0
  %1086 = vmatpush1.bf16.msra.mxu0 0
  %1087 = vmatprep.subr.bf16.mxu0 0
  %1088 = vmatpush1.bf16.msra.mxu0 0
  %1089 = vmatprep.subr.bf16.mxu0 0
  %1090 = vmatpush1.bf16.msra.mxu0 0
  %1091 = vmatprep.subr.bf16.mxu0 0
  %1092 = vmatpush1.bf16.msra.mxu0 0
  %1093 = vmatprep.subr.bf16.mxu0 0
  %1094 = vmatpush1.bf16.msra.mxu0 0
  %1095 = vmatprep.subr.bf16.mxu0 0
  %1096 = vmatpush1.bf16.msra.mxu0 0
  %1097 = vmatprep.subr.bf16.mxu0 0
  %1098 = vmatpush1.bf16.msra.mxu0 0
  %1099 = vmatprep.subr.bf16.mxu0 0
  %1100 = vmatpush1.bf16.msra.mxu0 0
  %1101 = vmatprep.mubr.bf16.mxu0 0
  %1102 = vmatmul.mubr.bf16.gmra.mrb[0].mxu0 %v1063
  %v1103 = vpop.f32.mrb[0].mxu0
  %v1104 = vadd.f32 0.0, %v1103
  %v1105 = vpop.f32.mrb[0].mxu0
  %v1106 = vpop.f32.mrb[0].mxu0
  %v1107 = vadd.f32 0.0, %v1106
  %v1108 = vpop.f32.mrb[0].mxu0
  %1109 = vdwg.mxu0
  %v1111 = vsel %vm868, %v1047, 0
  %v1114 = vsel %vm1065, %v1055, 0
  %1116 = vmatprep.subr.bf16.mxu0 0
  %1117 = vmatpush1.bf16.msra.mxu0 %v1114
  %1118 = vmatprep.subr.bf16.mxu0 0
  %1119 = vmatpush1.bf16.msra.mxu0 0
  %1120 = vmatprep.subr.bf16.mxu0 0
  %1121 = vmatpush1.bf16.msra.mxu0 0
  %1122 = vmatprep.subr.bf16.mxu0 0
  %1123 = vmatpush1.bf16.msra.mxu0 0
  %1124 = vmatprep.subr.bf16.mxu0 0
  %1125 = vmatpush1.bf16.msra.mxu0 0
  %1126 = vmatprep.subr.bf16.mxu0 0
  %1127 = vmatpush1.bf16.msra.mxu0 0
  %1128 = vmatprep.subr.bf16.mxu0 0
  %1129 = vmatpush1.bf16.msra.mxu0 0
  %1130 = vmatprep.subr.bf16.mxu0 0
  %1131 = vmatpush1.bf16.msra.mxu0 0
  %1132 = vmatprep.subr.bf16.mxu0 0
  %1133 = vmatpush1.bf16.msra.mxu0 0
  %1134 = vmatprep.subr.bf16.mxu0 0
  %1135 = vmatpush1.bf16.msra.mxu0 0
  %1136 = vmatprep.subr.bf16.mxu0 0
  %1137 = vmatpush1.bf16.msra.mxu0 0
  %1138 = vmatprep.subr.bf16.mxu0 0
  %1139 = vmatpush1.bf16.msra.mxu0 0
  %1140 = vmatprep.subr.bf16.mxu0 0
  %1141 = vmatpush1.bf16.msra.mxu0 0
  %1142 = vmatprep.subr.bf16.mxu0 0
  %1143 = vmatpush1.bf16.msra.mxu0 0
  %1144 = vmatprep.subr.bf16.mxu0 0
  %1145 = vmatpush1.bf16.msra.mxu0 0
  %1146 = vmatprep.subr.bf16.mxu0 0
  %1147 = vmatpush1.bf16.msra.mxu0 0
  %1148 = vmatprep.mubr.bf16.mxu0 0
  %1149 = vmatmul.mubr.bf16.gmra.mrb[0].mxu0 %v1111
  %v1150 = vpop.f32.mrb[0].mxu0
  %v1151 = vadd.f32 0.0, %v1150
  %v1152 = vpop.f32.mrb[0].mxu0
  %v1153 = vpop.f32.mrb[0].mxu0
  %v1154 = vadd.f32 0.0, %v1153
  %v1155 = vpop.f32.mrb[0].mxu0
  %1156 = vdwg.mxu0
  %v1158 = vsel %vm868, %v1048, 0
  %v1161 = vsel %vm1065, %v1056, 0
  %1163 = vmatprep.subr.bf16.mxu0 0
  %1164 = vmatpush1.bf16.msra.mxu0 %v1161
  %1165 = vmatprep.subr.bf16.mxu0 0
  %1166 = vmatpush1.bf16.msra.mxu0 0
  %1167 = vmatprep.subr.bf16.mxu0 0
  %1168 = vmatpush1.bf16.msra.mxu0 0
  %1169 = vmatprep.subr.bf16.mxu0 0
  %1170 = vmatpush1.bf16.msra.mxu0 0
  %1171 = vmatprep.subr.bf16.mxu0 0
  %1172 = vmatpush1.bf16.msra.mxu0 0
  %1173 = vmatprep.subr.bf16.mxu0 0
  %1174 = vmatpush1.bf16.msra.mxu0 0
  %1175 = vmatprep.subr.bf16.mxu0 0
  %1176 = vmatpush1.bf16.msra.mxu0 0
  %1177 = vmatprep.subr.bf16.mxu0 0
  %1178 = vmatpush1.bf16.msra.mxu0 0
  %1179 = vmatprep.subr.bf16.mxu0 0
  %1180 = vmatpush1.bf16.msra.mxu0 0
  %1181 = vmatprep.subr.bf16.mxu0 0
  %1182 = vmatpush1.bf16.msra.mxu0 0
  %1183 = vmatprep.subr.bf16.mxu0 0
  %1184 = vmatpush1.bf16.msra.mxu0 0
  %1185 = vmatprep.subr.bf16.mxu0 0
  %1186 = vmatpush1.bf16.msra.mxu0 0
  %1187 = vmatprep.subr.bf16.mxu0 0
  %1188 = vmatpush1.bf16.msra.mxu0 0
  %1189 = vmatprep.subr.bf16.mxu0 0
  %1190 = vmatpush1.bf16.msra.mxu0 0
  %1191 = vmatprep.subr.bf16.mxu0 0
  %1192 = vmatpush1.bf16.msra.mxu0 0
  %1193 = vmatprep.subr.bf16.mxu0 0
  %1194 = vmatpush1.bf16.msra.mxu0 0
  %1195 = vmatprep.mubr.bf16.mxu0 0
  %1196 = vmatmul.mubr.bf16.gmra.mrb[0].mxu0 %v1158
  %v1197 = vpop.f32.mrb[0].mxu0
  %v1198 = vadd.f32 0.0, %v1197
  %v1199 = vpop.f32.mrb[0].mxu0
  %v1200 = vpop.f32.mrb[0].mxu0
  %v1201 = vadd.f32 0.0, %v1200
  %v1202 = vpop.f32.mrb[0].mxu0
  %1203 = vdwg.mxu0
  %v1205 = vsel %vm868, %v1049, 0
  %v1208 = vsel %vm1065, %v1057, 0
  %1210 = vmatprep.subr.bf16.mxu0 0
  %1211 = vmatpush1.bf16.msra.mxu0 %v1208
  %1212 = vmatprep.subr.bf16.mxu0 0
  %1213 = vmatpush1.bf16.msra.mxu0 0
  %1214 = vmatprep.subr.bf16.mxu0 0
  %1215 = vmatpush1.bf16.msra.mxu0 0
  %1216 = vmatprep.subr.bf16.mxu0 0
  %1217 = vmatpush1.bf16.msra.mxu0 0
  %1218 = vmatprep.subr.bf16.mxu0 0
  %1219 = vmatpush1.bf16.msra.mxu0 0
  %1220 = vmatprep.subr.bf16.mxu0 0
  %1221 = vmatpush1.bf16.msra.mxu0 0
  %1222 = vmatprep.subr.bf16.mxu0 0
  %1223 = vmatpush1.bf16.msra.mxu0 0
  %1224 = vmatprep.subr.bf16.mxu0 0
  %1225 = vmatpush1.bf16.msra.mxu0 0
  %1226 = vmatprep.subr.bf16.mxu0 0
  %1227 = vmatpush1.bf16.msra.mxu0 0
  %1228 = vmatprep.subr.bf16.mxu0 0
  %1229 = vmatpush1.bf16.msra.mxu0 0
  %1230 = vmatprep.subr.bf16.mxu0 0
  %1231 = vmatpush1.bf16.msra.mxu0 0
  %1232 = vmatprep.subr.bf16.mxu0 0
  %1233 = vmatpush1.bf16.msra.mxu0 0
  %1234 = vmatprep.subr.bf16.mxu0 0
  %1235 = vmatpush1.bf16.msra.mxu0 0
  %1236 = vmatprep.subr.bf16.mxu0 0
  %1237 = vmatpush1.bf16.msra.mxu0 0
  %1238 = vmatprep.subr.bf16.mxu0 0
  %1239 = vmatpush1.bf16.msra.mxu0 0
  %1240 = vmatprep.subr.bf16.mxu0 0
  %1241 = vmatpush1.bf16.msra.mxu0 0
  %1242 = vmatprep.mubr.bf16.mxu0 0
  %1243 = vmatmul.mubr.bf16.gmra.mrb[0].mxu0 %v1205
  %v1244 = vpop.f32.mrb[0].mxu0
  %v1245 = vadd.f32 0.0, %v1244
  %v1246 = vpop.f32.mrb[0].mxu0
  %v1247 = vpop.f32.mrb[0].mxu0
  %v1248 = vadd.f32 0.0, %v1247
  %v1249 = vpop.f32.mrb[0].mxu0
  %1250 = vdwg.mxu0
  %v1252 = vsel %vm868, %v1050, 0
  %v1255 = vsel %vm1065, %v1058, 0
  %1257 = vmatprep.subr.bf16.mxu0 0
  %1258 = vmatpush1.bf16.msra.mxu0 %v1255
  %1259 = vmatprep.subr.bf16.mxu0 0
  %1260 = vmatpush1.bf16.msra.mxu0 0
  %1261 = vmatprep.subr.bf16.mxu0 0
  %1262 = vmatpush1.bf16.msra.mxu0 0
  %1263 = vmatprep.subr.bf16.mxu0 0
  %1264 = vmatpush1.bf16.msra.mxu0 0
  %1265 = vmatprep.subr.bf16.mxu0 0
  %1266 = vmatpush1.bf16.msra.mxu0 0
  %1267 = vmatprep.subr.bf16.mxu0 0
  %1268 = vmatpush1.bf16.msra.mxu0 0
  %1269 = vmatprep.subr.bf16.mxu0 0
  %1270 = vmatpush1.bf16.msra.mxu0 0
  %1271 = vmatprep.subr.bf16.mxu0 0
  %1272 = vmatpush1.bf16.msra.mxu0 0
  %1273 = vmatprep.subr.bf16.mxu0 0
  %1274 = vmatpush1.bf16.msra.mxu0 0
  %1275 = vmatprep.subr.bf16.mxu0 0
  %1276 = vmatpush1.bf16.msra.mxu0 0
  %1277 = vmatprep.subr.bf16.mxu0 0
  %1278 = vmatpush1.bf16.msra.mxu0 0
  %1279 = vmatprep.subr.bf16.mxu0 0
  %1280 = vmatpush1.bf16.msra.mxu0 0
  %1281 = vmatprep.subr.bf16.mxu0 0
  %1282 = vmatpush1.bf16.msra.mxu0 0
  %1283 = vmatprep.subr.bf16.mxu0 0
  %1284 = vmatpush1.bf16.msra.mxu0 0
  %1285 = vmatprep.subr.bf16.mxu0 0
  %1286 = vmatpush1.bf16.msra.mxu0 0
  %1287 = vmatprep.subr.bf16.mxu0 0
  %1288 = vmatpush1.bf16.msra.mxu0 0
  %1289 = vmatprep.mubr.bf16.mxu0 0
  %1290 = vmatmul.mubr.bf16.gmra.mrb[0].mxu0 %v1252
  %v1291 = vpop.f32.mrb[0].mxu0
  %v1292 = vadd.f32 0.0, %v1291
  %v1293 = vpop.f32.mrb[0].mxu0
  %v1294 = vpop.f32.mrb[0].mxu0
  %v1295 = vadd.f32 0.0, %v1294
  %v1296 = vpop.f32.mrb[0].mxu0
  %1297 = vdwg.mxu0
  %v1299 = vsel %vm868, %v1051, 0
  %v1302 = vsel %vm1065, %v1059, 0
  %1304 = vmatprep.subr.bf16.mxu0 0
  %1305 = vmatpush1.bf16.msra.mxu0 %v1302
  %1306 = vmatprep.subr.bf16.mxu0 0
  %1307 = vmatpush1.bf16.msra.mxu0 0
  %1308 = vmatprep.subr.bf16.mxu0 0
  %1309 = vmatpush1.bf16.msra.mxu0 0
  %1310 = vmatprep.subr.bf16.mxu0 0
  %1311 = vmatpush1.bf16.msra.mxu0 0
  %1312 = vmatprep.subr.bf16.mxu0 0
  %1313 = vmatpush1.bf16.msra.mxu0 0
  %1314 = vmatprep.subr.bf16.mxu0 0
  %1315 = vmatpush1.bf16.msra.mxu0 0
  %1316 = vmatprep.subr.bf16.mxu0 0
  %1317 = vmatpush1.bf16.msra.mxu0 0
  %1318 = vmatprep.subr.bf16.mxu0 0
  %1319 = vmatpush1.bf16.msra.mxu0 0
  %1320 = vmatprep.subr.bf16.mxu0 0
  %1321 = vmatpush1.bf16.msra.mxu0 0
  %1322 = vmatprep.subr.bf16.mxu0 0
  %1323 = vmatpush1.bf16.msra.mxu0 0
  %1324 = vmatprep.subr.bf16.mxu0 0
  %1325 = vmatpush1.bf16.msra.mxu0 0
  %1326 = vmatprep.subr.bf16.mxu0 0
  %1327 = vmatpush1.bf16.msra.mxu0 0
  %1328 = vmatprep.subr.bf16.mxu0 0
  %1329 = vmatpush1.bf16.msra.mxu0 0
  %1330 = vmatprep.subr.bf16.mxu0 0
  %1331 = vmatpush1.bf16.msra.mxu0 0
  %1332 = vmatprep.subr.bf16.mxu0 0
  %1333 = vmatpush1.bf16.msra.mxu0 0
  %1334 = vmatprep.subr.bf16.mxu0 0
  %1335 = vmatpush1.bf16.msra.mxu0 0
  %1336 = vmatprep.mubr.bf16.mxu0 0
  %1337 = vmatmul.mubr.bf16.gmra.mrb[0].mxu0 %v1299
  %v1338 = vpop.f32.mrb[0].mxu0
  %v1339 = vadd.f32 0.0, %v1338
  %v1340 = vpop.f32.mrb[0].mxu0
  %v1341 = vpop.f32.mrb[0].mxu0
  %v1342 = vadd.f32 0.0, %v1341
  %v1343 = vpop.f32.mrb[0].mxu0
  %1344 = vdwg.mxu0
  %v1346 = vsel %vm868, %v1052, 0
  %v1349 = vsel %vm1065, %v1060, 0
  %1351 = vmatprep.subr.bf16.mxu0 0
  %1352 = vmatpush1.bf16.msra.mxu0 %v1349
  %1353 = vmatprep.subr.bf16.mxu0 0
  %1354 = vmatpush1.bf16.msra.mxu0 0
  %1355 = vmatprep.subr.bf16.mxu0 0
  %1356 = vmatpush1.bf16.msra.mxu0 0
  %1357 = vmatprep.subr.bf16.mxu0 0
  %1358 = vmatpush1.bf16.msra.mxu0 0
  %1359 = vmatprep.subr.bf16.mxu0 0
  %1360 = vmatpush1.bf16.msra.mxu0 0
  %1361 = vmatprep.subr.bf16.mxu0 0
  %1362 = vmatpush1.bf16.msra.mxu0 0
  %1363 = vmatprep.subr.bf16.mxu0 0
  %1364 = vmatpush1.bf16.msra.mxu0 0
  %1365 = vmatprep.subr.bf16.mxu0 0
  %1366 = vmatpush1.bf16.msra.mxu0 0
  %1367 = vmatprep.subr.bf16.mxu0 0
  %1368 = vmatpush1.bf16.msra.mxu0 0
  %1369 = vmatprep.subr.bf16.mxu0 0
  %1370 = vmatpush1.bf16.msra.mxu0 0
  %1371 = vmatprep.subr.bf16.mxu0 0
  %1372 = vmatpush1.bf16.msra.mxu0 0
  %1373 = vmatprep.subr.bf16.mxu0 0
  %1374 = vmatpush1.bf16.msra.mxu0 0
  %1375 = vmatprep.subr.bf16.mxu0 0
  %1376 = vmatpush1.bf16.msra.mxu0 0
  %1377 = vmatprep.subr.bf16.mxu0 0
  %1378 = vmatpush1.bf16.msra.mxu0 0
  %1379 = vmatprep.subr.bf16.mxu0 0
  %1380 = vmatpush1.bf16.msra.mxu0 0
  %1381 = vmatprep.subr.bf16.mxu0 0
  %1382 = vmatpush1.bf16.msra.mxu0 0
  %1383 = vmatprep.mubr.bf16.mxu0 0
  %1384 = vmatmul.mubr.bf16.gmra.mrb[0].mxu0 %v1346
  %v1385 = vpop.f32.mrb[0].mxu0
  %v1386 = vadd.f32 0.0, %v1385
  %v1387 = vpop.f32.mrb[0].mxu0
  %v1388 = vpop.f32.mrb[0].mxu0
  %v1389 = vadd.f32 0.0, %v1388
  %v1390 = vpop.f32.mrb[0].mxu0
  %1391 = vdwg.mxu0
  %v1393 = vsel %vm868, %v1053, 0
  %v1396 = vsel %vm1065, %v1061, 0
  %1398 = vmatprep.subr.bf16.mxu0 0
  %1399 = vmatpush1.bf16.msra.mxu0 %v1396
  %1400 = vmatprep.subr.bf16.mxu0 0
  %1401 = vmatpush1.bf16.msra.mxu0 0
  %1402 = vmatprep.subr.bf16.mxu0 0
  %1403 = vmatpush1.bf16.msra.mxu0 0
  %1404 = vmatprep.subr.bf16.mxu0 0
  %1405 = vmatpush1.bf16.msra.mxu0 0
  %1406 = vmatprep.subr.bf16.mxu0 0
  %1407 = vmatpush1.bf16.msra.mxu0 0
  %1408 = vmatprep.subr.bf16.mxu0 0
  %1409 = vmatpush1.bf16.msra.mxu0 0
  %1410 = vmatprep.subr.bf16.mxu0 0
  %1411 = vmatpush1.bf16.msra.mxu0 0
  %1412 = vmatprep.subr.bf16.mxu0 0
  %1413 = vmatpush1.bf16.msra.mxu0 0
  %1414 = vmatprep.subr.bf16.mxu0 0
  %1415 = vmatpush1.bf16.msra.mxu0 0
  %1416 = vmatprep.subr.bf16.mxu0 0
  %1417 = vmatpush1.bf16.msra.mxu0 0
  %1418 = vmatprep.subr.bf16.mxu0 0
  %1419 = vmatpush1.bf16.msra.mxu0 0
  %1420 = vmatprep.subr.bf16.mxu0 0
  %1421 = vmatpush1.bf16.msra.mxu0 0
  %1422 = vmatprep.subr.bf16.mxu0 0
  %1423 = vmatpush1.bf16.msra.mxu0 0
  %1424 = vmatprep.subr.bf16.mxu0 0
  %1425 = vmatpush1.bf16.msra.mxu0 0
  %1426 = vmatprep.subr.bf16.mxu0 0
  %1427 = vmatpush1.bf16.msra.mxu0 0
  %1428 = vmatprep.subr.bf16.mxu0 0
  %1429 = vmatpush1.bf16.msra.mxu0 0
  %1430 = vmatprep.mubr.bf16.mxu0 0
  %1431 = vmatmul.mubr.bf16.gmra.mrb[0].mxu0 %v1393
  %v1432 = vpop.f32.mrb[0].mxu0
  %v1433 = vadd.f32 0.0, %v1432
  %v1434 = vpop.f32.mrb[0].mxu0
  %v1435 = vpop.f32.mrb[0].mxu0
  %v1436 = vadd.f32 0.0, %v1435
  %v1437 = vpop.f32.mrb[0].mxu0
  %1438 = vdwg.mxu0
  %1441 = vrot.lane.b32.xlu0 %v1198, 8
  %v1442 = vpop.permute.xlu0 %1441
  %1443 = vrot.lane.b32.xlu0 %v1201, 8
  %v1444 = vpop.permute.xlu0 %1443
  %1449 = vrot.lane.b32.xlu0 %v1292, 16
  %v1450 = vpop.permute.xlu0 %1449
  %1451 = vrot.lane.b32.xlu0 %v1295, 16
  %v1452 = vpop.permute.xlu0 %1451
  %1457 = vrot.lane.b32.xlu0 %v1386, 24
  %v1458 = vpop.permute.xlu0 %1457
  %1459 = vrot.lane.b32.xlu0 %v1389, 24
  %v1460 = vpop.permute.xlu0 %1459
  %v1463 = vsel %vm491, %v1104, %v1442
  %v1464 = vsel %vm491, %v1107, %v1444
  %vm1465 = vcmask 130048
  %v1466 = vsel %vm1465, %v1463, %v1450
  %v1467 = vsel %vm1465, %v1464, %v1452
  %vm1468 = vcmask 195584
  %v1469 = vsel %vm1468, %v1466, %v1458
  %v1470 = vsel %vm1468, %v1467, %v1460
  %1473 = vrot.lane.b32.xlu0 %v1245, 8
  %v1474 = vpop.permute.xlu0 %1473
  %1475 = vrot.lane.b32.xlu0 %v1248, 8
  %v1476 = vpop.permute.xlu0 %1475
  %1481 = vrot.lane.b32.xlu0 %v1339, 16
  %v1482 = vpop.permute.xlu0 %1481
  %1483 = vrot.lane.b32.xlu0 %v1342, 16
  %v1484 = vpop.permute.xlu0 %1483
  %1489 = vrot.lane.b32.xlu0 %v1433, 24
  %v1490 = vpop.permute.xlu0 %1489
  %1491 = vrot.lane.b32.xlu0 %v1436, 24
  %v1492 = vpop.permute.xlu0 %1491
  %v1495 = vsel %vm491, %v1151, %v1474
  %v1496 = vsel %vm491, %v1154, %v1476
  %v1497 = vsel %vm1465, %v1495, %v1482
  %v1498 = vsel %vm1465, %v1496, %v1484
  %v1499 = vsel %vm1468, %v1497, %v1490
  %v1500 = vsel %vm1468, %v1498, %v1492
  %v1503 = vrot.slane %v1499, 4
  %v1504 = vrot.slane %v1500, 4
  %v1505 = vsel %vm344, %v1503, %v1504
  %v1508 = vsel %vm344, %v1470, %v1503
  %v1509 = vpack.c.bf16 %v1508, %v1469
  %v1510 = vpack.c.bf16 %v1505, %v1505
  %v1511 = vld [vmem:[%s7] sm:$0xf]
  %v1512 = vld [vmem:[%s7 + $0x4] sm:$0xf]
  %v1513 = vld [vmem:[%s7 + $0x8] sm:$0xf]
  %v1514 = vld [vmem:[%s7 + $0xc] sm:$0xf]
  %v1515 = vld [vmem:[%s8] sm:$0x1]
  %v1517 = vlaneseq
  %v1518 = vshrl.u32 %v1517, 7
  %v1519 = vsub.s32 0, %v1518
  %v1520 = vrot.slane %v1515, %v1519
  %v1526 = vunpack.c.l.b16 %v1511
  %v1527 = vunpack.c.l.b16 %v1512
  %v1528 = vunpack.c.l.b16 %v1513
  %v1529 = vunpack.c.l.b16 %v1514
  %v1530 = vpack.c.b16 %v1527, %v1526
  %v1531 = vpack.c.b16 %v1529, %v1528
  %v1535 = vsel %vm62, %v1509, 0
  %v1538 = vsel %vm62, %v1510, 0
  %1540 = vmatprep.subr.bf16.mxu0 0
  %1541 = vmatpush1.bf16.msra.mxu0 %v1530
  %1542 = vmatprep.subr.bf16.mxu0 0
  %1543 = vmatpush1.bf16.msra.mxu0 %v1531
  %1544 = vmatprep.subr.bf16.mxu0 0
  %1545 = vmatpush1.bf16.msra.mxu0 0
  %1546 = vmatprep.subr.bf16.mxu0 0
  %1547 = vmatpush1.bf16.msra.mxu0 0
  %1548 = vmatprep.subr.bf16.mxu0 0
  %1549 = vmatpush1.bf16.msra.mxu0 0
  %1550 = vmatprep.subr.bf16.mxu0 0
  %1551 = vmatpush1.bf16.msra.mxu0 0
  %1552 = vmatprep.subr.bf16.mxu0 0
  %1553 = vmatpush1.bf16.msra.mxu0 0
  %1554 = vmatprep.subr.bf16.mxu0 0
  %1555 = vmatpush1.bf16.msra.mxu0 0
  %1556 = vmatprep.subr.bf16.mxu0 0
  %1557 = vmatpush1.bf16.msra.mxu0 0
  %1558 = vmatprep.subr.bf16.mxu0 0
  %1559 = vmatpush1.bf16.msra.mxu0 0
  %1560 = vmatprep.subr.bf16.mxu0 0
  %1561 = vmatpush1.bf16.msra.mxu0 0
  %1562 = vmatprep.subr.bf16.mxu0 0
  %1563 = vmatpush1.bf16.msra.mxu0 0
  %1564 = vmatprep.subr.bf16.mxu0 0
  %1565 = vmatpush1.bf16.msra.mxu0 0
  %1566 = vmatprep.subr.bf16.mxu0 0
  %1567 = vmatpush1.bf16.msra.mxu0 0
  %1568 = vmatprep.subr.bf16.mxu0 0
  %1569 = vmatpush1.bf16.msra.mxu0 0
  %1570 = vmatprep.subr.bf16.mxu0 0
  %1571 = vmatpush1.bf16.msra.mxu0 0
  %1572 = vmatprep.mubr.bf16.mxu0 0
  %1573 = vmatmul.mubr.bf16.gmra.mrb[0].mxu0 %v1535
  %v1574 = vpop.f32.mrb[0].mxu0
  %v1575 = vadd.f32 %v1520, %v1574
  %v1576 = vpop.f32.mrb[0].mxu0
  %v1577 = vpop.f32.mrb[0].mxu0
  %v1578 = vadd.f32 %v1520, %v1577
  %v1579 = vpop.f32.mrb[0].mxu0
  %1580 = vmatprep.mubr.bf16.mxu0 0
  %1581 = vmatmul.mubr.bf16.gmra.mrb[0].mxu0 %v1538
  %v1582 = vpop.f32.mrb[0].mxu0
  %v1583 = vadd.f32 %v1520, %v1582
  %v1584 = vpop.f32.mrb[0].mxu0
  %v1585 = vpop.f32.mrb[0].mxu0
  %v1586 = vpop.f32.mrb[0].mxu0
  %1587 = vdwg.mxu0
  %v1588 = vadd.f32 %v57, %v1575
  %v1589 = vadd.f32 %v58, %v1578
  %v1590 = vadd.f32 %v59, %v1583
  %v1591 = vld [vmem:[%s11] sm:$0x1]
  %v1592 = vld [vmem:[%s12] sm:$0x1]
  %v1593 = vsel %vm62, %v1588, 0.0
  %1594 = vadd.xlane.f32.xlu0 %v1593
  %v1595 = vpop.xlane.xlu0 %1594
  %v1596 = vsel %vm62, %v1589, 0.0
  %1597 = vadd.xlane.f32.xlu0 %v1596
  %v1598 = vpop.xlane.xlu0 %1597
  %v1599 = vsel %vm62, %v1590, 0.0
  %1600 = vadd.xlane.f32.xlu0 %v1599
  %v1601 = vpop.xlane.xlu0 %1600
  %v1602 = vmul.f32 %v1595, %v72
  %v1603 = vmul.f32 %v1598, %v72
  %v1604 = vmul.f32 %v1601, %v72
  %v1605 = vsub.f32 %v1588, %v1602
  %v1606 = vsub.f32 %v1589, %v1603
  %v1607 = vsub.f32 %v1590, %v1604
  %v1608 = vmul.f32 %v1605, %v1605
  %v1609 = vmul.f32 %v1606, %v1606
  %v1610 = vmul.f32 %v1607, %v1607
  %v1611 = vsel %vm62, %v1608, 0.0
  %1612 = vadd.xlane.f32.xlu0 %v1611
  %v1613 = vpop.xlane.xlu0 %1612
  %v1614 = vsel %vm62, %v1609, 0.0
  %1615 = vadd.xlane.f32.xlu0 %v1614
  %v1616 = vpop.xlane.xlu0 %1615
  %v1617 = vsel %vm62, %v1610, 0.0
  %1618 = vadd.xlane.f32.xlu0 %v1617
  %v1619 = vpop.xlane.xlu0 %1618
  %v1620 = vmul.f32 %v1613, %v72
  %v1621 = vmul.f32 %v1616, %v72
  %v1622 = vmul.f32 %v1619, %v72
  %v1623 = vadd.f32 %v1620, 1e-05
  %v1624 = vadd.f32 %v1621, 1e-05
  %v1625 = vadd.f32 %v1622, 1e-05
  %v1626 = vrsqrt.pop %v1623
  %v1627 = vrsqrt.pop %v1624
  %v1628 = vrsqrt.pop %v1625
  %v1629 = vmul.f32 %v1605, %v1626
  %v1630 = vmul.f32 %v1606, %v1627
  %v1631 = vmul.f32 %v1607, %v1628
  %v1633 = vlaneseq
  %v1634 = vshrl.u32 %v1633, 7
  %v1635 = vsub.s32 0, %v1634
  %v1636 = vrot.slane %v1591, %v1635
  %v1638 = vmul.f32 %v1629, %v1636
  %v1639 = vmul.f32 %v1630, %v1636
  %v1640 = vmul.f32 %v1631, %v1636
  %v1642 = vlaneseq
  %v1643 = vshrl.u32 %v1642, 7
  %v1644 = vsub.s32 0, %v1643
  %v1645 = vrot.slane %v1592, %v1644
  %v1647 = vadd.f32 %v1638, %v1645
  %v1648 = vadd.f32 %v1639, %v1645
  %v1649 = vadd.f32 %v1640, %v1645
  %v1650 = vpack.c.bf16 %v1648, %v1647
  %v1651 = vpack.c.bf16 %v1649, %v1649
  %v1652 = vld [vmem:[%s13] sm:$0xff]
  %v1653 = vld [vmem:[%s13 + $0x8] sm:$0xff]
  %v1654 = vld [vmem:[%s13 + $0x10] sm:$0xff]
  %v1655 = vld [vmem:[%s13 + $0x18] sm:$0xff]
  %v1656 = vld [vmem:[%s13 + $0x20] sm:$0xff]
  %v1657 = vld [vmem:[%s13 + $0x28] sm:$0xff]
  %v1658 = vld [vmem:[%s13 + $0x30] sm:$0xff]
  %v1659 = vld [vmem:[%s13 + $0x38] sm:$0xff]
  %v1660 = vld [vmem:[%s13 + $0x40] sm:$0xff]
  %v1661 = vld [vmem:[%s13 + $0x48] sm:$0xff]
  %v1662 = vld [vmem:[%s13 + $0x50] sm:$0xff]
  %v1663 = vld [vmem:[%s13 + $0x58] sm:$0xff]
  %v1664 = vld [vmem:[%s13 + $0x60] sm:$0xff]
  %v1665 = vld [vmem:[%s13 + $0x68] sm:$0xff]
  %v1666 = vld [vmem:[%s13 + $0x70] sm:$0xff]
  %v1667 = vld [vmem:[%s13 + $0x78] sm:$0xff]
  %v1668 = vld [vmem:[%s13 + $0x80] sm:$0xff]
  %v1669 = vld [vmem:[%s13 + $0x88] sm:$0xff]
  %v1670 = vld [vmem:[%s13 + $0x90] sm:$0xff]
  %v1671 = vld [vmem:[%s13 + $0x98] sm:$0xff]
  %v1672 = vld [vmem:[%s13 + $0xa0] sm:$0xff]
  %v1673 = vld [vmem:[%s13 + $0xa8] sm:$0xff]
  %v1674 = vld [vmem:[%s13 + $0xb0] sm:$0xff]
  %v1675 = vld [vmem:[%s13 + $0xb8] sm:$0xff]
  %v1676 = vld [vmem:[%s13 + $0xc0] sm:$0xff]
  %v1677 = vld [vmem:[%s13 + $0xc8] sm:$0xff]
  %v1678 = vld [vmem:[%s13 + $0xd0] sm:$0xff]
  %v1679 = vld [vmem:[%s13 + $0xd8] sm:$0xff]
  %v1680 = vld [vmem:[%s13 + $0xe0] sm:$0xff]
  %v1681 = vld [vmem:[%s13 + $0xe8] sm:$0xff]
  %v1682 = vld [vmem:[%s13 + $0xf0] sm:$0xff]
  %v1683 = vld [vmem:[%s13 + $0xf8] sm:$0xff]
  %v1684 = vld [vmem:[%s14] sm:$0xff]
  %v1685 = vld [vmem:[%s14 + $0x8] sm:$0xff]
  %v1688 = vlaneseq
  %v1689 = vshrl.u32 %v1688, 7
  %v1690 = vsub.s32 0, %v1689
  %v1691 = vrot.slane %v1684, %v1690
  %v1692 = vlaneseq
  %v1693 = vshrl.u32 %v1692, 7
  %v1694 = vsub.s32 1, %v1693
  %v1695 = vrot.slane %v1684, %v1694
  %v1696 = vlaneseq
  %v1697 = vshrl.u32 %v1696, 7
  %v1698 = vsub.s32 2, %v1697
  %v1699 = vrot.slane %v1684, %v1698
  %v1700 = vlaneseq
  %v1701 = vshrl.u32 %v1700, 7
  %v1702 = vsub.s32 3, %v1701
  %v1703 = vrot.slane %v1684, %v1702
  %v1704 = vlaneseq
  %v1705 = vshrl.u32 %v1704, 7
  %v1706 = vsub.s32 4, %v1705
  %v1707 = vrot.slane %v1684, %v1706
  %v1708 = vlaneseq
  %v1709 = vshrl.u32 %v1708, 7
  %v1710 = vsub.s32 5, %v1709
  %v1711 = vrot.slane %v1684, %v1710
  %v1712 = vlaneseq
  %v1713 = vshrl.u32 %v1712, 7
  %v1714 = vsub.s32 6, %v1713
  %v1715 = vrot.slane %v1684, %v1714
  %v1716 = vlaneseq
  %v1717 = vshrl.u32 %v1716, 7
  %v1718 = vsub.s32 7, %v1717
  %v1719 = vrot.slane %v1684, %v1718
  %v1720 = vlaneseq
  %v1721 = vshrl.u32 %v1720, 7
  %v1722 = vsub.s32 0, %v1721
  %v1723 = vrot.slane %v1685, %v1722
  %v1724 = vlaneseq
  %v1725 = vshrl.u32 %v1724, 7
  %v1726 = vsub.s32 1, %v1725
  %v1727 = vrot.slane %v1685, %v1726
  %v1728 = vlaneseq
  %v1729 = vshrl.u32 %v1728, 7
  %v1730 = vsub.s32 2, %v1729
  %v1731 = vrot.slane %v1685, %v1730
  %v1732 = vlaneseq
  %v1733 = vshrl.u32 %v1732, 7
  %v1734 = vsub.s32 3, %v1733
  %v1735 = vrot.slane %v1685, %v1734
  %v1736 = vlaneseq
  %v1737 = vshrl.u32 %v1736, 7
  %v1738 = vsub.s32 4, %v1737
  %v1739 = vrot.slane %v1685, %v1738
  %v1740 = vlaneseq
  %v1741 = vshrl.u32 %v1740, 7
  %v1742 = vsub.s32 5, %v1741
  %v1743 = vrot.slane %v1685, %v1742
  %v1744 = vlaneseq
  %v1745 = vshrl.u32 %v1744, 7
  %v1746 = vsub.s32 6, %v1745
  %v1747 = vrot.slane %v1685, %v1746
  %v1748 = vlaneseq
  %v1749 = vshrl.u32 %v1748, 7
  %v1750 = vsub.s32 7, %v1749
  %v1751 = vrot.slane %v1685, %v1750
  %v1800 = vunpack.c.l.b16 %v1652
  %v1801 = vunpack.c.h.b16 %v1652
  %v1802 = vunpack.c.l.b16 %v1653
  %v1803 = vunpack.c.h.b16 %v1653
  %v1804 = vunpack.c.l.b16 %v1654
  %v1805 = vunpack.c.h.b16 %v1654
  %v1806 = vunpack.c.l.b16 %v1655
  %v1807 = vunpack.c.h.b16 %v1655
  %v1808 = vunpack.c.l.b16 %v1656
  %v1809 = vunpack.c.h.b16 %v1656
  %v1810 = vunpack.c.l.b16 %v1657
  %v1811 = vunpack.c.h.b16 %v1657
  %v1812 = vunpack.c.l.b16 %v1658
  %v1813 = vunpack.c.h.b16 %v1658
  %v1814 = vunpack.c.l.b16 %v1659
  %v1815 = vunpack.c.h.b16 %v1659
  %v1816 = vunpack.c.l.b16 %v1660
  %v1817 = vunpack.c.h.b16 %v1660
  %v1818 = vunpack.c.l.b16 %v1661
  %v1819 = vunpack.c.h.b16 %v1661
  %v1820 = vunpack.c.l.b16 %v1662
  %v1821 = vunpack.c.h.b16 %v1662
  %v1822 = vunpack.c.l.b16 %v1663
  %v1823 = vunpack.c.h.b16 %v1663
  %v1824 = vunpack.c.l.b16 %v1664
  %v1825 = vunpack.c.h.b16 %v1664
  %v1826 = vunpack.c.l.b16 %v1665
  %v1827 = vunpack.c.h.b16 %v1665
  %v1828 = vunpack.c.l.b16 %v1666
  %v1829 = vunpack.c.h.b16 %v1666
  %v1830 = vunpack.c.l.b16 %v1667
  %v1831 = vunpack.c.h.b16 %v1667
  %v1832 = vunpack.c.l.b16 %v1668
  %v1833 = vunpack.c.h.b16 %v1668
  %v1834 = vunpack.c.l.b16 %v1669
  %v1835 = vunpack.c.h.b16 %v1669
  %v1836 = vunpack.c.l.b16 %v1670
  %v1837 = vunpack.c.h.b16 %v1670
  %v1838 = vunpack.c.l.b16 %v1671
  %v1839 = vunpack.c.h.b16 %v1671
  %v1840 = vunpack.c.l.b16 %v1672
  %v1841 = vunpack.c.h.b16 %v1672
  %v1842 = vunpack.c.l.b16 %v1673
  %v1843 = vunpack.c.h.b16 %v1673
  %v1844 = vunpack.c.l.b16 %v1674
  %v1845 = vunpack.c.h.b16 %v1674
  %v1846 = vunpack.c.l.b16 %v1675
  %v1847 = vunpack.c.h.b16 %v1675
  %v1848 = vunpack.c.l.b16 %v1676
  %v1849 = vunpack.c.h.b16 %v1676
  %v1850 = vunpack.c.l.b16 %v1677
  %v1851 = vunpack.c.h.b16 %v1677
  %v1852 = vunpack.c.l.b16 %v1678
  %v1853 = vunpack.c.h.b16 %v1678
  %v1854 = vunpack.c.l.b16 %v1679
  %v1855 = vunpack.c.h.b16 %v1679
  %v1856 = vunpack.c.l.b16 %v1680
  %v1857 = vunpack.c.h.b16 %v1680
  %v1858 = vunpack.c.l.b16 %v1681
  %v1859 = vunpack.c.h.b16 %v1681
  %v1860 = vunpack.c.l.b16 %v1682
  %v1861 = vunpack.c.h.b16 %v1682
  %v1862 = vunpack.c.l.b16 %v1683
  %v1863 = vunpack.c.h.b16 %v1683
  %v1864 = vpack.c.b16 %v1816, %v1800
  %v1865 = vpack.c.b16 %v1817, %v1801
  %v1866 = vpack.c.b16 %v1818, %v1802
  %v1867 = vpack.c.b16 %v1819, %v1803
  %v1868 = vpack.c.b16 %v1820, %v1804
  %v1869 = vpack.c.b16 %v1821, %v1805
  %v1870 = vpack.c.b16 %v1822, %v1806
  %v1871 = vpack.c.b16 %v1823, %v1807
  %v1872 = vpack.c.b16 %v1824, %v1808
  %v1873 = vpack.c.b16 %v1825, %v1809
  %v1874 = vpack.c.b16 %v1826, %v1810
  %v1875 = vpack.c.b16 %v1827, %v1811
  %v1876 = vpack.c.b16 %v1828, %v1812
  %v1877 = vpack.c.b16 %v1829, %v1813
  %v1878 = vpack.c.b16 %v1830, %v1814
  %v1879 = vpack.c.b16 %v1831, %v1815
  %v1880 = vpack.c.b16 %v1848, %v1832
  %v1881 = vpack.c.b16 %v1849, %v1833
  %v1882 = vpack.c.b16 %v1850, %v1834
  %v1883 = vpack.c.b16 %v1851, %v1835
  %v1884 = vpack.c.b16 %v1852, %v1836
  %v1885 = vpack.c.b16 %v1853, %v1837
  %v1886 = vpack.c.b16 %v1854, %v1838
  %v1887 = vpack.c.b16 %v1855, %v1839
  %v1888 = vpack.c.b16 %v1856, %v1840
  %v1889 = vpack.c.b16 %v1857, %v1841
  %v1890 = vpack.c.b16 %v1858, %v1842
  %v1891 = vpack.c.b16 %v1859, %v1843
  %v1892 = vpack.c.b16 %v1860, %v1844
  %v1893 = vpack.c.b16 %v1861, %v1845
  %v1894 = vpack.c.b16 %v1862, %v1846
  %v1895 = vpack.c.b16 %v1863, %v1847
  %v1929 = vsel %vm62, %v1650, 0
  %v1932 = vsel %vm62, %v1651, 0
  %1934 = vmatprep.subr.bf16.mxu0 %v1865
  %1935 = vmatpush1.bf16.msra.mxu0 %v1864
  %1936 = vmatprep.subr.bf16.mxu0 %v1881
  %1937 = vmatpush1.bf16.msra.mxu0 %v1880
  %1938 = vmatprep.subr.bf16.mxu0 0
  %1939 = vmatpush1.bf16.msra.mxu0 0
  %1940 = vmatprep.subr.bf16.mxu0 0
  %1941 = vmatpush1.bf16.msra.mxu0 0
  %1942 = vmatprep.subr.bf16.mxu0 0
  %1943 = vmatpush1.bf16.msra.mxu0 0
  %1944 = vmatprep.subr.bf16.mxu0 0
  %1945 = vmatpush1.bf16.msra.mxu0 0
  %1946 = vmatprep.subr.bf16.mxu0 0
  %1947 = vmatpush1.bf16.msra.mxu0 0
  %1948 = vmatprep.subr.bf16.mxu0 0
  %1949 = vmatpush1.bf16.msra.mxu0 0
  %1950 = vmatprep.subr.bf16.mxu0 0
  %1951 = vmatpush1.bf16.msra.mxu0 0
  %1952 = vmatprep.subr.bf16.mxu0 0
  %1953 = vmatpush1.bf16.msra.mxu0 0
  %1954 = vmatprep.subr.bf16.mxu0 0
  %1955 = vmatpush1.bf16.msra.mxu0 0
  %1956 = vmatprep.subr.bf16.mxu0 0
  %1957 = vmatpush1.bf16.msra.mxu0 0
  %1958 = vmatprep.subr.bf16.mxu0 0
  %1959 = vmatpush1.bf16.msra.mxu0 0
  %1960 = vmatprep.subr.bf16.mxu0 0
  %1961 = vmatpush1.bf16.msra.mxu0 0
  %1962 = vmatprep.subr.bf16.mxu0 0
  %1963 = vmatpush1.bf16.msra.mxu0 0
  %1964 = vmatprep.subr.bf16.mxu0 0
  %1965 = vmatpush1.bf16.msra.mxu0 0
  %1966 = vmatprep.mubr.bf16.mxu0 0
  %1967 = vmatmul.mubr.bf16.gmra.mrb[0].mxu0 %v1929
  %v1968 = vpop.f32.mrb[0].mxu0
  %v1969 = vadd.f32 %v1691, %v1968
  %v1970 = vpop.f32.mrb[0].mxu0
  %v1971 = vadd.f32 %v1695, %v1970
  %v1972 = vpop.f32.mrb[0].mxu0
  %v1973 = vadd.f32 %v1691, %v1972
  %v1974 = vpop.f32.mrb[0].mxu0
  %v1975 = vadd.f32 %v1695, %v1974
  %1976 = vmatprep.mubr.bf16.mxu0 0
  %1977 = vmatmul.mubr.bf16.gmra.mrb[0].mxu0 %v1932
  %v1978 = vpop.f32.mrb[0].mxu0
  %v1979 = vadd.f32 %v1691, %v1978
  %v1980 = vpop.f32.mrb[0].mxu0
  %v1981 = vadd.f32 %v1695, %v1980
  %v1982 = vpop.f32.mrb[0].mxu0
  %v1983 = vpop.f32.mrb[0].mxu0
  %1984 = vdwg.mxu0
  %1985 = vmatprep.subr.bf16.mxu0 %v1867
  %1986 = vmatpush1.bf16.msra.mxu0 %v1866
  %1987 = vmatprep.subr.bf16.mxu0 %v1883
  %1988 = vmatpush1.bf16.msra.mxu0 %v1882
  %1989 = vmatprep.subr.bf16.mxu0 0
  %1990 = vmatpush1.bf16.msra.mxu0 0
  %1991 = vmatprep.subr.bf16.mxu0 0
  %1992 = vmatpush1.bf16.msra.mxu0 0
  %1993 = vmatprep.subr.bf16.mxu0 0
  %1994 = vmatpush1.bf16.msra.mxu0 0
  %1995 = vmatprep.subr.bf16.mxu0 0
  %1996 = vmatpush1.bf16.msra.mxu0 0
  %1997 = vmatprep.subr.bf16.mxu0 0
  %1998 = vmatpush1.bf16.msra.mxu0 0
  %1999 = vmatprep.subr.bf16.mxu0 0
  %2000 = vmatpush1.bf16.msra.mxu0 0
  %2001 = vmatprep.subr.bf16.mxu0 0
  %2002 = vmatpush1.bf16.msra.mxu0 0
  %2003 = vmatprep.subr.bf16.mxu0 0
  %2004 = vmatpush1.bf16.msra.mxu0 0
  %2005 = vmatprep.subr.bf16.mxu0 0
  %2006 = vmatpush1.bf16.msra.mxu0 0
  %2007 = vmatprep.subr.bf16.mxu0 0
  %2008 = vmatpush1.bf16.msra.mxu0 0
  %2009 = vmatprep.subr.bf16.mxu0 0
  %2010 = vmatpush1.bf16.msra.mxu0 0
  %2011 = vmatprep.subr.bf16.mxu0 0
  %2012 = vmatpush1.bf16.msra.mxu0 0
  %2013 = vmatprep.subr.bf16.mxu0 0
  %2014 = vmatpush1.bf16.msra.mxu0 0
  %2015 = vmatprep.subr.bf16.mxu0 0
  %2016 = vmatpush1.bf16.msra.mxu0 0
  %2017 = vmatprep.mubr.bf16.mxu0 0
  %2018 = vmatmul.mubr.bf16.gmra.mrb[0].mxu0 %v1929
  %v2019 = vpop.f32.mrb[0].mxu0
  %v2020 = vadd.f32 %v1699, %v2019
  %v2021 = vpop.f32.mrb[0].mxu0
  %v2022 = vadd.f32 %v1703, %v2021
  %v2023 = vpop.f32.mrb[0].mxu0
  %v2024 = vadd.f32 %v1699, %v2023
  %v2025 = vpop.f32.mrb[0].mxu0
  %v2026 = vadd.f32 %v1703, %v2025
  %2027 = vmatprep.mubr.bf16.mxu0 0
  %2028 = vmatmul.mubr.bf16.gmra.mrb[0].mxu0 %v1932
  %v2029 = vpop.f32.mrb[0].mxu0
  %v2030 = vadd.f32 %v1699, %v2029
  %v2031 = vpop.f32.mrb[0].mxu0
  %v2032 = vadd.f32 %v1703, %v2031
  %v2033 = vpop.f32.mrb[0].mxu0
  %v2034 = vpop.f32.mrb[0].mxu0
  %2035 = vdwg.mxu0
  %2036 = vmatprep.subr.bf16.mxu0 %v1869
  %2037 = vmatpush1.bf16.msra.mxu0 %v1868
  %2038 = vmatprep.subr.bf16.mxu0 %v1885
  %2039 = vmatpush1.bf16.msra.mxu0 %v1884
  %2040 = vmatprep.subr.bf16.mxu0 0
  %2041 = vmatpush1.bf16.msra.mxu0 0
  %2042 = vmatprep.subr.bf16.mxu0 0
  %2043 = vmatpush1.bf16.msra.mxu0 0
  %2044 = vmatprep.subr.bf16.mxu0 0
  %2045 = vmatpush1.bf16.msra.mxu0 0
  %2046 = vmatprep.subr.bf16.mxu0 0
  %2047 = vmatpush1.bf16.msra.mxu0 0
  %2048 = vmatprep.subr.bf16.mxu0 0
  %2049 = vmatpush1.bf16.msra.mxu0 0
  %2050 = vmatprep.subr.bf16.mxu0 0
  %2051 = vmatpush1.bf16.msra.mxu0 0
  %2052 = vmatprep.subr.bf16.mxu0 0
  %2053 = vmatpush1.bf16.msra.mxu0 0
  %2054 = vmatprep.subr.bf16.mxu0 0
  %2055 = vmatpush1.bf16.msra.mxu0 0
  %2056 = vmatprep.subr.bf16.mxu0 0
  %2057 = vmatpush1.bf16.msra.mxu0 0
  %2058 = vmatprep.subr.bf16.mxu0 0
  %2059 = vmatpush1.bf16.msra.mxu0 0
  %2060 = vmatprep.subr.bf16.mxu0 0
  %2061 = vmatpush1.bf16.msra.mxu0 0
  %2062 = vmatprep.subr.bf16.mxu0 0
  %2063 = vmatpush1.bf16.msra.mxu0 0
  %2064 = vmatprep.subr.bf16.mxu0 0
  %2065 = vmatpush1.bf16.msra.mxu0 0
  %2066 = vmatprep.subr.bf16.mxu0 0
  %2067 = vmatpush1.bf16.msra.mxu0 0
  %2068 = vmatprep.mubr.bf16.mxu0 0
  %2069 = vmatmul.mubr.bf16.gmra.mrb[0].mxu0 %v1929
  %v2070 = vpop.f32.mrb[0].mxu0
  %v2071 = vadd.f32 %v1707, %v2070
  %v2072 = vpop.f32.mrb[0].mxu0
  %v2073 = vadd.f32 %v1711, %v2072
  %v2074 = vpop.f32.mrb[0].mxu0
  %v2075 = vadd.f32 %v1707, %v2074
  %v2076 = vpop.f32.mrb[0].mxu0
  %v2077 = vadd.f32 %v1711, %v2076
  %2078 = vmatprep.mubr.bf16.mxu0 0
  %2079 = vmatmul.mubr.bf16.gmra.mrb[0].mxu0 %v1932
  %v2080 = vpop.f32.mrb[0].mxu0
  %v2081 = vadd.f32 %v1707, %v2080
  %v2082 = vpop.f32.mrb[0].mxu0
  %v2083 = vadd.f32 %v1711, %v2082
  %v2084 = vpop.f32.mrb[0].mxu0
  %v2085 = vpop.f32.mrb[0].mxu0
  %2086 = vdwg.mxu0
  %2087 = vmatprep.subr.bf16.mxu0 %v1871
  %2088 = vmatpush1.bf16.msra.mxu0 %v1870
  %2089 = vmatprep.subr.bf16.mxu0 %v1887
  %2090 = vmatpush1.bf16.msra.mxu0 %v1886
  %2091 = vmatprep.subr.bf16.mxu0 0
  %2092 = vmatpush1.bf16.msra.mxu0 0
  %2093 = vmatprep.subr.bf16.mxu0 0
  %2094 = vmatpush1.bf16.msra.mxu0 0
  %2095 = vmatprep.subr.bf16.mxu0 0
  %2096 = vmatpush1.bf16.msra.mxu0 0
  %2097 = vmatprep.subr.bf16.mxu0 0
  %2098 = vmatpush1.bf16.msra.mxu0 0
  %2099 = vmatprep.subr.bf16.mxu0 0
  %2100 = vmatpush1.bf16.msra.mxu0 0
  %2101 = vmatprep.subr.bf16.mxu0 0
  %2102 = vmatpush1.bf16.msra.mxu0 0
  %2103 = vmatprep.subr.bf16.mxu0 0
  %2104 = vmatpush1.bf16.msra.mxu0 0
  %2105 = vmatprep.subr.bf16.mxu0 0
  %2106 = vmatpush1.bf16.msra.mxu0 0
  %2107 = vmatprep.subr.bf16.mxu0 0
  %2108 = vmatpush1.bf16.msra.mxu0 0
  %2109 = vmatprep.subr.bf16.mxu0 0
  %2110 = vmatpush1.bf16.msra.mxu0 0
  %2111 = vmatprep.subr.bf16.mxu0 0
  %2112 = vmatpush1.bf16.msra.mxu0 0
  %2113 = vmatprep.subr.bf16.mxu0 0
  %2114 = vmatpush1.bf16.msra.mxu0 0
  %2115 = vmatprep.subr.bf16.mxu0 0
  %2116 = vmatpush1.bf16.msra.mxu0 0
  %2117 = vmatprep.subr.bf16.mxu0 0
  %2118 = vmatpush1.bf16.msra.mxu0 0
  %2119 = vmatprep.mubr.bf16.mxu0 0
  %2120 = vmatmul.mubr.bf16.gmra.mrb[0].mxu0 %v1929
  %v2121 = vpop.f32.mrb[0].mxu0
  %v2122 = vadd.f32 %v1715, %v2121
  %v2123 = vpop.f32.mrb[0].mxu0
  %v2124 = vadd.f32 %v1719, %v2123
  %v2125 = vpop.f32.mrb[0].mxu0
  %v2126 = vadd.f32 %v1715, %v2125
  %v2127 = vpop.f32.mrb[0].mxu0
  %v2128 = vadd.f32 %v1719, %v2127
  %2129 = vmatprep.mubr.bf16.mxu0 0
  %2130 = vmatmul.mubr.bf16.gmra.mrb[0].mxu0 %v1932
  %v2131 = vpop.f32.mrb[0].mxu0
  %v2132 = vadd.f32 %v1715, %v2131
  %v2133 = vpop.f32.mrb[0].mxu0
  %v2134 = vadd.f32 %v1719, %v2133
  %v2135 = vpop.f32.mrb[0].mxu0
  %v2136 = vpop.f32.mrb[0].mxu0
  %2137 = vdwg.mxu0
  %2138 = vmatprep.subr.bf16.mxu0 %v1873
  %2139 = vmatpush1.bf16.msra.mxu0 %v1872
  %2140 = vmatprep.subr.bf16.mxu0 %v1889
  %2141 = vmatpush1.bf16.msra.mxu0 %v1888
  %2142 = vmatprep.subr.bf16.mxu0 0
  %2143 = vmatpush1.bf16.msra.mxu0 0
  %2144 = vmatprep.subr.bf16.mxu0 0
  %2145 = vmatpush1.bf16.msra.mxu0 0
  %2146 = vmatprep.subr.bf16.mxu0 0
  %2147 = vmatpush1.bf16.msra.mxu0 0
  %2148 = vmatprep.subr.bf16.mxu0 0
  %2149 = vmatpush1.bf16.msra.mxu0 0
  %2150 = vmatprep.subr.bf16.mxu0 0
  %2151 = vmatpush1.bf16.msra.mxu0 0
  %2152 = vmatprep.subr.bf16.mxu0 0
  %2153 = vmatpush1.bf16.msra.mxu0 0
  %2154 = vmatprep.subr.bf16.mxu0 0
  %2155 = vmatpush1.bf16.msra.mxu0 0
  %2156 = vmatprep.subr.bf16.mxu0 0
  %2157 = vmatpush1.bf16.msra.mxu0 0
  %2158 = vmatprep.subr.bf16.mxu0 0
  %2159 = vmatpush1.bf16.msra.mxu0 0
  %2160 = vmatprep.subr.bf16.mxu0 0
  %2161 = vmatpush1.bf16.msra.mxu0 0
  %2162 = vmatprep.subr.bf16.mxu0 0
  %2163 = vmatpush1.bf16.msra.mxu0 0
  %2164 = vmatprep.subr.bf16.mxu0 0
  %2165 = vmatpush1.bf16.msra.mxu0 0
  %2166 = vmatprep.subr.bf16.mxu0 0
  %2167 = vmatpush1.bf16.msra.mxu0 0
  %2168 = vmatprep.subr.bf16.mxu0 0
  %2169 = vmatpush1.bf16.msra.mxu0 0
  %2170 = vmatprep.mubr.bf16.mxu0 0
  %2171 = vmatmul.mubr.bf16.gmra.mrb[0].mxu0 %v1929
  %v2172 = vpop.f32.mrb[0].mxu0
  %v2173 = vadd.f32 %v1723, %v2172
  %v2174 = vpop.f32.mrb[0].mxu0
  %v2175 = vadd.f32 %v1727, %v2174
  %v2176 = vpop.f32.mrb[0].mxu0
  %v2177 = vadd.f32 %v1723, %v2176
  %v2178 = vpop.f32.mrb[0].mxu0
  %v2179 = vadd.f32 %v1727, %v2178
  %2180 = vmatprep.mubr.bf16.mxu0 0
  %2181 = vmatmul.mubr.bf16.gmra.mrb[0].mxu0 %v1932
  %v2182 = vpop.f32.mrb[0].mxu0
  %v2183 = vadd.f32 %v1723, %v2182
  %v2184 = vpop.f32.mrb[0].mxu0
  %v2185 = vadd.f32 %v1727, %v2184
  %v2186 = vpop.f32.mrb[0].mxu0
  %v2187 = vpop.f32.mrb[0].mxu0
  %2188 = vdwg.mxu0
  %2189 = vmatprep.subr.bf16.mxu0 %v1875
  %2190 = vmatpush1.bf16.msra.mxu0 %v1874
  %2191 = vmatprep.subr.bf16.mxu0 %v1891
  %2192 = vmatpush1.bf16.msra.mxu0 %v1890
  %2193 = vmatprep.subr.bf16.mxu0 0
  %2194 = vmatpush1.bf16.msra.mxu0 0
  %2195 = vmatprep.subr.bf16.mxu0 0
  %2196 = vmatpush1.bf16.msra.mxu0 0
  %2197 = vmatprep.subr.bf16.mxu0 0
  %2198 = vmatpush1.bf16.msra.mxu0 0
  %2199 = vmatprep.subr.bf16.mxu0 0
  %2200 = vmatpush1.bf16.msra.mxu0 0
  %2201 = vmatprep.subr.bf16.mxu0 0
  %2202 = vmatpush1.bf16.msra.mxu0 0
  %2203 = vmatprep.subr.bf16.mxu0 0
  %2204 = vmatpush1.bf16.msra.mxu0 0
  %2205 = vmatprep.subr.bf16.mxu0 0
  %2206 = vmatpush1.bf16.msra.mxu0 0
  %2207 = vmatprep.subr.bf16.mxu0 0
  %2208 = vmatpush1.bf16.msra.mxu0 0
  %2209 = vmatprep.subr.bf16.mxu0 0
  %2210 = vmatpush1.bf16.msra.mxu0 0
  %2211 = vmatprep.subr.bf16.mxu0 0
  %2212 = vmatpush1.bf16.msra.mxu0 0
  %2213 = vmatprep.subr.bf16.mxu0 0
  %2214 = vmatpush1.bf16.msra.mxu0 0
  %2215 = vmatprep.subr.bf16.mxu0 0
  %2216 = vmatpush1.bf16.msra.mxu0 0
  %2217 = vmatprep.subr.bf16.mxu0 0
  %2218 = vmatpush1.bf16.msra.mxu0 0
  %2219 = vmatprep.subr.bf16.mxu0 0
  %2220 = vmatpush1.bf16.msra.mxu0 0
  %2221 = vmatprep.mubr.bf16.mxu0 0
  %2222 = vmatmul.mubr.bf16.gmra.mrb[0].mxu0 %v1929
  %v2223 = vpop.f32.mrb[0].mxu0
  %v2224 = vadd.f32 %v1731, %v2223
  %v2225 = vpop.f32.mrb[0].mxu0
  %v2226 = vadd.f32 %v1735, %v2225
  %v2227 = vpop.f32.mrb[0].mxu0
  %v2228 = vadd.f32 %v1731, %v2227
  %v2229 = vpop.f32.mrb[0].mxu0
  %v2230 = vadd.f32 %v1735, %v2229
  %2231 = vmatprep.mubr.bf16.mxu0 0
  %2232 = vmatmul.mubr.bf16.gmra.mrb[0].mxu0 %v1932
  %v2233 = vpop.f32.mrb[0].mxu0
  %v2234 = vadd.f32 %v1731, %v2233
  %v2235 = vpop.f32.mrb[0].mxu0
  %v2236 = vadd.f32 %v1735, %v2235
  %v2237 = vpop.f32.mrb[0].mxu0
  %v2238 = vpop.f32.mrb[0].mxu0
  %2239 = vdwg.mxu0
  %2240 = vmatprep.subr.bf16.mxu0 %v1877
  %2241 = vmatpush1.bf16.msra.mxu0 %v1876
  %2242 = vmatprep.subr.bf16.mxu0 %v1893
  %2243 = vmatpush1.bf16.msra.mxu0 %v1892
  %2244 = vmatprep.subr.bf16.mxu0 0
  %2245 = vmatpush1.bf16.msra.mxu0 0
  %2246 = vmatprep.subr.bf16.mxu0 0
  %2247 = vmatpush1.bf16.msra.mxu0 0
  %2248 = vmatprep.subr.bf16.mxu0 0
  %2249 = vmatpush1.bf16.msra.mxu0 0
  %2250 = vmatprep.subr.bf16.mxu0 0
  %2251 = vmatpush1.bf16.msra.mxu0 0
  %2252 = vmatprep.subr.bf16.mxu0 0
  %2253 = vmatpush1.bf16.msra.mxu0 0
  %2254 = vmatprep.subr.bf16.mxu0 0
  %2255 = vmatpush1.bf16.msra.mxu0 0
  %2256 = vmatprep.subr.bf16.mxu0 0
  %2257 = vmatpush1.bf16.msra.mxu0 0
  %2258 = vmatprep.subr.bf16.mxu0 0
  %2259 = vmatpush1.bf16.msra.mxu0 0
  %2260 = vmatprep.subr.bf16.mxu0 0
  %2261 = vmatpush1.bf16.msra.mxu0 0
  %2262 = vmatprep.subr.bf16.mxu0 0
  %2263 = vmatpush1.bf16.msra.mxu0 0
  %2264 = vmatprep.subr.bf16.mxu0 0
  %2265 = vmatpush1.bf16.msra.mxu0 0
  %2266 = vmatprep.subr.bf16.mxu0 0
  %2267 = vmatpush1.bf16.msra.mxu0 0
  %2268 = vmatprep.subr.bf16.mxu0 0
  %2269 = vmatpush1.bf16.msra.mxu0 0
  %2270 = vmatprep.subr.bf16.mxu0 0
  %2271 = vmatpush1.bf16.msra.mxu0 0
  %2272 = vmatprep.mubr.bf16.mxu0 0
  %2273 = vmatmul.mubr.bf16.gmra.mrb[0].mxu0 %v1929
  %v2274 = vpop.f32.mrb[0].mxu0
  %v2275 = vadd.f32 %v1739, %v2274
  %v2276 = vpop.f32.mrb[0].mxu0
  %v2277 = vadd.f32 %v1743, %v2276
  %v2278 = vpop.f32.mrb[0].mxu0
  %v2279 = vadd.f32 %v1739, %v2278
  %v2280 = vpop.f32.mrb[0].mxu0
  %v2281 = vadd.f32 %v1743, %v2280
  %2282 = vmatprep.mubr.bf16.mxu0 0
  %2283 = vmatmul.mubr.bf16.gmra.mrb[0].mxu0 %v1932
  %v2284 = vpop.f32.mrb[0].mxu0
  %v2285 = vadd.f32 %v1739, %v2284
  %v2286 = vpop.f32.mrb[0].mxu0
  %v2287 = vadd.f32 %v1743, %v2286
  %v2288 = vpop.f32.mrb[0].mxu0
  %v2289 = vpop.f32.mrb[0].mxu0
  %2290 = vdwg.mxu0
  %2291 = vmatprep.subr.bf16.mxu0 %v1879
  %2292 = vmatpush1.bf16.msra.mxu0 %v1878
  %2293 = vmatprep.subr.bf16.mxu0 %v1895
  %2294 = vmatpush1.bf16.msra.mxu0 %v1894
  %2295 = vmatprep.subr.bf16.mxu0 0
  %2296 = vmatpush1.bf16.msra.mxu0 0
  %2297 = vmatprep.subr.bf16.mxu0 0
  %2298 = vmatpush1.bf16.msra.mxu0 0
  %2299 = vmatprep.subr.bf16.mxu0 0
  %2300 = vmatpush1.bf16.msra.mxu0 0
  %2301 = vmatprep.subr.bf16.mxu0 0
  %2302 = vmatpush1.bf16.msra.mxu0 0
  %2303 = vmatprep.subr.bf16.mxu0 0
  %2304 = vmatpush1.bf16.msra.mxu0 0
  %2305 = vmatprep.subr.bf16.mxu0 0
  %2306 = vmatpush1.bf16.msra.mxu0 0
  %2307 = vmatprep.subr.bf16.mxu0 0
  %2308 = vmatpush1.bf16.msra.mxu0 0
  %2309 = vmatprep.subr.bf16.mxu0 0
  %2310 = vmatpush1.bf16.msra.mxu0 0
  %2311 = vmatprep.subr.bf16.mxu0 0
  %2312 = vmatpush1.bf16.msra.mxu0 0
  %2313 = vmatprep.subr.bf16.mxu0 0
  %2314 = vmatpush1.bf16.msra.mxu0 0
  %2315 = vmatprep.subr.bf16.mxu0 0
  %2316 = vmatpush1.bf16.msra.mxu0 0
  %2317 = vmatprep.subr.bf16.mxu0 0
  %2318 = vmatpush1.bf16.msra.mxu0 0
  %2319 = vmatprep.subr.bf16.mxu0 0
  %2320 = vmatpush1.bf16.msra.mxu0 0
  %2321 = vmatprep.subr.bf16.mxu0 0
  %2322 = vmatpush1.bf16.msra.mxu0 0
  %2323 = vmatprep.mubr.bf16.mxu0 0
  %2324 = vmatmul.mubr.bf16.gmra.mrb[0].mxu0 %v1929
  %v2325 = vpop.f32.mrb[0].mxu0
  %v2326 = vadd.f32 %v1747, %v2325
  %v2327 = vpop.f32.mrb[0].mxu0
  %v2328 = vadd.f32 %v1751, %v2327
  %v2329 = vpop.f32.mrb[0].mxu0
  %v2330 = vadd.f32 %v1747, %v2329
  %v2331 = vpop.f32.mrb[0].mxu0
  %v2332 = vadd.f32 %v1751, %v2331
  %2333 = vmatprep.mubr.bf16.mxu0 0
  %2334 = vmatmul.mubr.bf16.gmra.mrb[0].mxu0 %v1932
  %v2335 = vpop.f32.mrb[0].mxu0
  %v2336 = vadd.f32 %v1747, %v2335
  %v2337 = vpop.f32.mrb[0].mxu0
  %v2338 = vadd.f32 %v1751, %v2337
  %v2339 = vpop.f32.mrb[0].mxu0
  %v2340 = vpop.f32.mrb[0].mxu0
  %2341 = vdwg.mxu0
  %v2342 = vmax.f32 %v1969, 0.0
  %v2343 = vmax.f32 %v1971, 0.0
  %v2344 = vmax.f32 %v2020, 0.0
  %v2345 = vmax.f32 %v2022, 0.0
  %v2346 = vmax.f32 %v2071, 0.0
  %v2347 = vmax.f32 %v2073, 0.0
  %v2348 = vmax.f32 %v2122, 0.0
  %v2349 = vmax.f32 %v2124, 0.0
  %v2350 = vmax.f32 %v2173, 0.0
  %v2351 = vmax.f32 %v2175, 0.0
  %v2352 = vmax.f32 %v2224, 0.0
  %v2353 = vmax.f32 %v2226, 0.0
  %v2354 = vmax.f32 %v2275, 0.0
  %v2355 = vmax.f32 %v2277, 0.0
  %v2356 = vmax.f32 %v2326, 0.0
  %v2357 = vmax.f32 %v2328, 0.0
  %v2358 = vmax.f32 %v1973, 0.0
  %v2359 = vmax.f32 %v1975, 0.0
  %v2360 = vmax.f32 %v2024, 0.0
  %v2361 = vmax.f32 %v2026, 0.0
  %v2362 = vmax.f32 %v2075, 0.0
  %v2363 = vmax.f32 %v2077, 0.0
  %v2364 = vmax.f32 %v2126, 0.0
  %v2365 = vmax.f32 %v2128, 0.0
  %v2366 = vmax.f32 %v2177, 0.0
  %v2367 = vmax.f32 %v2179, 0.0
  %v2368 = vmax.f32 %v2228, 0.0
  %v2369 = vmax.f32 %v2230, 0.0
  %v2370 = vmax.f32 %v2279, 0.0
  %v2371 = vmax.f32 %v2281, 0.0
  %v2372 = vmax.f32 %v2330, 0.0
  %v2373 = vmax.f32 %v2332, 0.0
  %v2374 = vmax.f32 %v1979, 0.0
  %v2375 = vmax.f32 %v1981, 0.0
  %v2376 = vmax.f32 %v2030, 0.0
  %v2377 = vmax.f32 %v2032, 0.0
  %v2378 = vmax.f32 %v2081, 0.0
  %v2379 = vmax.f32 %v2083, 0.0
  %v2380 = vmax.f32 %v2132, 0.0
  %v2381 = vmax.f32 %v2134, 0.0
  %v2382 = vmax.f32 %v2183, 0.0
  %v2383 = vmax.f32 %v2185, 0.0
  %v2384 = vmax.f32 %v2234, 0.0
  %v2385 = vmax.f32 %v2236, 0.0
  %v2386 = vmax.f32 %v2285, 0.0
  %v2387 = vmax.f32 %v2287, 0.0
  %v2388 = vmax.f32 %v2336, 0.0
  %v2389 = vmax.f32 %v2338, 0.0
  %v2390 = vpack.c.bf16 %v2358, %v2342
  %v2391 = vpack.c.bf16 %v2359, %v2343
  %v2392 = vpack.c.bf16 %v2360, %v2344
  %v2393 = vpack.c.bf16 %v2361, %v2345
  %v2394 = vpack.c.bf16 %v2362, %v2346
  %v2395 = vpack.c.bf16 %v2363, %v2347
  %v2396 = vpack.c.bf16 %v2364, %v2348
  %v2397 = vpack.c.bf16 %v2365, %v2349
  %v2398 = vpack.c.bf16 %v2366, %v2350
  %v2399 = vpack.c.bf16 %v2367, %v2351
  %v2400 = vpack.c.bf16 %v2368, %v2352
  %v2401 = vpack.c.bf16 %v2369, %v2353
  %v2402 = vpack.c.bf16 %v2370, %v2354
  %v2403 = vpack.c.bf16 %v2371, %v2355
  %v2404 = vpack.c.bf16 %v2372, %v2356
  %v2405 = vpack.c.bf16 %v2373, %v2357
  %v2406 = vpack.c.bf16 %v2374, %v2374
  %v2407 = vpack.c.bf16 %v2375, %v2375
  %v2408 = vpack.c.bf16 %v2376, %v2376
  %v2409 = vpack.c.bf16 %v2377, %v2377
  %v2410 = vpack.c.bf16 %v2378, %v2378
  %v2411 = vpack.c.bf16 %v2379, %v2379
  %v2412 = vpack.c.bf16 %v2380, %v2380
  %v2413 = vpack.c.bf16 %v2381, %v2381
  %v2414 = vpack.c.bf16 %v2382, %v2382
  %v2415 = vpack.c.bf16 %v2383, %v2383
  %v2416 = vpack.c.bf16 %v2384, %v2384
  %v2417 = vpack.c.bf16 %v2385, %v2385
  %v2418 = vpack.c.bf16 %v2386, %v2386
  %v2419 = vpack.c.bf16 %v2387, %v2387
  %v2420 = vpack.c.bf16 %v2388, %v2388
  %v2421 = vpack.c.bf16 %v2389, %v2389
  %v2422 = vld [vmem:[%s15] sm:$0xf]
  %v2423 = vld [vmem:[%s15 + $0x4] sm:$0xf]
  %v2424 = vld [vmem:[%s15 + $0x8] sm:$0xf]
  %v2425 = vld [vmem:[%s15 + $0xc] sm:$0xf]
  %v2426 = vld [vmem:[%s15 + $0x10] sm:$0xf]
  %v2427 = vld [vmem:[%s15 + $0x14] sm:$0xf]
  %v2428 = vld [vmem:[%s15 + $0x18] sm:$0xf]
  %v2429 = vld [vmem:[%s15 + $0x1c] sm:$0xf]
  %v2430 = vld [vmem:[%s15 + $0x20] sm:$0xf]
  %v2431 = vld [vmem:[%s15 + $0x24] sm:$0xf]
  %v2432 = vld [vmem:[%s15 + $0x28] sm:$0xf]
  %v2433 = vld [vmem:[%s15 + $0x2c] sm:$0xf]
  %v2434 = vld [vmem:[%s15 + $0x30] sm:$0xf]
  %v2435 = vld [vmem:[%s15 + $0x34] sm:$0xf]
  %v2436 = vld [vmem:[%s15 + $0x38] sm:$0xf]
  %v2437 = vld [vmem:[%s15 + $0x3c] sm:$0xf]
  %v2438 = vld [vmem:[%s15 + $0x40] sm:$0xf]
  %v2439 = vld [vmem:[%s15 + $0x44] sm:$0xf]
  %v2440 = vld [vmem:[%s15 + $0x48] sm:$0xf]
  %v2441 = vld [vmem:[%s15 + $0x4c] sm:$0xf]
  %v2442 = vld [vmem:[%s15 + $0x50] sm:$0xf]
  %v2443 = vld [vmem:[%s15 + $0x54] sm:$0xf]
  %v2444 = vld [vmem:[%s15 + $0x58] sm:$0xf]
  %v2445 = vld [vmem:[%s15 + $0x5c] sm:$0xf]
  %v2446 = vld [vmem:[%s15 + $0x60] sm:$0xf]
  %v2447 = vld [vmem:[%s15 + $0x64] sm:$0xf]
  %v2448 = vld [vmem:[%s15 + $0x68] sm:$0xf]
  %v2449 = vld [vmem:[%s15 + $0x6c] sm:$0xf]
  %v2450 = vld [vmem:[%s15 + $0x70] sm:$0xf]
  %v2451 = vld [vmem:[%s15 + $0x74] sm:$0xf]
  %v2452 = vld [vmem:[%s15 + $0x78] sm:$0xf]
  %v2453 = vld [vmem:[%s15 + $0x7c] sm:$0xf]
  %v2454 = vld [vmem:[%s15 + $0x80] sm:$0xf]
  %v2455 = vld [vmem:[%s15 + $0x84] sm:$0xf]
  %v2456 = vld [vmem:[%s15 + $0x88] sm:$0xf]
  %v2457 = vld [vmem:[%s15 + $0x8c] sm:$0xf]
  %v2458 = vld [vmem:[%s15 + $0x90] sm:$0xf]
  %v2459 = vld [vmem:[%s15 + $0x94] sm:$0xf]
  %v2460 = vld [vmem:[%s15 + $0x98] sm:$0xf]
  %v2461 = vld [vmem:[%s15 + $0x9c] sm:$0xf]
  %v2462 = vld [vmem:[%s15 + $0xa0] sm:$0xf]
  %v2463 = vld [vmem:[%s15 + $0xa4] sm:$0xf]
  %v2464 = vld [vmem:[%s15 + $0xa8] sm:$0xf]
  %v2465 = vld [vmem:[%s15 + $0xac] sm:$0xf]
  %v2466 = vld [vmem:[%s15 + $0xb0] sm:$0xf]
  %v2467 = vld [vmem:[%s15 + $0xb4] sm:$0xf]
  %v2468 = vld [vmem:[%s15 + $0xb8] sm:$0xf]
  %v2469 = vld [vmem:[%s15 + $0xbc] sm:$0xf]
  %v2470 = vld [vmem:[%s15 + $0xc0] sm:$0xf]
  %v2471 = vld [vmem:[%s15 + $0xc4] sm:$0xf]
  %v2472 = vld [vmem:[%s15 + $0xc8] sm:$0xf]
  %v2473 = vld [vmem:[%s15 + $0xcc] sm:$0xf]
  %v2474 = vld [vmem:[%s15 + $0xd0] sm:$0xf]
  %v2475 = vld [vmem:[%s15 + $0xd4] sm:$0xf]
  %v2476 = vld [vmem:[%s15 + $0xd8] sm:$0xf]
  %v2477 = vld [vmem:[%s15 + $0xdc] sm:$0xf]
  %v2478 = vld [vmem:[%s15 + $0xe0] sm:$0xf]
  %v2479 = vld [vmem:[%s15 + $0xe4] sm:$0xf]
  %v2480 = vld [vmem:[%s15 + $0xe8] sm:$0xf]
  %v2481 = vld [vmem:[%s15 + $0xec] sm:$0xf]
  %v2482 = vld [vmem:[%s15 + $0xf0] sm:$0xf]
  %v2483 = vld [vmem:[%s15 + $0xf4] sm:$0xf]
  %v2484 = vld [vmem:[%s15 + $0xf8] sm:$0xf]
  %v2485 = vld [vmem:[%s15 + $0xfc] sm:$0xf]
  %v2486 = vld [vmem:[%s15 + $0x100] sm:$0xf]
  %v2487 = vld [vmem:[%s15 + $0x104] sm:$0xf]
  %v2488 = vld [vmem:[%s15 + $0x108] sm:$0xf]
  %v2489 = vld [vmem:[%s15 + $0x10c] sm:$0xf]
  %v2490 = vld [vmem:[%s15 + $0x110] sm:$0xf]
  %v2491 = vld [vmem:[%s15 + $0x114] sm:$0xf]
  %v2492 = vld [vmem:[%s15 + $0x118] sm:$0xf]
  %v2493 = vld [vmem:[%s15 + $0x11c] sm:$0xf]
  %v2494 = vld [vmem:[%s15 + $0x120] sm:$0xf]
  %v2495 = vld [vmem:[%s15 + $0x124] sm:$0xf]
  %v2496 = vld [vmem:[%s15 + $0x128] sm:$0xf]
  %v2497 = vld [vmem:[%s15 + $0x12c] sm:$0xf]
  %v2498 = vld [vmem:[%s15 + $0x130] sm:$0xf]
  %v2499 = vld [vmem:[%s15 + $0x134] sm:$0xf]
  %v2500 = vld [vmem:[%s15 + $0x138] sm:$0xf]
  %v2501 = vld [vmem:[%s15 + $0x13c] sm:$0xf]
  %v2502 = vld [vmem:[%s15 + $0x140] sm:$0xf]
  %v2503 = vld [vmem:[%s15 + $0x144] sm:$0xf]
  %v2504 = vld [vmem:[%s15 + $0x148] sm:$0xf]
  %v2505 = vld [vmem:[%s15 + $0x14c] sm:$0xf]
  %v2506 = vld [vmem:[%s15 + $0x150] sm:$0xf]
  %v2507 = vld [vmem:[%s15 + $0x154] sm:$0xf]
  %v2508 = vld [vmem:[%s15 + $0x158] sm:$0xf]
  %v2509 = vld [vmem:[%s15 + $0x15c] sm:$0xf]
  %v2510 = vld [vmem:[%s15 + $0x160] sm:$0xf]
  %v2511 = vld [vmem:[%s15 + $0x164] sm:$0xf]
  %v2512 = vld [vmem:[%s15 + $0x168] sm:$0xf]
  %v2513 = vld [vmem:[%s15 + $0x16c] sm:$0xf]
  %v2514 = vld [vmem:[%s15 + $0x170] sm:$0xf]
  %v2515 = vld [vmem:[%s15 + $0x174] sm:$0xf]
  %v2516 = vld [vmem:[%s15 + $0x178] sm:$0xf]
  %v2517 = vld [vmem:[%s15 + $0x17c] sm:$0xf]
  %v2518 = vld [vmem:[%s15 + $0x180] sm:$0xf]
  %v2519 = vld [vmem:[%s15 + $0x184] sm:$0xf]
  %v2520 = vld [vmem:[%s15 + $0x188] sm:$0xf]
  %v2521 = vld [vmem:[%s15 + $0x18c] sm:$0xf]
  %v2522 = vld [vmem:[%s15 + $0x190] sm:$0xf]
  %v2523 = vld [vmem:[%s15 + $0x194] sm:$0xf]
  %v2524 = vld [vmem:[%s15 + $0x198] sm:$0xf]
  %v2525 = vld [vmem:[%s15 + $0x19c] sm:$0xf]
  %v2526 = vld [vmem:[%s15 + $0x1a0] sm:$0xf]
  %v2527 = vld [vmem:[%s15 + $0x1a4] sm:$0xf]
  %v2528 = vld [vmem:[%s15 + $0x1a8] sm:$0xf]
  %v2529 = vld [vmem:[%s15 + $0x1ac] sm:$0xf]
  %v2530 = vld [vmem:[%s15 + $0x1b0] sm:$0xf]
  %v2531 = vld [vmem:[%s15 + $0x1b4] sm:$0xf]
  %v2532 = vld [vmem:[%s15 + $0x1b8] sm:$0xf]
  %v2533 = vld [vmem:[%s15 + $0x1bc] sm:$0xf]
  %v2534 = vld [vmem:[%s15 + $0x1c0] sm:$0xf]
  %v2535 = vld [vmem:[%s15 + $0x1c4] sm:$0xf]
  %v2536 = vld [vmem:[%s15 + $0x1c8] sm:$0xf]
  %v2537 = vld [vmem:[%s15 + $0x1cc] sm:$0xf]
  %v2538 = vld [vmem:[%s15 + $0x1d0] sm:$0xf]
  %v2539 = vld [vmem:[%s15 + $0x1d4] sm:$0xf]
  %v2540 = vld [vmem:[%s15 + $0x1d8] sm:$0xf]
  %v2541 = vld [vmem:[%s15 + $0x1dc] sm:$0xf]
  %v2542 = vld [vmem:[%s15 + $0x1e0] sm:$0xf]
  %v2543 = vld [vmem:[%s15 + $0x1e4] sm:$0xf]
  %v2544 = vld [vmem:[%s15 + $0x1e8] sm:$0xf]
  %v2545 = vld [vmem:[%s15 + $0x1ec] sm:$0xf]
  %v2546 = vld [vmem:[%s15 + $0x1f0] sm:$0xf]
  %v2547 = vld [vmem:[%s15 + $0x1f4] sm:$0xf]
  %v2548 = vld [vmem:[%s15 + $0x1f8] sm:$0xf]
  %v2549 = vld [vmem:[%s15 + $0x1fc] sm:$0xf]
  %v2550 = vld [vmem:[%s15 + $0x200] sm:$0xf]
  %v2551 = vld [vmem:[%s15 + $0x204] sm:$0xf]
  %v2552 = vld [vmem:[%s15 + $0x208] sm:$0xf]
  %v2553 = vld [vmem:[%s15 + $0x20c] sm:$0xf]
  %v2554 = vld [vmem:[%s15 + $0x210] sm:$0xf]
  %v2555 = vld [vmem:[%s15 + $0x214] sm:$0xf]
  %v2556 = vld [vmem:[%s15 + $0x218] sm:$0xf]
  %v2557 = vld [vmem:[%s15 + $0x21c] sm:$0xf]
  %v2558 = vld [vmem:[%s15 + $0x220] sm:$0xf]
  %v2559 = vld [vmem:[%s15 + $0x224] sm:$0xf]
  %v2560 = vld [vmem:[%s15 + $0x228] sm:$0xf]
  %v2561 = vld [vmem:[%s15 + $0x22c] sm:$0xf]
  %v2562 = vld [vmem:[%s15 + $0x230] sm:$0xf]
  %v2563 = vld [vmem:[%s15 + $0x234] sm:$0xf]
  %v2564 = vld [vmem:[%s15 + $0x238] sm:$0xf]
  %v2565 = vld [vmem:[%s15 + $0x23c] sm:$0xf]
  %v2566 = vld [vmem:[%s15 + $0x240] sm:$0xf]
  %v2567 = vld [vmem:[%s15 + $0x244] sm:$0xf]
  %v2568 = vld [vmem:[%s15 + $0x248] sm:$0xf]
  %v2569 = vld [vmem:[%s15 + $0x24c] sm:$0xf]
  %v2570 = vld [vmem:[%s15 + $0x250] sm:$0xf]
  %v2571 = vld [vmem:[%s15 + $0x254] sm:$0xf]
  %v2572 = vld [vmem:[%s15 + $0x258] sm:$0xf]
  %v2573 = vld [vmem:[%s15 + $0x25c] sm:$0xf]
  %v2574 = vld [vmem:[%s15 + $0x260] sm:$0xf]
  %v2575 = vld [vmem:[%s15 + $0x264] sm:$0xf]
  %v2576 = vld [vmem:[%s15 + $0x268] sm:$0xf]
  %v2577 = vld [vmem:[%s15 + $0x26c] sm:$0xf]
  %v2578 = vld [vmem:[%s15 + $0x270] sm:$0xf]
  %v2579 = vld [vmem:[%s15 + $0x274] sm:$0xf]
  %v2580 = vld [vmem:[%s15 + $0x278] sm:$0xf]
  %v2581 = vld [vmem:[%s15 + $0x27c] sm:$0xf]
  %v2582 = vld [vmem:[%s15 + $0x280] sm:$0xf]
  %v2583 = vld [vmem:[%s15 + $0x284] sm:$0xf]
  %v2584 = vld [vmem:[%s15 + $0x288] sm:$0xf]
  %v2585 = vld [vmem:[%s15 + $0x28c] sm:$0xf]
  %v2586 = vld [vmem:[%s15 + $0x290] sm:$0xf]
  %v2587 = vld [vmem:[%s15 + $0x294] sm:$0xf]
  %v2588 = vld [vmem:[%s15 + $0x298] sm:$0xf]
  %v2589 = vld [vmem:[%s15 + $0x29c] sm:$0xf]
  %v2590 = vld [vmem:[%s15 + $0x2a0] sm:$0xf]
  %v2591 = vld [vmem:[%s15 + $0x2a4] sm:$0xf]
  %v2592 = vld [vmem:[%s15 + $0x2a8] sm:$0xf]
  %v2593 = vld [vmem:[%s15 + $0x2ac] sm:$0xf]
  %v2594 = vld [vmem:[%s15 + $0x2b0] sm:$0xf]
  %v2595 = vld [vmem:[%s15 + $0x2b4] sm:$0xf]
  %v2596 = vld [vmem:[%s15 + $0x2b8] sm:$0xf]
  %v2597 = vld [vmem:[%s15 + $0x2bc] sm:$0xf]
  %v2598 = vld [vmem:[%s15 + $0x2c0] sm:$0xf]
  %v2599 = vld [vmem:[%s15 + $0x2c4] sm:$0xf]
  %v2600 = vld [vmem:[%s15 + $0x2c8] sm:$0xf]
  %v2601 = vld [vmem:[%s15 + $0x2cc] sm:$0xf]
  %v2602 = vld [vmem:[%s15 + $0x2d0] sm:$0xf]
  %v2603 = vld [vmem:[%s15 + $0x2d4] sm:$0xf]
  %v2604 = vld [vmem:[%s15 + $0x2d8] sm:$0xf]
  %v2605 = vld [vmem:[%s15 + $0x2dc] sm:$0xf]
  %v2606 = vld [vmem:[%s15 + $0x2e0] sm:$0xf]
  %v2607 = vld [vmem:[%s15 + $0x2e4] sm:$0xf]
  %v2608 = vld [vmem:[%s15 + $0x2e8] sm:$0xf]
  %v2609 = vld [vmem:[%s15 + $0x2ec] sm:$0xf]
  %v2610 = vld [vmem:[%s15 + $0x2f0] sm:$0xf]
  %v2611 = vld [vmem:[%s15 + $0x2f4] sm:$0xf]
  %v2612 = vld [vmem:[%s15 + $0x2f8] sm:$0xf]
  %v2613 = vld [vmem:[%s15 + $0x2fc] sm:$0xf]
  %v2614 = vld [vmem:[%s15 + $0x300] sm:$0xf]
  %v2615 = vld [vmem:[%s15 + $0x304] sm:$0xf]
  %v2616 = vld [vmem:[%s15 + $0x308] sm:$0xf]
  %v2617 = vld [vmem:[%s15 + $0x30c] sm:$0xf]
  %v2618 = vld [vmem:[%s15 + $0x310] sm:$0xf]
  %v2619 = vld [vmem:[%s15 + $0x314] sm:$0xf]
  %v2620 = vld [vmem:[%s15 + $0x318] sm:$0xf]
  %v2621 = vld [vmem:[%s15 + $0x31c] sm:$0xf]
  %v2622 = vld [vmem:[%s15 + $0x320] sm:$0xf]
  %v2623 = vld [vmem:[%s15 + $0x324] sm:$0xf]
  %v2624 = vld [vmem:[%s15 + $0x328] sm:$0xf]
  %v2625 = vld [vmem:[%s15 + $0x32c] sm:$0xf]
  %v2626 = vld [vmem:[%s15 + $0x330] sm:$0xf]
  %v2627 = vld [vmem:[%s15 + $0x334] sm:$0xf]
  %v2628 = vld [vmem:[%s15 + $0x338] sm:$0xf]
  %v2629 = vld [vmem:[%s15 + $0x33c] sm:$0xf]
  %v2630 = vld [vmem:[%s15 + $0x340] sm:$0xf]
  %v2631 = vld [vmem:[%s15 + $0x344] sm:$0xf]
  %v2632 = vld [vmem:[%s15 + $0x348] sm:$0xf]
  %v2633 = vld [vmem:[%s15 + $0x34c] sm:$0xf]
  %v2634 = vld [vmem:[%s15 + $0x350] sm:$0xf]
  %v2635 = vld [vmem:[%s15 + $0x354] sm:$0xf]
  %v2636 = vld [vmem:[%s15 + $0x358] sm:$0xf]
  %v2637 = vld [vmem:[%s15 + $0x35c] sm:$0xf]
  %v2638 = vld [vmem:[%s15 + $0x360] sm:$0xf]
  %v2639 = vld [vmem:[%s15 + $0x364] sm:$0xf]
  %v2640 = vld [vmem:[%s15 + $0x368] sm:$0xf]
  %v2641 = vld [vmem:[%s15 + $0x36c] sm:$0xf]
  %v2642 = vld [vmem:[%s15 + $0x370] sm:$0xf]
  %v2643 = vld [vmem:[%s15 + $0x374] sm:$0xf]
  %v2644 = vld [vmem:[%s15 + $0x378] sm:$0xf]
  %v2645 = vld [vmem:[%s15 + $0x37c] sm:$0xf]
  %v2646 = vld [vmem:[%s15 + $0x380] sm:$0xf]
  %v2647 = vld [vmem:[%s15 + $0x384] sm:$0xf]
  %v2648 = vld [vmem:[%s15 + $0x388] sm:$0xf]
  %v2649 = vld [vmem:[%s15 + $0x38c] sm:$0xf]
  %v2650 = vld [vmem:[%s15 + $0x390] sm:$0xf]
  %v2651 = vld [vmem:[%s15 + $0x394] sm:$0xf]
  %v2652 = vld [vmem:[%s15 + $0x398] sm:$0xf]
  %v2653 = vld [vmem:[%s15 + $0x39c] sm:$0xf]
  %v2654 = vld [vmem:[%s15 + $0x3a0] sm:$0xf]
  %v2655 = vld [vmem:[%s15 + $0x3a4] sm:$0xf]
  %v2656 = vld [vmem:[%s15 + $0x3a8] sm:$0xf]
  %v2657 = vld [vmem:[%s15 + $0x3ac] sm:$0xf]
  %v2658 = vld [vmem:[%s15 + $0x3b0] sm:$0xf]
  %v2659 = vld [vmem:[%s15 + $0x3b4] sm:$0xf]
  %v2660 = vld [vmem:[%s15 + $0x3b8] sm:$0xf]
  %v2661 = vld [vmem:[%s15 + $0x3bc] sm:$0xf]
  %v2662 = vld [vmem:[%s15 + $0x3c0] sm:$0xf]
  %v2663 = vld [vmem:[%s15 + $0x3c4] sm:$0xf]
  %v2664 = vld [vmem:[%s15 + $0x3c8] sm:$0xf]
  %v2665 = vld [vmem:[%s15 + $0x3cc] sm:$0xf]
  %v2666 = vld [vmem:[%s15 + $0x3d0] sm:$0xf]
  %v2667 = vld [vmem:[%s15 + $0x3d4] sm:$0xf]
  %v2668 = vld [vmem:[%s15 + $0x3d8] sm:$0xf]
  %v2669 = vld [vmem:[%s15 + $0x3dc] sm:$0xf]
  %v2670 = vld [vmem:[%s15 + $0x3e0] sm:$0xf]
  %v2671 = vld [vmem:[%s15 + $0x3e4] sm:$0xf]
  %v2672 = vld [vmem:[%s15 + $0x3e8] sm:$0xf]
  %v2673 = vld [vmem:[%s15 + $0x3ec] sm:$0xf]
  %v2674 = vld [vmem:[%s15 + $0x3f0] sm:$0xf]
  %v2675 = vld [vmem:[%s15 + $0x3f4] sm:$0xf]
  %v2676 = vld [vmem:[%s15 + $0x3f8] sm:$0xf]
  %v2677 = vld [vmem:[%s15 + $0x3fc] sm:$0xf]
  %v2678 = vld [vmem:[%s16] sm:$0x1]
  %v2680 = vlaneseq
  %v2681 = vshrl.u32 %v2680, 7
  %v2682 = vsub.s32 0, %v2681
  %v2683 = vrot.slane %v2678, %v2682
  %v2941 = vunpack.c.l.b16 %v2422
  %v2942 = vunpack.c.l.b16 %v2423
  %v2943 = vunpack.c.l.b16 %v2424
  %v2944 = vunpack.c.l.b16 %v2425
  %v2945 = vunpack.c.l.b16 %v2426
  %v2946 = vunpack.c.l.b16 %v2427
  %v2947 = vunpack.c.l.b16 %v2428
  %v2948 = vunpack.c.l.b16 %v2429
  %v2949 = vunpack.c.l.b16 %v2430
  %v2950 = vunpack.c.l.b16 %v2431
  %v2951 = vunpack.c.l.b16 %v2432
  %v2952 = vunpack.c.l.b16 %v2433
  %v2953 = vunpack.c.l.b16 %v2434
  %v2954 = vunpack.c.l.b16 %v2435
  %v2955 = vunpack.c.l.b16 %v2436
  %v2956 = vunpack.c.l.b16 %v2437
  %v2957 = vunpack.c.l.b16 %v2438
  %v2958 = vunpack.c.l.b16 %v2439
  %v2959 = vunpack.c.l.b16 %v2440
  %v2960 = vunpack.c.l.b16 %v2441
  %v2961 = vunpack.c.l.b16 %v2442
  %v2962 = vunpack.c.l.b16 %v2443
  %v2963 = vunpack.c.l.b16 %v2444
  %v2964 = vunpack.c.l.b16 %v2445
  %v2965 = vunpack.c.l.b16 %v2446
  %v2966 = vunpack.c.l.b16 %v2447
  %v2967 = vunpack.c.l.b16 %v2448
  %v2968 = vunpack.c.l.b16 %v2449
  %v2969 = vunpack.c.l.b16 %v2450
  %v2970 = vunpack.c.l.b16 %v2451
  %v2971 = vunpack.c.l.b16 %v2452
  %v2972 = vunpack.c.l.b16 %v2453
  %v2973 = vunpack.c.l.b16 %v2454
  %v2974 = vunpack.c.l.b16 %v2455
  %v2975 = vunpack.c.l.b16 %v2456
  %v2976 = vunpack.c.l.b16 %v2457
  %v2977 = vunpack.c.l.b16 %v2458
  %v2978 = vunpack.c.l.b16 %v2459
  %v2979 = vunpack.c.l.b16 %v2460
  %v2980 = vunpack.c.l.b16 %v2461
  %v2981 = vunpack.c.l.b16 %v2462
  %v2982 = vunpack.c.l.b16 %v2463
  %v2983 = vunpack.c.l.b16 %v2464
  %v2984 = vunpack.c.l.b16 %v2465
  %v2985 = vunpack.c.l.b16 %v2466
  %v2986 = vunpack.c.l.b16 %v2467
  %v2987 = vunpack.c.l.b16 %v2468
  %v2988 = vunpack.c.l.b16 %v2469
  %v2989 = vunpack.c.l.b16 %v2470
  %v2990 = vunpack.c.l.b16 %v2471
  %v2991 = vunpack.c.l.b16 %v2472
  %v2992 = vunpack.c.l.b16 %v2473
  %v2993 = vunpack.c.l.b16 %v2474
  %v2994 = vunpack.c.l.b16 %v2475
  %v2995 = vunpack.c.l.b16 %v2476
  %v2996 = vunpack.c.l.b16 %v2477
  %v2997 = vunpack.c.l.b16 %v2478
  %v2998 = vunpack.c.l.b16 %v2479
  %v2999 = vunpack.c.l.b16 %v2480
  %v3000 = vunpack.c.l.b16 %v2481
  %v3001 = vunpack.c.l.b16 %v2482
  %v3002 = vunpack.c.l.b16 %v2483
  %v3003 = vunpack.c.l.b16 %v2484
  %v3004 = vunpack.c.l.b16 %v2485
  %v3005 = vunpack.c.l.b16 %v2486
  %v3006 = vunpack.c.l.b16 %v2487
  %v3007 = vunpack.c.l.b16 %v2488
  %v3008 = vunpack.c.l.b16 %v2489
  %v3009 = vunpack.c.l.b16 %v2490
  %v3010 = vunpack.c.l.b16 %v2491
  %v3011 = vunpack.c.l.b16 %v2492
  %v3012 = vunpack.c.l.b16 %v2493
  %v3013 = vunpack.c.l.b16 %v2494
  %v3014 = vunpack.c.l.b16 %v2495
  %v3015 = vunpack.c.l.b16 %v2496
  %v3016 = vunpack.c.l.b16 %v2497
  %v3017 = vunpack.c.l.b16 %v2498
  %v3018 = vunpack.c.l.b16 %v2499
  %v3019 = vunpack.c.l.b16 %v2500
  %v3020 = vunpack.c.l.b16 %v2501
  %v3021 = vunpack.c.l.b16 %v2502
  %v3022 = vunpack.c.l.b16 %v2503
  %v3023 = vunpack.c.l.b16 %v2504
  %v3024 = vunpack.c.l.b16 %v2505
  %v3025 = vunpack.c.l.b16 %v2506
  %v3026 = vunpack.c.l.b16 %v2507
  %v3027 = vunpack.c.l.b16 %v2508
  %v3028 = vunpack.c.l.b16 %v2509
  %v3029 = vunpack.c.l.b16 %v2510
  %v3030 = vunpack.c.l.b16 %v2511
  %v3031 = vunpack.c.l.b16 %v2512
  %v3032 = vunpack.c.l.b16 %v2513
  %v3033 = vunpack.c.l.b16 %v2514
  %v3034 = vunpack.c.l.b16 %v2515
  %v3035 = vunpack.c.l.b16 %v2516
  %v3036 = vunpack.c.l.b16 %v2517
  %v3037 = vunpack.c.l.b16 %v2518
  %v3038 = vunpack.c.l.b16 %v2519
  %v3039 = vunpack.c.l.b16 %v2520
  %v3040 = vunpack.c.l.b16 %v2521
  %v3041 = vunpack.c.l.b16 %v2522
  %v3042 = vunpack.c.l.b16 %v2523
  %v3043 = vunpack.c.l.b16 %v2524
  %v3044 = vunpack.c.l.b16 %v2525
  %v3045 = vunpack.c.l.b16 %v2526
  %v3046 = vunpack.c.l.b16 %v2527
  %v3047 = vunpack.c.l.b16 %v2528
  %v3048 = vunpack.c.l.b16 %v2529
  %v3049 = vunpack.c.l.b16 %v2530
  %v3050 = vunpack.c.l.b16 %v2531
  %v3051 = vunpack.c.l.b16 %v2532
  %v3052 = vunpack.c.l.b16 %v2533
  %v3053 = vunpack.c.l.b16 %v2534
  %v3054 = vunpack.c.l.b16 %v2535
  %v3055 = vunpack.c.l.b16 %v2536
  %v3056 = vunpack.c.l.b16 %v2537
  %v3057 = vunpack.c.l.b16 %v2538
  %v3058 = vunpack.c.l.b16 %v2539
  %v3059 = vunpack.c.l.b16 %v2540
  %v3060 = vunpack.c.l.b16 %v2541
  %v3061 = vunpack.c.l.b16 %v2542
  %v3062 = vunpack.c.l.b16 %v2543
  %v3063 = vunpack.c.l.b16 %v2544
  %v3064 = vunpack.c.l.b16 %v2545
  %v3065 = vunpack.c.l.b16 %v2546
  %v3066 = vunpack.c.l.b16 %v2547
  %v3067 = vunpack.c.l.b16 %v2548
  %v3068 = vunpack.c.l.b16 %v2549
  %v3069 = vunpack.c.l.b16 %v2550
  %v3070 = vunpack.c.l.b16 %v2551
  %v3071 = vunpack.c.l.b16 %v2552
  %v3072 = vunpack.c.l.b16 %v2553
  %v3073 = vunpack.c.l.b16 %v2554
  %v3074 = vunpack.c.l.b16 %v2555
  %v3075 = vunpack.c.l.b16 %v2556
  %v3076 = vunpack.c.l.b16 %v2557
  %v3077 = vunpack.c.l.b16 %v2558
  %v3078 = vunpack.c.l.b16 %v2559
  %v3079 = vunpack.c.l.b16 %v2560
  %v3080 = vunpack.c.l.b16 %v2561
  %v3081 = vunpack.c.l.b16 %v2562
  %v3082 = vunpack.c.l.b16 %v2563
  %v3083 = vunpack.c.l.b16 %v2564
  %v3084 = vunpack.c.l.b16 %v2565
  %v3085 = vunpack.c.l.b16 %v2566
  %v3086 = vunpack.c.l.b16 %v2567
  %v3087 = vunpack.c.l.b16 %v2568
  %v3088 = vunpack.c.l.b16 %v2569
  %v3089 = vunpack.c.l.b16 %v2570
  %v3090 = vunpack.c.l.b16 %v2571
  %v3091 = vunpack.c.l.b16 %v2572
  %v3092 = vunpack.c.l.b16 %v2573
  %v3093 = vunpack.c.l.b16 %v2574
  %v3094 = vunpack.c.l.b16 %v2575
  %v3095 = vunpack.c.l.b16 %v2576
  %v3096 = vunpack.c.l.b16 %v2577
  %v3097 = vunpack.c.l.b16 %v2578
  %v3098 = vunpack.c.l.b16 %v2579
  %v3099 = vunpack.c.l.b16 %v2580
  %v3100 = vunpack.c.l.b16 %v2581
  %v3101 = vunpack.c.l.b16 %v2582
  %v3102 = vunpack.c.l.b16 %v2583
  %v3103 = vunpack.c.l.b16 %v2584
  %v3104 = vunpack.c.l.b16 %v2585
  %v3105 = vunpack.c.l.b16 %v2586
  %v3106 = vunpack.c.l.b16 %v2587
  %v3107 = vunpack.c.l.b16 %v2588
  %v3108 = vunpack.c.l.b16 %v2589
  %v3109 = vunpack.c.l.b16 %v2590
  %v3110 = vunpack.c.l.b16 %v2591
  %v3111 = vunpack.c.l.b16 %v2592
  %v3112 = vunpack.c.l.b16 %v2593
  %v3113 = vunpack.c.l.b16 %v2594
  %v3114 = vunpack.c.l.b16 %v2595
  %v3115 = vunpack.c.l.b16 %v2596
  %v3116 = vunpack.c.l.b16 %v2597
  %v3117 = vunpack.c.l.b16 %v2598
  %v3118 = vunpack.c.l.b16 %v2599
  %v3119 = vunpack.c.l.b16 %v2600
  %v3120 = vunpack.c.l.b16 %v2601
  %v3121 = vunpack.c.l.b16 %v2602
  %v3122 = vunpack.c.l.b16 %v2603
  %v3123 = vunpack.c.l.b16 %v2604
  %v3124 = vunpack.c.l.b16 %v2605
  %v3125 = vunpack.c.l.b16 %v2606
  %v3126 = vunpack.c.l.b16 %v2607
  %v3127 = vunpack.c.l.b16 %v2608
  %v3128 = vunpack.c.l.b16 %v2609
  %v3129 = vunpack.c.l.b16 %v2610
  %v3130 = vunpack.c.l.b16 %v2611
  %v3131 = vunpack.c.l.b16 %v2612
  %v3132 = vunpack.c.l.b16 %v2613
  %v3133 = vunpack.c.l.b16 %v2614
  %v3134 = vunpack.c.l.b16 %v2615
  %v3135 = vunpack.c.l.b16 %v2616
  %v3136 = vunpack.c.l.b16 %v2617
  %v3137 = vunpack.c.l.b16 %v2618
  %v3138 = vunpack.c.l.b16 %v2619
  %v3139 = vunpack.c.l.b16 %v2620
  %v3140 = vunpack.c.l.b16 %v2621
  %v3141 = vunpack.c.l.b16 %v2622
  %v3142 = vunpack.c.l.b16 %v2623
  %v3143 = vunpack.c.l.b16 %v2624
  %v3144 = vunpack.c.l.b16 %v2625
  %v3145 = vunpack.c.l.b16 %v2626
  %v3146 = vunpack.c.l.b16 %v2627
  %v3147 = vunpack.c.l.b16 %v2628
  %v3148 = vunpack.c.l.b16 %v2629
  %v3149 = vunpack.c.l.b16 %v2630
  %v3150 = vunpack.c.l.b16 %v2631
  %v3151 = vunpack.c.l.b16 %v2632
  %v3152 = vunpack.c.l.b16 %v2633
  %v3153 = vunpack.c.l.b16 %v2634
  %v3154 = vunpack.c.l.b16 %v2635
  %v3155 = vunpack.c.l.b16 %v2636
  %v3156 = vunpack.c.l.b16 %v2637
  %v3157 = vunpack.c.l.b16 %v2638
  %v3158 = vunpack.c.l.b16 %v2639
  %v3159 = vunpack.c.l.b16 %v2640
  %v3160 = vunpack.c.l.b16 %v2641
  %v3161 = vunpack.c.l.b16 %v2642
  %v3162 = vunpack.c.l.b16 %v2643
  %v3163 = vunpack.c.l.b16 %v2644
  %v3164 = vunpack.c.l.b16 %v2645
  %v3165 = vunpack.c.l.b16 %v2646
  %v3166 = vunpack.c.l.b16 %v2647
  %v3167 = vunpack.c.l.b16 %v2648
  %v3168 = vunpack.c.l.b16 %v2649
  %v3169 = vunpack.c.l.b16 %v2650
  %v3170 = vunpack.c.l.b16 %v2651
  %v3171 = vunpack.c.l.b16 %v2652
  %v3172 = vunpack.c.l.b16 %v2653
  %v3173 = vunpack.c.l.b16 %v2654
  %v3174 = vunpack.c.l.b16 %v2655
  %v3175 = vunpack.c.l.b16 %v2656
  %v3176 = vunpack.c.l.b16 %v2657
  %v3177 = vunpack.c.l.b16 %v2658
  %v3178 = vunpack.c.l.b16 %v2659
  %v3179 = vunpack.c.l.b16 %v2660
  %v3180 = vunpack.c.l.b16 %v2661
  %v3181 = vunpack.c.l.b16 %v2662
  %v3182 = vunpack.c.l.b16 %v2663
  %v3183 = vunpack.c.l.b16 %v2664
  %v3184 = vunpack.c.l.b16 %v2665
  %v3185 = vunpack.c.l.b16 %v2666
  %v3186 = vunpack.c.l.b16 %v2667
  %v3187 = vunpack.c.l.b16 %v2668
  %v3188 = vunpack.c.l.b16 %v2669
  %v3189 = vunpack.c.l.b16 %v2670
  %v3190 = vunpack.c.l.b16 %v2671
  %v3191 = vunpack.c.l.b16 %v2672
  %v3192 = vunpack.c.l.b16 %v2673
  %v3193 = vunpack.c.l.b16 %v2674
  %v3194 = vunpack.c.l.b16 %v2675
  %v3195 = vunpack.c.l.b16 %v2676
  %v3196 = vunpack.c.l.b16 %v2677
  %v3197 = vpack.c.b16 %v2942, %v2941
  %v3198 = vpack.c.b16 %v2944, %v2943
  %v3199 = vpack.c.b16 %v2946, %v2945
  %v3200 = vpack.c.b16 %v2948, %v2947
  %v3201 = vpack.c.b16 %v2950, %v2949
  %v3202 = vpack.c.b16 %v2952, %v2951
  %v3203 = vpack.c.b16 %v2954, %v2953
  %v3204 = vpack.c.b16 %v2956, %v2955
  %v3205 = vpack.c.b16 %v2958, %v2957
  %v3206 = vpack.c.b16 %v2960, %v2959
  %v3207 = vpack.c.b16 %v2962, %v2961
  %v3208 = vpack.c.b16 %v2964, %v2963
  %v3209 = vpack.c.b16 %v2966, %v2965
  %v3210 = vpack.c.b16 %v2968, %v2967
  %v3211 = vpack.c.b16 %v2970, %v2969
  %v3212 = vpack.c.b16 %v2972, %v2971
  %v3213 = vpack.c.b16 %v2974, %v2973
  %v3214 = vpack.c.b16 %v2976, %v2975
  %v3215 = vpack.c.b16 %v2978, %v2977
  %v3216 = vpack.c.b16 %v2980, %v2979
  %v3217 = vpack.c.b16 %v2982, %v2981
  %v3218 = vpack.c.b16 %v2984, %v2983
  %v3219 = vpack.c.b16 %v2986, %v2985
  %v3220 = vpack.c.b16 %v2988, %v2987
  %v3221 = vpack.c.b16 %v2990, %v2989
  %v3222 = vpack.c.b16 %v2992, %v2991
  %v3223 = vpack.c.b16 %v2994, %v2993
  %v3224 = vpack.c.b16 %v2996, %v2995
  %v3225 = vpack.c.b16 %v2998, %v2997
  %v3226 = vpack.c.b16 %v3000, %v2999
  %v3227 = vpack.c.b16 %v3002, %v3001
  %v3228 = vpack.c.b16 %v3004, %v3003
  %v3229 = vpack.c.b16 %v3006, %v3005
  %v3230 = vpack.c.b16 %v3008, %v3007
  %v3231 = vpack.c.b16 %v3010, %v3009
  %v3232 = vpack.c.b16 %v3012, %v3011
  %v3233 = vpack.c.b16 %v3014, %v3013
  %v3234 = vpack.c.b16 %v3016, %v3015
  %v3235 = vpack.c.b16 %v3018, %v3017
  %v3236 = vpack.c.b16 %v3020, %v3019
  %v3237 = vpack.c.b16 %v3022, %v3021
  %v3238 = vpack.c.b16 %v3024, %v3023
  %v3239 = vpack.c.b16 %v3026, %v3025
  %v3240 = vpack.c.b16 %v3028, %v3027
  %v3241 = vpack.c.b16 %v3030, %v3029
  %v3242 = vpack.c.b16 %v3032, %v3031
  %v3243 = vpack.c.b16 %v3034, %v3033
  %v3244 = vpack.c.b16 %v3036, %v3035
  %v3245 = vpack.c.b16 %v3038, %v3037
  %v3246 = vpack.c.b16 %v3040, %v3039
  %v3247 = vpack.c.b16 %v3042, %v3041
  %v3248 = vpack.c.b16 %v3044, %v3043
  %v3249 = vpack.c.b16 %v3046, %v3045
  %v3250 = vpack.c.b16 %v3048, %v3047
  %v3251 = vpack.c.b16 %v3050, %v3049
  %v3252 = vpack.c.b16 %v3052, %v3051
  %v3253 = vpack.c.b16 %v3054, %v3053
  %v3254 = vpack.c.b16 %v3056, %v3055
  %v3255 = vpack.c.b16 %v3058, %v3057
  %v3256 = vpack.c.b16 %v3060, %v3059
  %v3257 = vpack.c.b16 %v3062, %v3061
  %v3258 = vpack.c.b16 %v3064, %v3063
  %v3259 = vpack.c.b16 %v3066, %v3065
  %v3260 = vpack.c.b16 %v3068, %v3067
  %v3261 = vpack.c.b16 %v3070, %v3069
  %v3262 = vpack.c.b16 %v3072, %v3071
  %v3263 = vpack.c.b16 %v3074, %v3073
  %v3264 = vpack.c.b16 %v3076, %v3075
  %v3265 = vpack.c.b16 %v3078, %v3077
  %v3266 = vpack.c.b16 %v3080, %v3079
  %v3267 = vpack.c.b16 %v3082, %v3081
  %v3268 = vpack.c.b16 %v3084, %v3083
  %v3269 = vpack.c.b16 %v3086, %v3085
  %v3270 = vpack.c.b16 %v3088, %v3087
  %v3271 = vpack.c.b16 %v3090, %v3089
  %v3272 = vpack.c.b16 %v3092, %v3091
  %v3273 = vpack.c.b16 %v3094, %v3093
  %v3274 = vpack.c.b16 %v3096, %v3095
  %v3275 = vpack.c.b16 %v3098, %v3097
  %v3276 = vpack.c.b16 %v3100, %v3099
  %v3277 = vpack.c.b16 %v3102, %v3101
  %v3278 = vpack.c.b16 %v3104, %v3103
  %v3279 = vpack.c.b16 %v3106, %v3105
  %v3280 = vpack.c.b16 %v3108, %v3107
  %v3281 = vpack.c.b16 %v3110, %v3109
  %v3282 = vpack.c.b16 %v3112, %v3111
  %v3283 = vpack.c.b16 %v3114, %v3113
  %v3284 = vpack.c.b16 %v3116, %v3115
  %v3285 = vpack.c.b16 %v3118, %v3117
  %v3286 = vpack.c.b16 %v3120, %v3119
  %v3287 = vpack.c.b16 %v3122, %v3121
  %v3288 = vpack.c.b16 %v3124, %v3123
  %v3289 = vpack.c.b16 %v3126, %v3125
  %v3290 = vpack.c.b16 %v3128, %v3127
  %v3291 = vpack.c.b16 %v3130, %v3129
  %v3292 = vpack.c.b16 %v3132, %v3131
  %v3293 = vpack.c.b16 %v3134, %v3133
  %v3294 = vpack.c.b16 %v3136, %v3135
  %v3295 = vpack.c.b16 %v3138, %v3137
  %v3296 = vpack.c.b16 %v3140, %v3139
  %v3297 = vpack.c.b16 %v3142, %v3141
  %v3298 = vpack.c.b16 %v3144, %v3143
  %v3299 = vpack.c.b16 %v3146, %v3145
  %v3300 = vpack.c.b16 %v3148, %v3147
  %v3301 = vpack.c.b16 %v3150, %v3149
  %v3302 = vpack.c.b16 %v3152, %v3151
  %v3303 = vpack.c.b16 %v3154, %v3153
  %v3304 = vpack.c.b16 %v3156, %v3155
  %v3305 = vpack.c.b16 %v3158, %v3157
  %v3306 = vpack.c.b16 %v3160, %v3159
  %v3307 = vpack.c.b16 %v3162, %v3161
  %v3308 = vpack.c.b16 %v3164, %v3163
  %v3309 = vpack.c.b16 %v3166, %v3165
  %v3310 = vpack.c.b16 %v3168, %v3167
  %v3311 = vpack.c.b16 %v3170, %v3169
  %v3312 = vpack.c.b16 %v3172, %v3171
  %v3313 = vpack.c.b16 %v3174, %v3173
  %v3314 = vpack.c.b16 %v3176, %v3175
  %v3315 = vpack.c.b16 %v3178, %v3177
  %v3316 = vpack.c.b16 %v3180, %v3179
  %v3317 = vpack.c.b16 %v3182, %v3181
  %v3318 = vpack.c.b16 %v3184, %v3183
  %v3319 = vpack.c.b16 %v3186, %v3185
  %v3320 = vpack.c.b16 %v3188, %v3187
  %v3321 = vpack.c.b16 %v3190, %v3189
  %v3322 = vpack.c.b16 %v3192, %v3191
  %v3323 = vpack.c.b16 %v3194, %v3193
  %v3324 = vpack.c.b16 %v3196, %v3195
  %3453 = vmatprep.subr.bf16.mxu0 0
  %3454 = vmatpush1.bf16.msra.mxu0 %v3197
  %3455 = vmatprep.subr.bf16.mxu0 0
  %3456 = vmatpush1.bf16.msra.mxu0 %v3198
  %3457 = vmatprep.subr.bf16.mxu0 0
  %3458 = vmatpush1.bf16.msra.mxu0 %v3199
  %3459 = vmatprep.subr.bf16.mxu0 0
  %3460 = vmatpush1.bf16.msra.mxu0 %v3200
  %3461 = vmatprep.subr.bf16.mxu0 0
  %3462 = vmatpush1.bf16.msra.mxu0 %v3201
  %3463 = vmatprep.subr.bf16.mxu0 0
  %3464 = vmatpush1.bf16.msra.mxu0 %v3202
  %3465 = vmatprep.subr.bf16.mxu0 0
  %3466 = vmatpush1.bf16.msra.mxu0 %v3203
  %3467 = vmatprep.subr.bf16.mxu0 0
  %3468 = vmatpush1.bf16.msra.mxu0 %v3204
  %3469 = vmatprep.subr.bf16.mxu0 0
  %3470 = vmatpush1.bf16.msra.mxu0 %v3205
  %3471 = vmatprep.subr.bf16.mxu0 0
  %3472 = vmatpush1.bf16.msra.mxu0 %v3206
  %3473 = vmatprep.subr.bf16.mxu0 0
  %3474 = vmatpush1.bf16.msra.mxu0 %v3207
  %3475 = vmatprep.subr.bf16.mxu0 0
  %3476 = vmatpush1.bf16.msra.mxu0 %v3208
  %3477 = vmatprep.subr.bf16.mxu0 0
  %3478 = vmatpush1.bf16.msra.mxu0 %v3209
  %3479 = vmatprep.subr.bf16.mxu0 0
  %3480 = vmatpush1.bf16.msra.mxu0 %v3210
  %3481 = vmatprep.subr.bf16.mxu0 0
  %3482 = vmatpush1.bf16.msra.mxu0 %v3211
  %3483 = vmatprep.subr.bf16.mxu0 0
  %3484 = vmatpush1.bf16.msra.mxu0 %v3212
  %3485 = vmatprep.mubr.bf16.mxu0 %v2391
  %3486 = vmatmul.mubr.bf16.gmra.mrb[0].mxu0 %v2390
  %v3487 = vpop.f32.mrb[0].mxu0
  %v3488 = vadd.f32 %v2683, %v3487
  %v3489 = vpop.f32.mrb[0].mxu0
  %v3490 = vpop.f32.mrb[0].mxu0
  %v3491 = vadd.f32 %v2683, %v3490
  %v3492 = vpop.f32.mrb[0].mxu0
  %3493 = vmatprep.mubr.bf16.mxu0 %v2407
  %3494 = vmatmul.mubr.bf16.gmra.mrb[0].mxu0 %v2406
  %v3495 = vpop.f32.mrb[0].mxu0
  %v3496 = vadd.f32 %v2683, %v3495
  %v3497 = vpop.f32.mrb[0].mxu0
  %v3498 = vpop.f32.mrb[0].mxu0
  %v3499 = vpop.f32.mrb[0].mxu0
  %3500 = vdwg.mxu0
  %3501 = vmatprep.subr.bf16.mxu0 0
  %3502 = vmatpush1.bf16.msra.mxu0 %v3213
  %3503 = vmatprep.subr.bf16.mxu0 0
  %3504 = vmatpush1.bf16.msra.mxu0 %v3214
  %3505 = vmatprep.subr.bf16.mxu0 0
  %3506 = vmatpush1.bf16.msra.mxu0 %v3215
  %3507 = vmatprep.subr.bf16.mxu0 0
  %3508 = vmatpush1.bf16.msra.mxu0 %v3216
  %3509 = vmatprep.subr.bf16.mxu0 0
  %3510 = vmatpush1.bf16.msra.mxu0 %v3217
  %3511 = vmatprep.subr.bf16.mxu0 0
  %3512 = vmatpush1.bf16.msra.mxu0 %v3218
  %3513 = vmatprep.subr.bf16.mxu0 0
  %3514 = vmatpush1.bf16.msra.mxu0 %v3219
  %3515 = vmatprep.subr.bf16.mxu0 0
  %3516 = vmatpush1.bf16.msra.mxu0 %v3220
  %3517 = vmatprep.subr.bf16.mxu0 0
  %3518 = vmatpush1.bf16.msra.mxu0 %v3221
  %3519 = vmatprep.subr.bf16.mxu0 0
  %3520 = vmatpush1.bf16.msra.mxu0 %v3222
  %3521 = vmatprep.subr.bf16.mxu0 0
  %3522 = vmatpush1.bf16.msra.mxu0 %v3223
  %3523 = vmatprep.subr.bf16.mxu0 0
  %3524 = vmatpush1.bf16.msra.mxu0 %v3224
  %3525 = vmatprep.subr.bf16.mxu0 0
  %3526 = vmatpush1.bf16.msra.mxu0 %v3225
  %3527 = vmatprep.subr.bf16.mxu0 0
  %3528 = vmatpush1.bf16.msra.mxu0 %v3226
  %3529 = vmatprep.subr.bf16.mxu0 0
  %3530 = vmatpush1.bf16.msra.mxu0 %v3227
  %3531 = vmatprep.subr.bf16.mxu0 0
  %3532 = vmatpush1.bf16.msra.mxu0 %v3228
  %3533 = vmatprep.mubr.bf16.mxu0 %v2393
  %3534 = vmatmul.mubr.bf16.gmra.mrb[0].mxu0 %v2392
  %v3535 = vpop.f32.mrb[0].mxu0
  %v3536 = vadd.f32 %v3488, %v3535
  %v3537 = vpop.f32.mrb[0].mxu0
  %v3538 = vpop.f32.mrb[0].mxu0
  %v3539 = vadd.f32 %v3491, %v3538
  %v3540 = vpop.f32.mrb[0].mxu0
  %3541 = vmatprep.mubr.bf16.mxu0 %v2409
  %3542 = vmatmul.mubr.bf16.gmra.mrb[0].mxu0 %v2408
  %v3543 = vpop.f32.mrb[0].mxu0
  %v3544 = vadd.f32 %v3496, %v3543
  %v3545 = vpop.f32.mrb[0].mxu0
  %v3546 = vpop.f32.mrb[0].mxu0
  %v3547 = vpop.f32.mrb[0].mxu0
  %3548 = vdwg.mxu0
  %3549 = vmatprep.subr.bf16.mxu0 0
  %3550 = vmatpush1.bf16.msra.mxu0 %v3229
  %3551 = vmatprep.subr.bf16.mxu0 0
  %3552 = vmatpush1.bf16.msra.mxu0 %v3230
  %3553 = vmatprep.subr.bf16.mxu0 0
  %3554 = vmatpush1.bf16.msra.mxu0 %v3231
  %3555 = vmatprep.subr.bf16.mxu0 0
  %3556 = vmatpush1.bf16.msra.mxu0 %v3232
  %3557 = vmatprep.subr.bf16.mxu0 0
  %3558 = vmatpush1.bf16.msra.mxu0 %v3233
  %3559 = vmatprep.subr.bf16.mxu0 0
  %3560 = vmatpush1.bf16.msra.mxu0 %v3234
  %3561 = vmatprep.subr.bf16.mxu0 0
  %3562 = vmatpush1.bf16.msra.mxu0 %v3235
  %3563 = vmatprep.subr.bf16.mxu0 0
  %3564 = vmatpush1.bf16.msra.mxu0 %v3236
  %3565 = vmatprep.subr.bf16.mxu0 0
  %3566 = vmatpush1.bf16.msra.mxu0 %v3237
  %3567 = vmatprep.subr.bf16.mxu0 0
  %3568 = vmatpush1.bf16.msra.mxu0 %v3238
  %3569 = vmatprep.subr.bf16.mxu0 0
  %3570 = vmatpush1.bf16.msra.mxu0 %v3239
  %3571 = vmatprep.subr.bf16.mxu0 0
  %3572 = vmatpush1.bf16.msra.mxu0 %v3240
  %3573 = vmatprep.subr.bf16.mxu0 0
  %3574 = vmatpush1.bf16.msra.mxu0 %v3241
  %3575 = vmatprep.subr.bf16.mxu0 0
  %3576 = vmatpush1.bf16.msra.mxu0 %v3242
  %3577 = vmatprep.subr.bf16.mxu0 0
  %3578 = vmatpush1.bf16.msra.mxu0 %v3243
  %3579 = vmatprep.subr.bf16.mxu0 0
  %3580 = vmatpush1.bf16.msra.mxu0 %v3244
  %3581 = vmatprep.mubr.bf16.mxu0 %v2395
  %3582 = vmatmul.mubr.bf16.gmra.mrb[0].mxu0 %v2394
  %v3583 = vpop.f32.mrb[0].mxu0
  %v3584 = vadd.f32 %v3536, %v3583
  %v3585 = vpop.f32.mrb[0].mxu0
  %v3586 = vpop.f32.mrb[0].mxu0
  %v3587 = vadd.f32 %v3539, %v3586
  %v3588 = vpop.f32.mrb[0].mxu0
  %3589 = vmatprep.mubr.bf16.mxu0 %v2411
  %3590 = vmatmul.mubr.bf16.gmra.mrb[0].mxu0 %v2410
  %v3591 = vpop.f32.mrb[0].mxu0
  %v3592 = vadd.f32 %v3544, %v3591
  %v3593 = vpop.f32.mrb[0].mxu0
  %v3594 = vpop.f32.mrb[0].mxu0
  %v3595 = vpop.f32.mrb[0].mxu0
  %3596 = vdwg.mxu0
  %3597 = vmatprep.subr.bf16.mxu0 0
  %3598 = vmatpush1.bf16.msra.mxu0 %v3245
  %3599 = vmatprep.subr.bf16.mxu0 0
  %3600 = vmatpush1.bf16.msra.mxu0 %v3246
  %3601 = vmatprep.subr.bf16.mxu0 0
  %3602 = vmatpush1.bf16.msra.mxu0 %v3247
  %3603 = vmatprep.subr.bf16.mxu0 0
  %3604 = vmatpush1.bf16.msra.mxu0 %v3248
  %3605 = vmatprep.subr.bf16.mxu0 0
  %3606 = vmatpush1.bf16.msra.mxu0 %v3249
  %3607 = vmatprep.subr.bf16.mxu0 0
  %3608 = vmatpush1.bf16.msra.mxu0 %v3250
  %3609 = vmatprep.subr.bf16.mxu0 0
  %3610 = vmatpush1.bf16.msra.mxu0 %v3251
  %3611 = vmatprep.subr.bf16.mxu0 0
  %3612 = vmatpush1.bf16.msra.mxu0 %v3252
  %3613 = vmatprep.subr.bf16.mxu0 0
  %3614 = vmatpush1.bf16.msra.mxu0 %v3253
  %3615 = vmatprep.subr.bf16.mxu0 0
  %3616 = vmatpush1.bf16.msra.mxu0 %v3254
  %3617 = vmatprep.subr.bf16.mxu0 0
  %3618 = vmatpush1.bf16.msra.mxu0 %v3255
  %3619 = vmatprep.subr.bf16.mxu0 0
  %3620 = vmatpush1.bf16.msra.mxu0 %v3256
  %3621 = vmatprep.subr.bf16.mxu0 0
  %3622 = vmatpush1.bf16.msra.mxu0 %v3257
  %3623 = vmatprep.subr.bf16.mxu0 0
  %3624 = vmatpush1.bf16.msra.mxu0 %v3258
  %3625 = vmatprep.subr.bf16.mxu0 0
  %3626 = vmatpush1.bf16.msra.mxu0 %v3259
  %3627 = vmatprep.subr.bf16.mxu0 0
  %3628 = vmatpush1.bf16.msra.mxu0 %v3260
  %3629 = vmatprep.mubr.bf16.mxu0 %v2397
  %3630 = vmatmul.mubr.bf16.gmra.mrb[0].mxu0 %v2396
  %v3631 = vpop.f32.mrb[0].mxu0
  %v3632 = vadd.f32 %v3584, %v3631
  %v3633 = vpop.f32.mrb[0].mxu0
  %v3634 = vpop.f32.mrb[0].mxu0
  %v3635 = vadd.f32 %v3587, %v3634
  %v3636 = vpop.f32.mrb[0].mxu0
  %3637 = vmatprep.mubr.bf16.mxu0 %v2413
  %3638 = vmatmul.mubr.bf16.gmra.mrb[0].mxu0 %v2412
  %v3639 = vpop.f32.mrb[0].mxu0
  %v3640 = vadd.f32 %v3592, %v3639
  %v3641 = vpop.f32.mrb[0].mxu0
  %v3642 = vpop.f32.mrb[0].mxu0
  %v3643 = vpop.f32.mrb[0].mxu0
  %3644 = vdwg.mxu0
  %3645 = vmatprep.subr.bf16.mxu0 0
  %3646 = vmatpush1.bf16.msra.mxu0 %v3261
  %3647 = vmatprep.subr.bf16.mxu0 0
  %3648 = vmatpush1.bf16.msra.mxu0 %v3262
  %3649 = vmatprep.subr.bf16.mxu0 0
  %3650 = vmatpush1.bf16.msra.mxu0 %v3263
  %3651 = vmatprep.subr.bf16.mxu0 0
  %3652 = vmatpush1.bf16.msra.mxu0 %v3264
  %3653 = vmatprep.subr.bf16.mxu0 0
  %3654 = vmatpush1.bf16.msra.mxu0 %v3265
  %3655 = vmatprep.subr.bf16.mxu0 0
  %3656 = vmatpush1.bf16.msra.mxu0 %v3266
  %3657 = vmatprep.subr.bf16.mxu0 0
  %3658 = vmatpush1.bf16.msra.mxu0 %v3267
  %3659 = vmatprep.subr.bf16.mxu0 0
  %3660 = vmatpush1.bf16.msra.mxu0 %v3268
  %3661 = vmatprep.subr.bf16.mxu0 0
  %3662 = vmatpush1.bf16.msra.mxu0 %v3269
  %3663 = vmatprep.subr.bf16.mxu0 0
  %3664 = vmatpush1.bf16.msra.mxu0 %v3270
  %3665 = vmatprep.subr.bf16.mxu0 0
  %3666 = vmatpush1.bf16.msra.mxu0 %v3271
  %3667 = vmatprep.subr.bf16.mxu0 0
  %3668 = vmatpush1.bf16.msra.mxu0 %v3272
  %3669 = vmatprep.subr.bf16.mxu0 0
  %3670 = vmatpush1.bf16.msra.mxu0 %v3273
  %3671 = vmatprep.subr.bf16.mxu0 0
  %3672 = vmatpush1.bf16.msra.mxu0 %v3274
  %3673 = vmatprep.subr.bf16.mxu0 0
  %3674 = vmatpush1.bf16.msra.mxu0 %v3275
  %3675 = vmatprep.subr.bf16.mxu0 0
  %3676 = vmatpush1.bf16.msra.mxu0 %v3276
  %3677 = vmatprep.mubr.bf16.mxu0 %v2399
  %3678 = vmatmul.mubr.bf16.gmra.mrb[0].mxu0 %v2398
  %v3679 = vpop.f32.mrb[0].mxu0
  %v3680 = vadd.f32 %v3632, %v3679
  %v3681 = vpop.f32.mrb[0].mxu0
  %v3682 = vpop.f32.mrb[0].mxu0
  %v3683 = vadd.f32 %v3635, %v3682
  %v3684 = vpop.f32.mrb[0].mxu0
  %3685 = vmatprep.mubr.bf16.mxu0 %v2415
  %3686 = vmatmul.mubr.bf16.gmra.mrb[0].mxu0 %v2414
  %v3687 = vpop.f32.mrb[0].mxu0
  %v3688 = vadd.f32 %v3640, %v3687
  %v3689 = vpop.f32.mrb[0].mxu0
  %v3690 = vpop.f32.mrb[0].mxu0
  %v3691 = vpop.f32.mrb[0].mxu0
  %3692 = vdwg.mxu0
  %3693 = vmatprep.subr.bf16.mxu0 0
  %3694 = vmatpush1.bf16.msra.mxu0 %v3277
  %3695 = vmatprep.subr.bf16.mxu0 0
  %3696 = vmatpush1.bf16.msra.mxu0 %v3278
  %3697 = vmatprep.subr.bf16.mxu0 0
  %3698 = vmatpush1.bf16.msra.mxu0 %v3279
  %3699 = vmatprep.subr.bf16.mxu0 0
  %3700 = vmatpush1.bf16.msra.mxu0 %v3280
  %3701 = vmatprep.subr.bf16.mxu0 0
  %3702 = vmatpush1.bf16.msra.mxu0 %v3281
  %3703 = vmatprep.subr.bf16.mxu0 0
  %3704 = vmatpush1.bf16.msra.mxu0 %v3282
  %3705 = vmatprep.subr.bf16.mxu0 0
  %3706 = vmatpush1.bf16.msra.mxu0 %v3283
  %3707 = vmatprep.subr.bf16.mxu0 0
  %3708 = vmatpush1.bf16.msra.mxu0 %v3284
  %3709 = vmatprep.subr.bf16.mxu0 0
  %3710 = vmatpush1.bf16.msra.mxu0 %v3285
  %3711 = vmatprep.subr.bf16.mxu0 0
  %3712 = vmatpush1.bf16.msra.mxu0 %v3286
  %3713 = vmatprep.subr.bf16.mxu0 0
  %3714 = vmatpush1.bf16.msra.mxu0 %v3287
  %3715 = vmatprep.subr.bf16.mxu0 0
  %3716 = vmatpush1.bf16.msra.mxu0 %v3288
  %3717 = vmatprep.subr.bf16.mxu0 0
  %3718 = vmatpush1.bf16.msra.mxu0 %v3289
  %3719 = vmatprep.subr.bf16.mxu0 0
  %3720 = vmatpush1.bf16.msra.mxu0 %v3290
  %3721 = vmatprep.subr.bf16.mxu0 0
  %3722 = vmatpush1.bf16.msra.mxu0 %v3291
  %3723 = vmatprep.subr.bf16.mxu0 0
  %3724 = vmatpush1.bf16.msra.mxu0 %v3292
  %3725 = vmatprep.mubr.bf16.mxu0 %v2401
  %3726 = vmatmul.mubr.bf16.gmra.mrb[0].mxu0 %v2400
  %v3727 = vpop.f32.mrb[0].mxu0
  %v3728 = vadd.f32 %v3680, %v3727
  %v3729 = vpop.f32.mrb[0].mxu0
  %v3730 = vpop.f32.mrb[0].mxu0
  %v3731 = vadd.f32 %v3683, %v3730
  %v3732 = vpop.f32.mrb[0].mxu0
  %3733 = vmatprep.mubr.bf16.mxu0 %v2417
  %3734 = vmatmul.mubr.bf16.gmra.mrb[0].mxu0 %v2416
  %v3735 = vpop.f32.mrb[0].mxu0
  %v3736 = vadd.f32 %v3688, %v3735
  %v3737 = vpop.f32.mrb[0].mxu0
  %v3738 = vpop.f32.mrb[0].mxu0
  %v3739 = vpop.f32.mrb[0].mxu0
  %3740 = vdwg.mxu0
  %3741 = vmatprep.subr.bf16.mxu0 0
  %3742 = vmatpush1.bf16.msra.mxu0 %v3293
  %3743 = vmatprep.subr.bf16.mxu0 0
  %3744 = vmatpush1.bf16.msra.mxu0 %v3294
  %3745 = vmatprep.subr.bf16.mxu0 0
  %3746 = vmatpush1.bf16.msra.mxu0 %v3295
  %3747 = vmatprep.subr.bf16.mxu0 0
  %3748 = vmatpush1.bf16.msra.mxu0 %v3296
  %3749 = vmatprep.subr.bf16.mxu0 0
  %3750 = vmatpush1.bf16.msra.mxu0 %v3297
  %3751 = vmatprep.subr.bf16.mxu0 0
  %3752 = vmatpush1.bf16.msra.mxu0 %v3298
  %3753 = vmatprep.subr.bf16.mxu0 0
  %3754 = vmatpush1.bf16.msra.mxu0 %v3299
  %3755 = vmatprep.subr.bf16.mxu0 0
  %3756 = vmatpush1.bf16.msra.mxu0 %v3300
  %3757 = vmatprep.subr.bf16.mxu0 0
  %3758 = vmatpush1.bf16.msra.mxu0 %v3301
  %3759 = vmatprep.subr.bf16.mxu0 0
  %3760 = vmatpush1.bf16.msra.mxu0 %v3302
  %3761 = vmatprep.subr.bf16.mxu0 0
  %3762 = vmatpush1.bf16.msra.mxu0 %v3303
  %3763 = vmatprep.subr.bf16.mxu0 0
  %3764 = vmatpush1.bf16.msra.mxu0 %v3304
  %3765 = vmatprep.subr.bf16.mxu0 0
  %3766 = vmatpush1.bf16.msra.mxu0 %v3305
  %3767 = vmatprep.subr.bf16.mxu0 0
  %3768 = vmatpush1.bf16.msra.mxu0 %v3306
  %3769 = vmatprep.subr.bf16.mxu0 0
  %3770 = vmatpush1.bf16.msra.mxu0 %v3307
  %3771 = vmatprep.subr.bf16.mxu0 0
  %3772 = vmatpush1.bf16.msra.mxu0 %v3308
  %3773 = vmatprep.mubr.bf16.mxu0 %v2403
  %3774 = vmatmul.mubr.bf16.gmra.mrb[0].mxu0 %v2402
  %v3775 = vpop.f32.mrb[0].mxu0
  %v3776 = vadd.f32 %v3728, %v3775
  %v3777 = vpop.f32.mrb[0].mxu0
  %v3778 = vpop.f32.mrb[0].mxu0
  %v3779 = vadd.f32 %v3731, %v3778
  %v3780 = vpop.f32.mrb[0].mxu0
  %3781 = vmatprep.mubr.bf16.mxu0 %v2419
  %3782 = vmatmul.mubr.bf16.gmra.mrb[0].mxu0 %v2418
  %v3783 = vpop.f32.mrb[0].mxu0
  %v3784 = vadd.f32 %v3736, %v3783
  %v3785 = vpop.f32.mrb[0].mxu0
  %v3786 = vpop.f32.mrb[0].mxu0
  %v3787 = vpop.f32.mrb[0].mxu0
  %3788 = vdwg.mxu0
  %3789 = vmatprep.subr.bf16.mxu0 0
  %3790 = vmatpush1.bf16.msra.mxu0 %v3309
  %3791 = vmatprep.subr.bf16.mxu0 0
  %3792 = vmatpush1.bf16.msra.mxu0 %v3310
  %3793 = vmatprep.subr.bf16.mxu0 0
  %3794 = vmatpush1.bf16.msra.mxu0 %v3311
  %3795 = vmatprep.subr.bf16.mxu0 0
  %3796 = vmatpush1.bf16.msra.mxu0 %v3312
  %3797 = vmatprep.subr.bf16.mxu0 0
  %3798 = vmatpush1.bf16.msra.mxu0 %v3313
  %3799 = vmatprep.subr.bf16.mxu0 0
  %3800 = vmatpush1.bf16.msra.mxu0 %v3314
  %3801 = vmatprep.subr.bf16.mxu0 0
  %3802 = vmatpush1.bf16.msra.mxu0 %v3315
  %3803 = vmatprep.subr.bf16.mxu0 0
  %3804 = vmatpush1.bf16.msra.mxu0 %v3316
  %3805 = vmatprep.subr.bf16.mxu0 0
  %3806 = vmatpush1.bf16.msra.mxu0 %v3317
  %3807 = vmatprep.subr.bf16.mxu0 0
  %3808 = vmatpush1.bf16.msra.mxu0 %v3318
  %3809 = vmatprep.subr.bf16.mxu0 0
  %3810 = vmatpush1.bf16.msra.mxu0 %v3319
  %3811 = vmatprep.subr.bf16.mxu0 0
  %3812 = vmatpush1.bf16.msra.mxu0 %v3320
  %3813 = vmatprep.subr.bf16.mxu0 0
  %3814 = vmatpush1.bf16.msra.mxu0 %v3321
  %3815 = vmatprep.subr.bf16.mxu0 0
  %3816 = vmatpush1.bf16.msra.mxu0 %v3322
  %3817 = vmatprep.subr.bf16.mxu0 0
  %3818 = vmatpush1.bf16.msra.mxu0 %v3323
  %3819 = vmatprep.subr.bf16.mxu0 0
  %3820 = vmatpush1.bf16.msra.mxu0 %v3324
  %3821 = vmatprep.mubr.bf16.mxu0 %v2405
  %3822 = vmatmul.mubr.bf16.gmra.mrb[0].mxu0 %v2404
  %v3823 = vpop.f32.mrb[0].mxu0
  %v3824 = vadd.f32 %v3776, %v3823
  %v3825 = vpop.f32.mrb[0].mxu0
  %v3826 = vpop.f32.mrb[0].mxu0
  %v3827 = vadd.f32 %v3779, %v3826
  %v3828 = vpop.f32.mrb[0].mxu0
  %3829 = vmatprep.mubr.bf16.mxu0 %v2421
  %3830 = vmatmul.mubr.bf16.gmra.mrb[0].mxu0 %v2420
  %v3831 = vpop.f32.mrb[0].mxu0
  %v3832 = vadd.f32 %v3784, %v3831
  %v3833 = vpop.f32.mrb[0].mxu0
  %v3834 = vpop.f32.mrb[0].mxu0
  %v3835 = vpop.f32.mrb[0].mxu0
  %3836 = vdwg.mxu0
  %v3837 = vadd.f32 %v1588, %v3824
  %v3838 = vadd.f32 %v1589, %v3827
  %v3839 = vadd.f32 %v1590, %v3832
  %3840 = vst.msk [vmem:[%s17] sm:$0xff] %vm62, %v3837
  %3841 = vst.msk [vmem:[%s17 + $0x8] sm:$0xff] %vm62, %v3838
  %3842 = vst.msk [vmem:[%s17 + $0x10] sm:$0xff] %vm62, %v3839
  // Predicated region
  $region70: #{_lambda_.6} parent=0 // pred_check
    _
  $region71: #{_lambda_.6} parent=0 // pred_check_branch
    %3844 = sbr.rel (0) target = $region73
  $region72: #{_lambda_.6} parent=0 // pred_region
    _
  $region73: #{_lambda_.6} parent=0 // pred_fallthru
    _
  // Predicated region
  $region74: #{_lambda_.6} parent=0 // pred_check
    _
  $region75: #{_lambda_.6} parent=0 // pred_check_branch
    %3846 = sbr.rel (0) target = $region77
  $region76: #{_lambda_.6} parent=0 // pred_region
    _
  $region77: #{_lambda_.6} parent=0 // pred_fallthru
    _

</llo_original>
